<compile_context>
chip_gen: v7x
topology: tpu7x:2x2x1
jax: 0.10.0
libtpu: 0.0.40
codegen_flags: <defaults>
</compile_context>

<pallas_src>
import functools

import jax
import jax.numpy as jnp
from jax import lax
from jax.experimental import pallas as pl
from jax.experimental.pallas import tpu as pltpu


def _round_up(x, m):
    return (x + m - 1) // m * m


# ---------------------------------------------------------------------------
# Pallas kernel: out = relu?( sum_t x[q + off_t, :] @ W_t + bias (+ residual) )
# ---------------------------------------------------------------------------
def _conv_tap_kernel(x_ref, w_ref, b_ref, *rest, offsets, tm, slab_rows,
                     relu, has_res):
    if has_res:
        r_ref, o_ref, slab_ref = rest
    else:
        o_ref, slab_ref = rest
    cp = o_ref.shape[-1]

    # Aligned dynamic window: this tile's rows plus the tap halo, up-cast to
    # f32 scratch once; every tap then reads a statically shifted slice of it.
    base = pl.multiple_of(pl.program_id(1) * tm, tm)
    slab_ref[...] = x_ref[0, pl.ds(base, slab_rows), :].astype(jnp.float32)

    acc = jnp.zeros((tm, cp), jnp.float32)
    for t, off in enumerate(offsets):                 # static unroll (<= 9)
        xt = slab_ref[pl.ds(off, tm), :].astype(jnp.bfloat16)
        acc = acc + jnp.dot(xt, w_ref[t], preferred_element_type=jnp.float32)

    out = acc + b_ref[...]                            # (1, Cp) broadcast, f32
    if has_res:
        out = out + r_ref[0].astype(jnp.float32)
    if relu:
        out = jnp.maximum(out, 0.0)
    o_ref[0] = out.astype(o_ref.dtype)


def _conv_flat(xflat, w_taps, bias_row, offsets, m_valid, *,
               residual_flat=None, relu=False, out_dtype=jnp.bfloat16):
    """xflat: (N, rows, Ci) bf16 flattened padded input; w_taps: (T, Ci, Cp)
    bf16 (BN scale folded); bias_row: (1, Cp) f32; residual_flat: (N, M, Cp).
    Returns (N, Mpad, Cp) with the first m_valid rows valid."""
    n, rows, ci = xflat.shape
    t, _, cp = w_taps.shape
    max_off = int(max(offsets))

    tm = min(256, _round_up(m_valid, 16))             # row tile (sublane dim)
    m_pad = _round_up(m_valid, tm)
    nb = m_pad // tm
    slab_rows = _round_up(tm + max_off, 16)           # tile rows + tap halo

    px = _round_up(max(rows, m_pad - tm + slab_rows), 16)
    if px > rows:
        xflat = jnp.pad(xflat, ((0, 0), (0, px - rows), (0, 0)))

    args = [xflat, w_taps, bias_row]
    in_specs = [
        pl.BlockSpec((1, px, ci), lambda b, j: (b, 0, 0)),     # whole image/n
        pl.BlockSpec((t, ci, cp), lambda b, j: (0, 0, 0)),     # grid-invariant
        pl.BlockSpec((1, cp), lambda b, j: (0, 0)),
    ]
    if residual_flat is not None:
        if residual_flat.shape[1] != m_pad:
            residual_flat = jnp.pad(
                residual_flat,
                ((0, 0), (0, m_pad - residual_flat.shape[1]), (0, 0)))
        args.append(residual_flat)
        in_specs.append(pl.BlockSpec((1, tm, cp), lambda b, j: (b, j, 0)))

    kernel = functools.partial(
        _conv_tap_kernel,
        offsets=tuple(int(o) for o in offsets),
        tm=tm, slab_rows=slab_rows, relu=relu,
        has_res=residual_flat is not None)

    flops = 2 * n * m_pad * t * ci * cp
    bytes_accessed = int(
        xflat.size * xflat.dtype.itemsize
        + w_taps.size * w_taps.dtype.itemsize
        + bias_row.size * bias_row.dtype.itemsize
        + n * m_pad * cp * jnp.dtype(out_dtype).itemsize
        + (residual_flat.size * residual_flat.dtype.itemsize
           if residual_flat is not None else 0))

    return pl.pallas_call(
        kernel,
        out_shape=jax.ShapeDtypeStruct((n, m_pad, cp), out_dtype),
        grid=(n, nb),
        in_specs=in_specs,
        out_specs=pl.BlockSpec((1, tm, cp), lambda b, j: (b, j, 0)),
        scratch_shapes=[pltpu.VMEM((slab_rows, ci), jnp.float32)],
        compiler_params=pltpu.CompilerParams(
            dimension_semantics=("parallel", "parallel")),
        cost_estimate=pl.CostEstimate(
            flops=flops, transcendentals=0, bytes_accessed=bytes_accessed),
    )(*args)


# ---------------------------------------------------------------------------
# Conv + (folded) BN + optional residual + optional ReLU wrapper.
# ---------------------------------------------------------------------------
def conv_bn_act(x_nhwc, w_folded, bias, *, stride=1, relu=False, residual=None):
    """x: (N,H,W,Cin) bf16; w_folded: (KH,KW,Cin,Cout) bf16 (BN scale folded);
    bias: (Cout,) f32.  Returns (N,Ho,Wo,Cout) bf16."""
    kh, kw, cin, cout = w_folded.shape
    n, h, w, _ = x_nhwc.shape
    pad = kh // 2                      # conv_block3x3: padding = k // 2 (1x1 -> 0)
    ho = (h + 2 * pad - kh) // stride + 1
    wo = (w + 2 * pad - kw) // stride + 1

    if stride == 1:
        xe = jnp.pad(x_nhwc, ((0, 0), (pad, pad), (pad, pad), (0, 0)))
        w_eff = w_folded
        th, tw = kh, kw
    elif kh == 1:                      # strided 1x1 shortcut: phase (0, 0) only
        xe = x_nhwc[:, ::stride, ::stride, :]
        w_eff = w_folded
        th, tw = 1, 1
    else:                              # stride-2 3x3 via space-to-depth
        assert stride == 2 and kh == 3
        xp = jnp.pad(x_nhwc, ((0, 0), (pad, pad), (pad, pad), (0, 0)))
        hp = _round_up(h + 2 * pad, 2)
        wp = _round_up(w + 2 * pad, 2)
        xp = jnp.pad(xp, ((0, 0), (0, hp - (h + 2 * pad)),
                          (0, wp - (w + 2 * pad)), (0, 0)))
        xe = (xp.reshape(n, hp // 2, 2, wp // 2, 2, cin)
                .transpose(0, 1, 3, 2, 4, 5)
                .reshape(n, hp // 2, wp // 2, 4 * cin))
        w4 = jnp.pad(w_folded, ((0, 1), (0, 1), (0, 0), (0, 0)))   # (4,4,ci,co)
        w_eff = (w4.reshape(2, 2, 2, 2, cin, cout)
                   .transpose(0, 2, 1, 3, 4, 5)
                   .reshape(2, 2, 4 * cin, cout))
        th, tw = 2, 2

    _, he, we, cie = xe.shape
    ci_pad = _round_up(cie, 8)          # matmul K dim
    cp = _round_up(cout, 128)           # lane-dense output channels
    if ci_pad > cie:
        xe = jnp.pad(xe, ((0, 0), (0, 0), (0, 0), (0, ci_pad - cie)))
    w_taps = jnp.pad(w_eff.reshape(th * tw, cie, cout),
                     ((0, 0), (0, ci_pad - cie), (0, cp - cout)))
    bias_row = jnp.pad(bias.astype(jnp.float32), (0, cp - cout)).reshape(1, cp)

    offsets = tuple(r * we + c for r in range(th) for c in range(tw))
    m_valid = ho * we                   # compute at full (padded) width
    xflat = xe.reshape(n, he * we, ci_pad)

    residual_flat = None
    if residual is not None:
        rf = jnp.pad(residual, ((0, 0), (0, 0), (0, we - wo), (0, cp - cout)))
        residual_flat = rf.reshape(n, ho * we, cp)

    out = _conv_flat(xflat, w_taps, bias_row, offsets, m_valid,
                     residual_flat=residual_flat, relu=relu)
    return out[:, :m_valid].reshape(n, ho, we, cp)[:, :, :wo, :cout]


# ---------------------------------------------------------------------------
# BasicBlock / ResNetLayer (preactivate=False, activation='relu', expansion=1)
# ---------------------------------------------------------------------------
def basic_block_forward(x_nhwc, p):
    if p["shortcut"] is not None:
        sc = p["shortcut"]
        residual = conv_bn_act(x_nhwc, sc["w"], sc["b"],
                               stride=p["stride"], relu=False)
    else:
        residual = x_nhwc
    h = conv_bn_act(x_nhwc, p["w1"], p["b1"], stride=p["stride"], relu=True)
    # conv2 -> BN2 -> (+ residual) -> ReLU fused in one kernel call
    return conv_bn_act(h, p["w2"], p["b2"], stride=1, relu=True,
                       residual=residual)


def resnet_layer_forward(x_nchw, params):
    # layout: accept NCHW like PyTorch, compute in NHWC/bf16, return NCHW/f32.
    x = jnp.transpose(x_nchw, (0, 2, 3, 1)).astype(jnp.bfloat16)
    for p in params:
        x = basic_block_forward(x, p)
    return jnp.transpose(x, (0, 3, 1, 2)).astype(jnp.float32)


# ---------------------------------------------------------------------------
# Deterministic parameter init (inference BN folded: scale into weight, bias
# kept separate).
# ---------------------------------------------------------------------------
def _fold_bn(key, c, eps=1e-5):
    k1, k2, k3, k4 = jax.random.split(key, 4)
    gamma = jax.random.uniform(k1, (c,), jnp.float32, 0.5, 1.5)
    beta = 0.1 * jax.random.normal(k2, (c,), jnp.float32)
    mean = 0.1 * jax.random.normal(k3, (c,), jnp.float32)
    var = jax.random.uniform(k4, (c,), jnp.float32, 0.5, 1.5)
    scale = gamma * lax.rsqrt(var + eps)
    bias = beta - mean * scale
    return scale, bias


def init_basic_block(key, in_planes, out_planes, stride):
    keys = jax.random.split(key, 6)
    w1 = 0.1 * jax.random.normal(keys[0], (3, 3, in_planes, out_planes), jnp.float32)
    w2 = 0.1 * jax.random.normal(keys[1], (3, 3, out_planes, out_planes), jnp.float32)
    s1, b1 = _fold_bn(keys[2], out_planes)
    s2, b2 = _fold_bn(keys[3], out_planes)
    p = {
        "stride": stride,
        "w1": (w1 * s1).astype(jnp.bfloat16),   # BN scale folded into weights
        "b1": b1,
        "w2": (w2 * s2).astype(jnp.bfloat16),
        "b2": b2,
    }
    if in_planes != out_planes:  # expansion == 1 -> shortcut iff planes differ
        wsc = 0.1 * jax.random.normal(keys[4], (1, 1, in_planes, out_planes),
                                      jnp.float32)
        ssc, bsc = _fold_bn(keys[5], out_planes)
        p["shortcut"] = {"w": (wsc * ssc).astype(jnp.bfloat16), "b": bsc}
    else:
        p["shortcut"] = None
    return p


def init_resnet_layer(key, in_planes, out_planes, depth):
    should_downsample = in_planes != out_planes
    stride = 2 if should_downsample else 1
    keys = jax.random.split(key, depth)
    params = [init_basic_block(keys[0], in_planes, out_planes, stride)]
    for d in range(1, depth):
        params.append(init_basic_block(keys[d], out_planes, out_planes, 1))
    return params


# ---------------------------------------------------------------------------
# Pure-JAX reference (same bf16-in / f32-accumulate numerics, for checking)
# ---------------------------------------------------------------------------
def _ref_conv(x, w, b, stride, pad, relu, residual=None):
    y = lax.conv_general_dilated(
        x, w, (stride, stride), [(pad, pad), (pad, pad)],
        dimension_numbers=("NHWC", "HWIO", "NHWC"),
        preferred_element_type=jnp.float32)
    y = y + b
    if residual is not None:
        y = y + residual.astype(jnp.float32)
    if relu:
        y = jnp.maximum(y, 0.0)
    return y.astype(jnp.bfloat16)


def _ref_block(x, p):
    if p["shortcut"] is not None:
        sc = p["shortcut"]
        residual = _ref_conv(x, sc["w"], sc["b"], p["stride"], 0, False)
    else:
        residual = x
    h = _ref_conv(x, p["w1"], p["b1"], p["stride"], 1, True)
    return _ref_conv(h, p["w2"], p["b2"], 1, 1, True, residual=residual)


def _ref_forward(x_nchw, params):
    x = jnp.transpose(x_nchw, (0, 2, 3, 1)).astype(jnp.bfloat16)
    for p in params:
        x = _ref_block(x, p)
    return jnp.transpose(x, (0, 3, 1, 2)).astype(jnp.float32)


if __name__ == "__main__":
    key = jax.random.PRNGKey(0)
    kx, kp = jax.random.split(key)

    # ResNetLayer(in_planes=4, out_planes=8, depth=2): block 1 downsamples.
    x = jax.random.normal(kx, (2, 4, 16, 16), jnp.float32)   # NCHW like PyTorch
    params = init_resnet_layer(kp, in_planes=4, out_planes=8, depth=2)

    fwd = jax.jit(lambda xx: resnet_layer_forward(xx, params))
    out = jax.block_until_ready(fwd(x))
    assert out.shape == (2, 8, 8, 8), out.shape

    ref = jax.block_until_ready(jax.jit(lambda xx: _ref_forward(xx, params))(x))
    max_err = float(jnp.max(jnp.abs(out - ref)))
    # bf16 inputs / f32 accumulation: allow bf16-level tolerance.
    assert max_err < 5e-2, f"max abs err too large: {max_err}"

    print("KERNEL_OK")
</pallas_src>

<mosaic_0001>
module attributes {stable_mosaic.version = 11 : i64} {
  func.func @_conv_tap_kernel(%arg0: i32, %arg1: i32, %arg2: memref<1x96x16xbf16, #tpu.memory_space<vmem>>, %arg3: memref<4x16x128xbf16, #tpu.memory_space<vmem>>, %arg4: memref<1x128xf32, #tpu.memory_space<vmem>>, %arg5: memref<1x80x128xbf16, #tpu.memory_space<vmem>>, %arg6: memref<96x16xf32, #tpu.memory_space<vmem>>) attributes {dimension_semantics = [#tpu.dimension_semantics<parallel>, #tpu.dimension_semantics<parallel>], iteration_bounds = array<i64: 2, 1>, scalar_prefetch = 0 : i64, scratch_operands = 1 : i64, tpu.core_type = #tpu.core_type<tc>, window_params = [{transform_indices = @transform_0, window_bounds = array<i64: 1, 96, 16>}, {pipeline_mode = #tpu.pipeline_mode<synchronous>, transform_indices = @transform_1, window_bounds = array<i64: 4, 16, 128>}, {pipeline_mode = #tpu.pipeline_mode<synchronous>, transform_indices = @transform_2, window_bounds = array<i64: 1, 128>}, {transform_indices = @transform_3, window_bounds = array<i64: 1, 80, 128>}]} {
    %c80_i32 = arith.constant 80 : i32
    %0 = arith.muli %arg1, %c80_i32 : i32
    %1 = tpu.assume_multiple %0, 80 : i32
    %c0 = arith.constant 0 : index
    %2 = arith.index_cast %1 : i32 to index
    %c0_0 = arith.constant 0 : index
    %3 = vector.load %arg2[%c0, %2, %c0_0] : memref<1x96x16xbf16, #tpu.memory_space<vmem>>, vector<1x96x16xbf16>
    %4 = vector.shape_cast %3 : vector<1x96x16xbf16> to vector<96x16xbf16>
    %5 = arith.extf %4 : vector<96x16xbf16> to vector<96x16xf32>
    %c0_1 = arith.constant 0 : index
    %c0_2 = arith.constant 0 : index
    %6 = vector.load %arg6[%c0_1, %c0_2] : memref<96x16xf32, #tpu.memory_space<vmem>>, vector<96x16xf32>
    tpu.vector_store %arg6[%c0_1, %c0_2], %5 {strides = array<i32>} : memref<96x16xf32, #tpu.memory_space<vmem>>, vector<96x16xf32>,
    %cst = arith.constant 0.000000e+00 : f32
    %7 = vector.broadcast %cst : f32 to vector<80x128xf32>
    %c0_3 = arith.constant 0 : index
    %c0_4 = arith.constant 0 : index
    %8 = vector.load %arg6[%c0_3, %c0_4] : memref<96x16xf32, #tpu.memory_space<vmem>>, vector<80x16xf32>
    %9 = arith.truncf %8 : vector<80x16xf32> to vector<80x16xbf16>
    %c0_5 = arith.constant 0 : index
    %c0_6 = arith.constant 0 : index
    %c0_7 = arith.constant 0 : index
    %10 = vector.load %arg3[%c0_5, %c0_6, %c0_7] : memref<4x16x128xbf16, #tpu.memory_space<vmem>>, vector<1x16x128xbf16>
    %11 = vector.shape_cast %10 : vector<1x16x128xbf16> to vector<16x128xbf16>
    %cst_8 = arith.constant dense<0.000000e+00> : vector<80x128xf32>
    %12 = tpu.matmul %9, %11, %cst_8 {dimension_numbers = #tpu.dot_dimension_numbers<[1], [0], [0], [1], [0, 0, 1, 1], [], []>} : vector<80x16xbf16>, vector<16x128xbf16>, vector<80x128xf32> -> vector<80x128xf32>
    %13 = arith.addf %7, %12 : vector<80x128xf32>
    %c1 = arith.constant 1 : index
    %c0_9 = arith.constant 0 : index
    %14 = vector.load %arg6[%c1, %c0_9] : memref<96x16xf32, #tpu.memory_space<vmem>>, vector<80x16xf32>
    %15 = arith.truncf %14 : vector<80x16xf32> to vector<80x16xbf16>
    %c1_10 = arith.constant 1 : index
    %c0_11 = arith.constant 0 : index
    %c0_12 = arith.constant 0 : index
    %16 = vector.load %arg3[%c1_10, %c0_11, %c0_12] : memref<4x16x128xbf16, #tpu.memory_space<vmem>>, vector<1x16x128xbf16>
    %17 = vector.shape_cast %16 : vector<1x16x128xbf16> to vector<16x128xbf16>
    %cst_13 = arith.constant dense<0.000000e+00> : vector<80x128xf32>
    %18 = tpu.matmul %15, %17, %cst_13 {dimension_numbers = #tpu.dot_dimension_numbers<[1], [0], [0], [1], [0, 0, 1, 1], [], []>} : vector<80x16xbf16>, vector<16x128xbf16>, vector<80x128xf32> -> vector<80x128xf32>
    %19 = arith.addf %13, %18 : vector<80x128xf32>
    %c9 = arith.constant 9 : index
    %c0_14 = arith.constant 0 : index
    %20 = vector.load %arg6[%c9, %c0_14] : memref<96x16xf32, #tpu.memory_space<vmem>>, vector<80x16xf32>
    %21 = arith.truncf %20 : vector<80x16xf32> to vector<80x16xbf16>
    %c2 = arith.constant 2 : index
    %c0_15 = arith.constant 0 : index
    %c0_16 = arith.constant 0 : index
    %22 = vector.load %arg3[%c2, %c0_15, %c0_16] : memref<4x16x128xbf16, #tpu.memory_space<vmem>>, vector<1x16x128xbf16>
    %23 = vector.shape_cast %22 : vector<1x16x128xbf16> to vector<16x128xbf16>
    %cst_17 = arith.constant dense<0.000000e+00> : vector<80x128xf32>
    %24 = tpu.matmul %21, %23, %cst_17 {dimension_numbers = #tpu.dot_dimension_numbers<[1], [0], [0], [1], [0, 0, 1, 1], [], []>} : vector<80x16xbf16>, vector<16x128xbf16>, vector<80x128xf32> -> vector<80x128xf32>
    %25 = arith.addf %19, %24 : vector<80x128xf32>
    %c10 = arith.constant 10 : index
    %c0_18 = arith.constant 0 : index
    %26 = vector.load %arg6[%c10, %c0_18] : memref<96x16xf32, #tpu.memory_space<vmem>>, vector<80x16xf32>
    %27 = arith.truncf %26 : vector<80x16xf32> to vector<80x16xbf16>
    %c3 = arith.constant 3 : index
    %c0_19 = arith.constant 0 : index
    %c0_20 = arith.constant 0 : index
    %28 = vector.load %arg3[%c3, %c0_19, %c0_20] : memref<4x16x128xbf16, #tpu.memory_space<vmem>>, vector<1x16x128xbf16>
    %29 = vector.shape_cast %28 : vector<1x16x128xbf16> to vector<16x128xbf16>
    %cst_21 = arith.constant dense<0.000000e+00> : vector<80x128xf32>
    %30 = tpu.matmul %27, %29, %cst_21 {dimension_numbers = #tpu.dot_dimension_numbers<[1], [0], [0], [1], [0, 0, 1, 1], [], []>} : vector<80x16xbf16>, vector<16x128xbf16>, vector<80x128xf32> -> vector<80x128xf32>
    %31 = arith.addf %25, %30 : vector<80x128xf32>
    %c0_22 = arith.constant 0 : index
    %c0_23 = arith.constant 0 : index
    %32 = vector.load %arg4[%c0_22, %c0_23] : memref<1x128xf32, #tpu.memory_space<vmem>>, vector<1x128xf32>
    %33 = vector.broadcast %32 : vector<1x128xf32> to vector<80x128xf32>
    %34 = arith.addf %31, %33 : vector<80x128xf32>
    %cst_24 = arith.constant 0.000000e+00 : f32
    %35 = vector.broadcast %cst_24 : f32 to vector<80x128xf32>
    %36 = arith.maximumf %34, %35 : vector<80x128xf32>
    %37 = arith.truncf %36 : vector<80x128xf32> to vector<80x128xbf16>
    %c0_25 = arith.constant 0 : index
    %c0_26 = arith.constant 0 : index
    %c0_27 = arith.constant 0 : index
    %38 = vector.load %arg5[%c0_25, %c0_26, %c0_27] : memref<1x80x128xbf16, #tpu.memory_space<vmem>>, vector<1x80x128xbf16>
    %39 = vector.shape_cast %38 : vector<1x80x128xbf16> to vector<80x128xbf16>
    %40 = vector.shape_cast %37 : vector<80x128xbf16> to vector<1x80x128xbf16>
    tpu.vector_store %arg5[%c0_25, %c0_26, %c0_27], %40 {strides = array<i32>} : memref<1x80x128xbf16, #tpu.memory_space<vmem>>, vector<1x80x128xbf16>,
    return
  }
  func.func @transform_0(%arg0: i32, %arg1: i32) -> (i32, i32, i32) {
    %c0_i32 = arith.constant 0 : i32
    %c0_i32_0 = arith.constant 0 : i32
    %c0_i32_1 = arith.constant 0 : i32
    return %arg0, %c0_i32, %c0_i32_0 : i32, i32, i32
  }
  func.func @transform_1(%arg0: i32, %arg1: i32) -> (i32, i32, i32) {
    %c0_i32 = arith.constant 0 : i32
    %c0_i32_0 = arith.constant 0 : i32
    %c0_i32_1 = arith.constant 0 : i32
    %c0_i32_2 = arith.constant 0 : i32
    return %c0_i32, %c0_i32_0, %c0_i32_1 : i32, i32, i32
  }
  func.func @transform_2(%arg0: i32, %arg1: i32) -> (i32, i32) {
    %c0_i32 = arith.constant 0 : i32
    %c0_i32_0 = arith.constant 0 : i32
    %c0_i32_1 = arith.constant 0 : i32
    return %c0_i32, %c0_i32_0 : i32, i32
  }
  func.func @transform_3(%arg0: i32, %arg1: i32) -> (i32, i32, i32) {
    %c0_i32 = arith.constant 0 : i32
    %c0_i32_0 = arith.constant 0 : i32
    return %arg0, %arg1, %c0_i32 : i32, i32, i32
  }
}

module attributes {stable_mosaic.version = 11 : i64} {
  func.func @_conv_tap_kernel(%arg0: i32, %arg1: i32, %arg2: memref<1x64x8xbf16, #tpu.memory_space<vmem>>, %arg3: memref<1x8x128xbf16, #tpu.memory_space<vmem>>, %arg4: memref<1x128xf32, #tpu.memory_space<vmem>>, %arg5: memref<1x64x128xbf16, #tpu.memory_space<vmem>>, %arg6: memref<64x8xf32, #tpu.memory_space<vmem>>) attributes {dimension_semantics = [#tpu.dimension_semantics<parallel>, #tpu.dimension_semantics<parallel>], iteration_bounds = array<i64: 2, 1>, scalar_prefetch = 0 : i64, scratch_operands = 1 : i64, tpu.core_type = #tpu.core_type<tc>, window_params = [{transform_indices = @transform_0, window_bounds = array<i64: 1, 64, 8>}, {pipeline_mode = #tpu.pipeline_mode<synchronous>, transform_indices = @transform_1, window_bounds = array<i64: 1, 8, 128>}, {pipeline_mode = #tpu.pipeline_mode<synchronous>, transform_indices = @transform_2, window_bounds = array<i64: 1, 128>}, {transform_indices = @transform_3, window_bounds = array<i64: 1, 64, 128>}]} {
    %c64_i32 = arith.constant 64 : i32
    %0 = arith.muli %arg1, %c64_i32 : i32
    %1 = tpu.assume_multiple %0, 64 : i32
    %c0 = arith.constant 0 : index
    %2 = arith.index_cast %1 : i32 to index
    %c0_0 = arith.constant 0 : index
    %3 = vector.load %arg2[%c0, %2, %c0_0] : memref<1x64x8xbf16, #tpu.memory_space<vmem>>, vector<1x64x8xbf16>
    %4 = vector.shape_cast %3 : vector<1x64x8xbf16> to vector<64x8xbf16>
    %5 = arith.extf %4 : vector<64x8xbf16> to vector<64x8xf32>
    %c0_1 = arith.constant 0 : index
    %c0_2 = arith.constant 0 : index
    %6 = vector.load %arg6[%c0_1, %c0_2] : memref<64x8xf32, #tpu.memory_space<vmem>>, vector<64x8xf32>
    tpu.vector_store %arg6[%c0_1, %c0_2], %5 {strides = array<i32>} : memref<64x8xf32, #tpu.memory_space<vmem>>, vector<64x8xf32>,
    %cst = arith.constant 0.000000e+00 : f32
    %7 = vector.broadcast %cst : f32 to vector<64x128xf32>
    %c0_3 = arith.constant 0 : index
    %c0_4 = arith.constant 0 : index
    %8 = vector.load %arg6[%c0_3, %c0_4] : memref<64x8xf32, #tpu.memory_space<vmem>>, vector<64x8xf32>
    %9 = arith.truncf %8 : vector<64x8xf32> to vector<64x8xbf16>
    %c0_5 = arith.constant 0 : index
    %c0_6 = arith.constant 0 : index
    %c0_7 = arith.constant 0 : index
    %10 = vector.load %arg3[%c0_5, %c0_6, %c0_7] : memref<1x8x128xbf16, #tpu.memory_space<vmem>>, vector<1x8x128xbf16>
    %11 = vector.shape_cast %10 : vector<1x8x128xbf16> to vector<8x128xbf16>
    %cst_8 = arith.constant dense<0.000000e+00> : vector<64x128xf32>
    %12 = tpu.matmul %9, %11, %cst_8 {dimension_numbers = #tpu.dot_dimension_numbers<[1], [0], [0], [1], [0, 0, 1, 1], [], []>} : vector<64x8xbf16>, vector<8x128xbf16>, vector<64x128xf32> -> vector<64x128xf32>
    %13 = arith.addf %7, %12 : vector<64x128xf32>
    %c0_9 = arith.constant 0 : index
    %c0_10 = arith.constant 0 : index
    %14 = vector.load %arg4[%c0_9, %c0_10] : memref<1x128xf32, #tpu.memory_space<vmem>>, vector<1x128xf32>
    %15 = vector.broadcast %14 : vector<1x128xf32> to vector<64x128xf32>
    %16 = arith.addf %13, %15 : vector<64x128xf32>
    %17 = arith.truncf %16 : vector<64x128xf32> to vector<64x128xbf16>
    %c0_11 = arith.constant 0 : index
    %c0_12 = arith.constant 0 : index
    %c0_13 = arith.constant 0 : index
    %18 = vector.load %arg5[%c0_11, %c0_12, %c0_13] : memref<1x64x128xbf16, #tpu.memory_space<vmem>>, vector<1x64x128xbf16>
    %19 = vector.shape_cast %18 : vector<1x64x128xbf16> to vector<64x128xbf16>
    %20 = vector.shape_cast %17 : vector<64x128xbf16> to vector<1x64x128xbf16>
    tpu.vector_store %arg5[%c0_11, %c0_12, %c0_13], %20 {strides = array<i32>} : memref<1x64x128xbf16, #tpu.memory_space<vmem>>, vector<1x64x128xbf16>,
    return
  }
  func.func @transform_0(%arg0: i32, %arg1: i32) -> (i32, i32, i32) {
    %c0_i32 = arith.constant 0 : i32
    %c0_i32_0 = arith.constant 0 : i32
    %c0_i32_1 = arith.constant 0 : i32
    return %arg0, %c0_i32, %c0_i32_0 : i32, i32, i32
  }
  func.func @transform_1(%arg0: i32, %arg1: i32) -> (i32, i32, i32) {
    %c0_i32 = arith.constant 0 : i32
    %c0_i32_0 = arith.constant 0 : i32
    %c0_i32_1 = arith.constant 0 : i32
    %c0_i32_2 = arith.constant 0 : i32
    return %c0_i32, %c0_i32_0, %c0_i32_1 : i32, i32, i32
  }
  func.func @transform_2(%arg0: i32, %arg1: i32) -> (i32, i32) {
    %c0_i32 = arith.constant 0 : i32
    %c0_i32_0 = arith.constant 0 : i32
    %c0_i32_1 = arith.constant 0 : i32
    return %c0_i32, %c0_i32_0 : i32, i32
  }
  func.func @transform_3(%arg0: i32, %arg1: i32) -> (i32, i32, i32) {
    %c0_i32 = arith.constant 0 : i32
    %c0_i32_0 = arith.constant 0 : i32
    return %arg0, %arg1, %c0_i32 : i32, i32, i32
  }
}

module attributes {stable_mosaic.version = 11 : i64} {
  func.func @_conv_tap_kernel(%arg0: i32, %arg1: i32, %arg2: memref<1x112x8xbf16, #tpu.memory_space<vmem>>, %arg3: memref<9x8x128xbf16, #tpu.memory_space<vmem>>, %arg4: memref<1x128xf32, #tpu.memory_space<vmem>>, %arg5: memref<1x80x128xbf16, #tpu.memory_space<vmem>>, %arg6: memref<1x80x128xbf16, #tpu.memory_space<vmem>>, %arg7: memref<112x8xf32, #tpu.memory_space<vmem>>) attributes {dimension_semantics = [#tpu.dimension_semantics<parallel>, #tpu.dimension_semantics<parallel>], iteration_bounds = array<i64: 2, 1>, scalar_prefetch = 0 : i64, scratch_operands = 1 : i64, tpu.core_type = #tpu.core_type<tc>, window_params = [{transform_indices = @transform_0, window_bounds = array<i64: 1, 112, 8>}, {pipeline_mode = #tpu.pipeline_mode<synchronous>, transform_indices = @transform_1, window_bounds = array<i64: 9, 8, 128>}, {pipeline_mode = #tpu.pipeline_mode<synchronous>, transform_indices = @transform_2, window_bounds = array<i64: 1, 128>}, {transform_indices = @transform_3, window_bounds = array<i64: 1, 80, 128>}, {transform_indices = @transform_4, window_bounds = array<i64: 1, 80, 128>}]} {
    %c80_i32 = arith.constant 80 : i32
    %0 = arith.muli %arg1, %c80_i32 : i32
    %1 = tpu.assume_multiple %0, 80 : i32
    %c0 = arith.constant 0 : index
    %2 = arith.index_cast %1 : i32 to index
    %c0_0 = arith.constant 0 : index
    %3 = vector.load %arg2[%c0, %2, %c0_0] : memref<1x112x8xbf16, #tpu.memory_space<vmem>>, vector<1x112x8xbf16>
    %4 = vector.shape_cast %3 : vector<1x112x8xbf16> to vector<112x8xbf16>
    %5 = arith.extf %4 : vector<112x8xbf16> to vector<112x8xf32>
    %c0_1 = arith.constant 0 : index
    %c0_2 = arith.constant 0 : index
    %6 = vector.load %arg7[%c0_1, %c0_2] : memref<112x8xf32, #tpu.memory_space<vmem>>, vector<112x8xf32>
    tpu.vector_store %arg7[%c0_1, %c0_2], %5 {strides = array<i32>} : memref<112x8xf32, #tpu.memory_space<vmem>>, vector<112x8xf32>,
    %cst = arith.constant 0.000000e+00 : f32
    %7 = vector.broadcast %cst : f32 to vector<80x128xf32>
    %c0_3 = arith.constant 0 : index
    %c0_4 = arith.constant 0 : index
    %8 = vector.load %arg7[%c0_3, %c0_4] : memref<112x8xf32, #tpu.memory_space<vmem>>, vector<80x8xf32>
    %9 = arith.truncf %8 : vector<80x8xf32> to vector<80x8xbf16>
    %c0_5 = arith.constant 0 : index
    %c0_6 = arith.constant 0 : index
    %c0_7 = arith.constant 0 : index
    %10 = vector.load %arg3[%c0_5, %c0_6, %c0_7] : memref<9x8x128xbf16, #tpu.memory_space<vmem>>, vector<1x8x128xbf16>
    %11 = vector.shape_cast %10 : vector<1x8x128xbf16> to vector<8x128xbf16>
    %cst_8 = arith.constant dense<0.000000e+00> : vector<80x128xf32>
    %12 = tpu.matmul %9, %11, %cst_8 {dimension_numbers = #tpu.dot_dimension_numbers<[1], [0], [0], [1], [0, 0, 1, 1], [], []>} : vector<80x8xbf16>, vector<8x128xbf16>, vector<80x128xf32> -> vector<80x128xf32>
    %13 = arith.addf %7, %12 : vector<80x128xf32>
    %c1 = arith.constant 1 : index
    %c0_9 = arith.constant 0 : index
    %14 = vector.load %arg7[%c1, %c0_9] : memref<112x8xf32, #tpu.memory_space<vmem>>, vector<80x8xf32>
    %15 = arith.truncf %14 : vector<80x8xf32> to vector<80x8xbf16>
    %c1_10 = arith.constant 1 : index
    %c0_11 = arith.constant 0 : index
    %c0_12 = arith.constant 0 : index
    %16 = vector.load %arg3[%c1_10, %c0_11, %c0_12] : memref<9x8x128xbf16, #tpu.memory_space<vmem>>, vector<1x8x128xbf16>
    %17 = vector.shape_cast %16 : vector<1x8x128xbf16> to vector<8x128xbf16>
    %cst_13 = arith.constant dense<0.000000e+00> : vector<80x128xf32>
    %18 = tpu.matmul %15, %17, %cst_13 {dimension_numbers = #tpu.dot_dimension_numbers<[1], [0], [0], [1], [0, 0, 1, 1], [], []>} : vector<80x8xbf16>, vector<8x128xbf16>, vector<80x128xf32> -> vector<80x128xf32>
    %19 = arith.addf %13, %18 : vector<80x128xf32>
    %c2 = arith.constant 2 : index
    %c0_14 = arith.constant 0 : index
    %20 = vector.load %arg7[%c2, %c0_14] : memref<112x8xf32, #tpu.memory_space<vmem>>, vector<80x8xf32>
    %21 = arith.truncf %20 : vector<80x8xf32> to vector<80x8xbf16>
    %c2_15 = arith.constant 2 : index
    %c0_16 = arith.constant 0 : index
    %c0_17 = arith.constant 0 : index
    %22 = vector.load %arg3[%c2_15, %c0_16, %c0_17] : memref<9x8x128xbf16, #tpu.memory_space<vmem>>, vector<1x8x128xbf16>
    %23 = vector.shape_cast %22 : vector<1x8x128xbf16> to vector<8x128xbf16>
    %cst_18 = arith.constant dense<0.000000e+00> : vector<80x128xf32>
    %24 = tpu.matmul %21, %23, %cst_18 {dimension_numbers = #tpu.dot_dimension_numbers<[1], [0], [0], [1], [0, 0, 1, 1], [], []>} : vector<80x8xbf16>, vector<8x128xbf16>, vector<80x128xf32> -> vector<80x128xf32>
    %25 = arith.addf %19, %24 : vector<80x128xf32>
    %c10 = arith.constant 10 : index
    %c0_19 = arith.constant 0 : index
    %26 = vector.load %arg7[%c10, %c0_19] : memref<112x8xf32, #tpu.memory_space<vmem>>, vector<80x8xf32>
    %27 = arith.truncf %26 : vector<80x8xf32> to vector<80x8xbf16>
    %c3 = arith.constant 3 : index
    %c0_20 = arith.constant 0 : index
    %c0_21 = arith.constant 0 : index
    %28 = vector.load %arg3[%c3, %c0_20, %c0_21] : memref<9x8x128xbf16, #tpu.memory_space<vmem>>, vector<1x8x128xbf16>
    %29 = vector.shape_cast %28 : vector<1x8x128xbf16> to vector<8x128xbf16>
    %cst_22 = arith.constant dense<0.000000e+00> : vector<80x128xf32>
    %30 = tpu.matmul %27, %29, %cst_22 {dimension_numbers = #tpu.dot_dimension_numbers<[1], [0], [0], [1], [0, 0, 1, 1], [], []>} : vector<80x8xbf16>, vector<8x128xbf16>, vector<80x128xf32> -> vector<80x128xf32>
    %31 = arith.addf %25, %30 : vector<80x128xf32>
    %c11 = arith.constant 11 : index
    %c0_23 = arith.constant 0 : index
    %32 = vector.load %arg7[%c11, %c0_23] : memref<112x8xf32, #tpu.memory_space<vmem>>, vector<80x8xf32>
    %33 = arith.truncf %32 : vector<80x8xf32> to vector<80x8xbf16>
    %c4 = arith.constant 4 : index
    %c0_24 = arith.constant 0 : index
    %c0_25 = arith.constant 0 : index
    %34 = vector.load %arg3[%c4, %c0_24, %c0_25] : memref<9x8x128xbf16, #tpu.memory_space<vmem>>, vector<1x8x128xbf16>
    %35 = vector.shape_cast %34 : vector<1x8x128xbf16> to vector<8x128xbf16>
    %cst_26 = arith.constant dense<0.000000e+00> : vector<80x128xf32>
    %36 = tpu.matmul %33, %35, %cst_26 {dimension_numbers = #tpu.dot_dimension_numbers<[1], [0], [0], [1], [0, 0, 1, 1], [], []>} : vector<80x8xbf16>, vector<8x128xbf16>, vector<80x128xf32> -> vector<80x128xf32>
    %37 = arith.addf %31, %36 : vector<80x128xf32>
    %c12 = arith.constant 12 : index
    %c0_27 = arith.constant 0 : index
    %38 = vector.load %arg7[%c12, %c0_27] : memref<112x8xf32, #tpu.memory_space<vmem>>, vector<80x8xf32>
    %39 = arith.truncf %38 : vector<80x8xf32> to vector<80x8xbf16>
    %c5 = arith.constant 5 : index
    %c0_28 = arith.constant 0 : index
    %c0_29 = arith.constant 0 : index
    %40 = vector.load %arg3[%c5, %c0_28, %c0_29] : memref<9x8x128xbf16, #tpu.memory_space<vmem>>, vector<1x8x128xbf16>
    %41 = vector.shape_cast %40 : vector<1x8x128xbf16> to vector<8x128xbf16>
    %cst_30 = arith.constant dense<0.000000e+00> : vector<80x128xf32>
    %42 = tpu.matmul %39, %41, %cst_30 {dimension_numbers = #tpu.dot_dimension_numbers<[1], [0], [0], [1], [0, 0, 1, 1], [], []>} : vector<80x8xbf16>, vector<8x128xbf16>, vector<80x128xf32> -> vector<80x128xf32>
    %43 = arith.addf %37, %42 : vector<80x128xf32>
    %c20 = arith.constant 20 : index
    %c0_31 = arith.constant 0 : index
    %44 = vector.load %arg7[%c20, %c0_31] : memref<112x8xf32, #tpu.memory_space<vmem>>, vector<80x8xf32>
    %45 = arith.truncf %44 : vector<80x8xf32> to vector<80x8xbf16>
    %c6 = arith.constant 6 : index
    %c0_32 = arith.constant 0 : index
    %c0_33 = arith.constant 0 : index
    %46 = vector.load %arg3[%c6, %c0_32, %c0_33] : memref<9x8x128xbf16, #tpu.memory_space<vmem>>, vector<1x8x128xbf16>
    %47 = vector.shape_cast %46 : vector<1x8x128xbf16> to vector<8x128xbf16>
    %cst_34 = arith.constant dense<0.000000e+00> : vector<80x128xf32>
    %48 = tpu.matmul %45, %47, %cst_34 {dimension_numbers = #tpu.dot_dimension_numbers<[1], [0], [0], [1], [0, 0, 1, 1], [], []>} : vector<80x8xbf16>, vector<8x128xbf16>, vector<80x128xf32> -> vector<80x128xf32>
    %49 = arith.addf %43, %48 : vector<80x128xf32>
    %c21 = arith.constant 21 : index
    %c0_35 = arith.constant 0 : index
    %50 = vector.load %arg7[%c21, %c0_35] : memref<112x8xf32, #tpu.memory_space<vmem>>, vector<80x8xf32>
    %51 = arith.truncf %50 : vector<80x8xf32> to vector<80x8xbf16>
    %c7 = arith.constant 7 : index
    %c0_36 = arith.constant 0 : index
    %c0_37 = arith.constant 0 : index
    %52 = vector.load %arg3[%c7, %c0_36, %c0_37] : memref<9x8x128xbf16, #tpu.memory_space<vmem>>, vector<1x8x128xbf16>
    %53 = vector.shape_cast %52 : vector<1x8x128xbf16> to vector<8x128xbf16>
    %cst_38 = arith.constant dense<0.000000e+00> : vector<80x128xf32>
    %54 = tpu.matmul %51, %53, %cst_38 {dimension_numbers = #tpu.dot_dimension_numbers<[1], [0], [0], [1], [0, 0, 1, 1], [], []>} : vector<80x8xbf16>, vector<8x128xbf16>, vector<80x128xf32> -> vector<80x128xf32>
    %55 = arith.addf %49, %54 : vector<80x128xf32>
    %c22 = arith.constant 22 : index
    %c0_39 = arith.constant 0 : index
    %56 = vector.load %arg7[%c22, %c0_39] : memref<112x8xf32, #tpu.memory_space<vmem>>, vector<80x8xf32>
    %57 = arith.truncf %56 : vector<80x8xf32> to vector<80x8xbf16>
    %c8 = arith.constant 8 : index
    %c0_40 = arith.constant 0 : index
    %c0_41 = arith.constant 0 : index
    %58 = vector.load %arg3[%c8, %c0_40, %c0_41] : memref<9x8x128xbf16, #tpu.memory_space<vmem>>, vector<1x8x128xbf16>
    %59 = vector.shape_cast %58 : vector<1x8x128xbf16> to vector<8x128xbf16>
    %cst_42 = arith.constant dense<0.000000e+00> : vector<80x128xf32>
    %60 = tpu.matmul %57, %59, %cst_42 {dimension_numbers = #tpu.dot_dimension_numbers<[1], [0], [0], [1], [0, 0, 1, 1], [], []>} : vector<80x8xbf16>, vector<8x128xbf16>, vector<80x128xf32> -> vector<80x128xf32>
    %61 = arith.addf %55, %60 : vector<80x128xf32>
    %c0_43 = arith.constant 0 : index
    %c0_44 = arith.constant 0 : index
    %62 = vector.load %arg4[%c0_43, %c0_44] : memref<1x128xf32, #tpu.memory_space<vmem>>, vector<1x128xf32>
    %63 = vector.broadcast %62 : vector<1x128xf32> to vector<80x128xf32>
    %64 = arith.addf %61, %63 : vector<80x128xf32>
    %c0_45 = arith.constant 0 : index
    %c0_46 = arith.constant 0 : index
    %c0_47 = arith.constant 0 : index
    %65 = vector.load %arg5[%c0_45, %c0_46, %c0_47] : memref<1x80x128xbf16, #tpu.memory_space<vmem>>, vector<1x80x128xbf16>
    %66 = vector.shape_cast %65 : vector<1x80x128xbf16> to vector<80x128xbf16>
    %67 = arith.extf %66 : vector<80x128xbf16> to vector<80x128xf32>
    %68 = arith.addf %64, %67 : vector<80x128xf32>
    %cst_48 = arith.constant 0.000000e+00 : f32
    %69 = vector.broadcast %cst_48 : f32 to vector<80x128xf32>
    %70 = arith.maximumf %68, %69 : vector<80x128xf32>
    %71 = arith.truncf %70 : vector<80x128xf32> to vector<80x128xbf16>
    %c0_49 = arith.constant 0 : index
    %c0_50 = arith.constant 0 : index
    %c0_51 = arith.constant 0 : index
    %72 = vector.load %arg6[%c0_49, %c0_50, %c0_51] : memref<1x80x128xbf16, #tpu.memory_space<vmem>>, vector<1x80x128xbf16>
    %73 = vector.shape_cast %72 : vector<1x80x128xbf16> to vector<80x128xbf16>
    %74 = vector.shape_cast %71 : vector<80x128xbf16> to vector<1x80x128xbf16>
    tpu.vector_store %arg6[%c0_49, %c0_50, %c0_51], %74 {strides = array<i32>} : memref<1x80x128xbf16, #tpu.memory_space<vmem>>, vector<1x80x128xbf16>,
    return
  }
  func.func @transform_0(%arg0: i32, %arg1: i32) -> (i32, i32, i32) {
    %c0_i32 = arith.constant 0 : i32
    %c0_i32_0 = arith.constant 0 : i32
    %c0_i32_1 = arith.constant 0 : i32
    return %arg0, %c0_i32, %c0_i32_0 : i32, i32, i32
  }
  func.func @transform_1(%arg0: i32, %arg1: i32) -> (i32, i32, i32) {
    %c0_i32 = arith.constant 0 : i32
    %c0_i32_0 = arith.constant 0 : i32
    %c0_i32_1 = arith.constant 0 : i32
    %c0_i32_2 = arith.constant 0 : i32
    return %c0_i32, %c0_i32_0, %c0_i32_1 : i32, i32, i32
  }
  func.func @transform_2(%arg0: i32, %arg1: i32) -> (i32, i32) {
    %c0_i32 = arith.constant 0 : i32
    %c0_i32_0 = arith.constant 0 : i32
    %c0_i32_1 = arith.constant 0 : i32
    return %c0_i32, %c0_i32_0 : i32, i32
  }
  func.func @transform_3(%arg0: i32, %arg1: i32) -> (i32, i32, i32) {
    %c0_i32 = arith.constant 0 : i32
    %c0_i32_0 = arith.constant 0 : i32
    return %arg0, %arg1, %c0_i32 : i32, i32, i32
  }
  func.func @transform_4(%arg0: i32, %arg1: i32) -> (i32, i32, i32) {
    %c0_i32 = arith.constant 0 : i32
    %c0_i32_0 = arith.constant 0 : i32
    return %arg0, %arg1, %c0_i32 : i32, i32, i32
  }
}

module attributes {stable_mosaic.version = 11 : i64} {
  func.func @_conv_tap_kernel(%arg0: i32, %arg1: i32, %arg2: memref<1x112x8xbf16, #tpu.memory_space<vmem>>, %arg3: memref<9x8x128xbf16, #tpu.memory_space<vmem>>, %arg4: memref<1x128xf32, #tpu.memory_space<vmem>>, %arg5: memref<1x80x128xbf16, #tpu.memory_space<vmem>>, %arg6: memref<112x8xf32, #tpu.memory_space<vmem>>) attributes {dimension_semantics = [#tpu.dimension_semantics<parallel>, #tpu.dimension_semantics<parallel>], iteration_bounds = array<i64: 2, 1>, scalar_prefetch = 0 : i64, scratch_operands = 1 : i64, tpu.core_type = #tpu.core_type<tc>, window_params = [{transform_indices = @transform_0, window_bounds = array<i64: 1, 112, 8>}, {pipeline_mode = #tpu.pipeline_mode<synchronous>, transform_indices = @transform_1, window_bounds = array<i64: 9, 8, 128>}, {pipeline_mode = #tpu.pipeline_mode<synchronous>, transform_indices = @transform_2, window_bounds = array<i64: 1, 128>}, {transform_indices = @transform_3, window_bounds = array<i64: 1, 80, 128>}]} {
    %c80_i32 = arith.constant 80 : i32
    %0 = arith.muli %arg1, %c80_i32 : i32
    %1 = tpu.assume_multiple %0, 80 : i32
    %c0 = arith.constant 0 : index
    %2 = arith.index_cast %1 : i32 to index
    %c0_0 = arith.constant 0 : index
    %3 = vector.load %arg2[%c0, %2, %c0_0] : memref<1x112x8xbf16, #tpu.memory_space<vmem>>, vector<1x112x8xbf16>
    %4 = vector.shape_cast %3 : vector<1x112x8xbf16> to vector<112x8xbf16>
    %5 = arith.extf %4 : vector<112x8xbf16> to vector<112x8xf32>
    %c0_1 = arith.constant 0 : index
    %c0_2 = arith.constant 0 : index
    %6 = vector.load %arg6[%c0_1, %c0_2] : memref<112x8xf32, #tpu.memory_space<vmem>>, vector<112x8xf32>
    tpu.vector_store %arg6[%c0_1, %c0_2], %5 {strides = array<i32>} : memref<112x8xf32, #tpu.memory_space<vmem>>, vector<112x8xf32>,
    %cst = arith.constant 0.000000e+00 : f32
    %7 = vector.broadcast %cst : f32 to vector<80x128xf32>
    %c0_3 = arith.constant 0 : index
    %c0_4 = arith.constant 0 : index
    %8 = vector.load %arg6[%c0_3, %c0_4] : memref<112x8xf32, #tpu.memory_space<vmem>>, vector<80x8xf32>
    %9 = arith.truncf %8 : vector<80x8xf32> to vector<80x8xbf16>
    %c0_5 = arith.constant 0 : index
    %c0_6 = arith.constant 0 : index
    %c0_7 = arith.constant 0 : index
    %10 = vector.load %arg3[%c0_5, %c0_6, %c0_7] : memref<9x8x128xbf16, #tpu.memory_space<vmem>>, vector<1x8x128xbf16>
    %11 = vector.shape_cast %10 : vector<1x8x128xbf16> to vector<8x128xbf16>
    %cst_8 = arith.constant dense<0.000000e+00> : vector<80x128xf32>
    %12 = tpu.matmul %9, %11, %cst_8 {dimension_numbers = #tpu.dot_dimension_numbers<[1], [0], [0], [1], [0, 0, 1, 1], [], []>} : vector<80x8xbf16>, vector<8x128xbf16>, vector<80x128xf32> -> vector<80x128xf32>
    %13 = arith.addf %7, %12 : vector<80x128xf32>
    %c1 = arith.constant 1 : index
    %c0_9 = arith.constant 0 : index
    %14 = vector.load %arg6[%c1, %c0_9] : memref<112x8xf32, #tpu.memory_space<vmem>>, vector<80x8xf32>
    %15 = arith.truncf %14 : vector<80x8xf32> to vector<80x8xbf16>
    %c1_10 = arith.constant 1 : index
    %c0_11 = arith.constant 0 : index
    %c0_12 = arith.constant 0 : index
    %16 = vector.load %arg3[%c1_10, %c0_11, %c0_12] : memref<9x8x128xbf16, #tpu.memory_space<vmem>>, vector<1x8x128xbf16>
    %17 = vector.shape_cast %16 : vector<1x8x128xbf16> to vector<8x128xbf16>
    %cst_13 = arith.constant dense<0.000000e+00> : vector<80x128xf32>
    %18 = tpu.matmul %15, %17, %cst_13 {dimension_numbers = #tpu.dot_dimension_numbers<[1], [0], [0], [1], [0, 0, 1, 1], [], []>} : vector<80x8xbf16>, vector<8x128xbf16>, vector<80x128xf32> -> vector<80x128xf32>
    %19 = arith.addf %13, %18 : vector<80x128xf32>
    %c2 = arith.constant 2 : index
    %c0_14 = arith.constant 0 : index
    %20 = vector.load %arg6[%c2, %c0_14] : memref<112x8xf32, #tpu.memory_space<vmem>>, vector<80x8xf32>
    %21 = arith.truncf %20 : vector<80x8xf32> to vector<80x8xbf16>
    %c2_15 = arith.constant 2 : index
    %c0_16 = arith.constant 0 : index
    %c0_17 = arith.constant 0 : index
    %22 = vector.load %arg3[%c2_15, %c0_16, %c0_17] : memref<9x8x128xbf16, #tpu.memory_space<vmem>>, vector<1x8x128xbf16>
    %23 = vector.shape_cast %22 : vector<1x8x128xbf16> to vector<8x128xbf16>
    %cst_18 = arith.constant dense<0.000000e+00> : vector<80x128xf32>
    %24 = tpu.matmul %21, %23, %cst_18 {dimension_numbers = #tpu.dot_dimension_numbers<[1], [0], [0], [1], [0, 0, 1, 1], [], []>} : vector<80x8xbf16>, vector<8x128xbf16>, vector<80x128xf32> -> vector<80x128xf32>
    %25 = arith.addf %19, %24 : vector<80x128xf32>
    %c10 = arith.constant 10 : index
    %c0_19 = arith.constant 0 : index
    %26 = vector.load %arg6[%c10, %c0_19] : memref<112x8xf32, #tpu.memory_space<vmem>>, vector<80x8xf32>
    %27 = arith.truncf %26 : vector<80x8xf32> to vector<80x8xbf16>
    %c3 = arith.constant 3 : index
    %c0_20 = arith.constant 0 : index
    %c0_21 = arith.constant 0 : index
    %28 = vector.load %arg3[%c3, %c0_20, %c0_21] : memref<9x8x128xbf16, #tpu.memory_space<vmem>>, vector<1x8x128xbf16>
    %29 = vector.shape_cast %28 : vector<1x8x128xbf16> to vector<8x128xbf16>
    %cst_22 = arith.constant dense<0.000000e+00> : vector<80x128xf32>
    %30 = tpu.matmul %27, %29, %cst_22 {dimension_numbers = #tpu.dot_dimension_numbers<[1], [0], [0], [1], [0, 0, 1, 1], [], []>} : vector<80x8xbf16>, vector<8x128xbf16>, vector<80x128xf32> -> vector<80x128xf32>
    %31 = arith.addf %25, %30 : vector<80x128xf32>
    %c11 = arith.constant 11 : index
    %c0_23 = arith.constant 0 : index
    %32 = vector.load %arg6[%c11, %c0_23] : memref<112x8xf32, #tpu.memory_space<vmem>>, vector<80x8xf32>
    %33 = arith.truncf %32 : vector<80x8xf32> to vector<80x8xbf16>
    %c4 = arith.constant 4 : index
    %c0_24 = arith.constant 0 : index
    %c0_25 = arith.constant 0 : index
    %34 = vector.load %arg3[%c4, %c0_24, %c0_25] : memref<9x8x128xbf16, #tpu.memory_space<vmem>>, vector<1x8x128xbf16>
    %35 = vector.shape_cast %34 : vector<1x8x128xbf16> to vector<8x128xbf16>
    %cst_26 = arith.constant dense<0.000000e+00> : vector<80x128xf32>
    %36 = tpu.matmul %33, %35, %cst_26 {dimension_numbers = #tpu.dot_dimension_numbers<[1], [0], [0], [1], [0, 0, 1, 1], [], []>} : vector<80x8xbf16>, vector<8x128xbf16>, vector<80x128xf32> -> vector<80x128xf32>
    %37 = arith.addf %31, %36 : vector<80x128xf32>
    %c12 = arith.constant 12 : index
    %c0_27 = arith.constant 0 : index
    %38 = vector.load %arg6[%c12, %c0_27] : memref<112x8xf32, #tpu.memory_space<vmem>>, vector<80x8xf32>
    %39 = arith.truncf %38 : vector<80x8xf32> to vector<80x8xbf16>
    %c5 = arith.constant 5 : index
    %c0_28 = arith.constant 0 : index
    %c0_29 = arith.constant 0 : index
    %40 = vector.load %arg3[%c5, %c0_28, %c0_29] : memref<9x8x128xbf16, #tpu.memory_space<vmem>>, vector<1x8x128xbf16>
    %41 = vector.shape_cast %40 : vector<1x8x128xbf16> to vector<8x128xbf16>
    %cst_30 = arith.constant dense<0.000000e+00> : vector<80x128xf32>
    %42 = tpu.matmul %39, %41, %cst_30 {dimension_numbers = #tpu.dot_dimension_numbers<[1], [0], [0], [1], [0, 0, 1, 1], [], []>} : vector<80x8xbf16>, vector<8x128xbf16>, vector<80x128xf32> -> vector<80x128xf32>
    %43 = arith.addf %37, %42 : vector<80x128xf32>
    %c20 = arith.constant 20 : index
    %c0_31 = arith.constant 0 : index
    %44 = vector.load %arg6[%c20, %c0_31] : memref<112x8xf32, #tpu.memory_space<vmem>>, vector<80x8xf32>
    %45 = arith.truncf %44 : vector<80x8xf32> to vector<80x8xbf16>
    %c6 = arith.constant 6 : index
    %c0_32 = arith.constant 0 : index
    %c0_33 = arith.constant 0 : index
    %46 = vector.load %arg3[%c6, %c0_32, %c0_33] : memref<9x8x128xbf16, #tpu.memory_space<vmem>>, vector<1x8x128xbf16>
    %47 = vector.shape_cast %46 : vector<1x8x128xbf16> to vector<8x128xbf16>
    %cst_34 = arith.constant dense<0.000000e+00> : vector<80x128xf32>
    %48 = tpu.matmul %45, %47, %cst_34 {dimension_numbers = #tpu.dot_dimension_numbers<[1], [0], [0], [1], [0, 0, 1, 1], [], []>} : vector<80x8xbf16>, vector<8x128xbf16>, vector<80x128xf32> -> vector<80x128xf32>
    %49 = arith.addf %43, %48 : vector<80x128xf32>
    %c21 = arith.constant 21 : index
    %c0_35 = arith.constant 0 : index
    %50 = vector.load %arg6[%c21, %c0_35] : memref<112x8xf32, #tpu.memory_space<vmem>>, vector<80x8xf32>
    %51 = arith.truncf %50 : vector<80x8xf32> to vector<80x8xbf16>
    %c7 = arith.constant 7 : index
    %c0_36 = arith.constant 0 : index
    %c0_37 = arith.constant 0 : index
    %52 = vector.load %arg3[%c7, %c0_36, %c0_37] : memref<9x8x128xbf16, #tpu.memory_space<vmem>>, vector<1x8x128xbf16>
    %53 = vector.shape_cast %52 : vector<1x8x128xbf16> to vector<8x128xbf16>
    %cst_38 = arith.constant dense<0.000000e+00> : vector<80x128xf32>
    %54 = tpu.matmul %51, %53, %cst_38 {dimension_numbers = #tpu.dot_dimension_numbers<[1], [0], [0], [1], [0, 0, 1, 1], [], []>} : vector<80x8xbf16>, vector<8x128xbf16>, vector<80x128xf32> -> vector<80x128xf32>
    %55 = arith.addf %49, %54 : vector<80x128xf32>
    %c22 = arith.constant 22 : index
    %c0_39 = arith.constant 0 : index
    %56 = vector.load %arg6[%c22, %c0_39] : memref<112x8xf32, #tpu.memory_space<vmem>>, vector<80x8xf32>
    %57 = arith.truncf %56 : vector<80x8xf32> to vector<80x8xbf16>
    %c8 = arith.constant 8 : index
    %c0_40 = arith.constant 0 : index
    %c0_41 = arith.constant 0 : index
    %58 = vector.load %arg3[%c8, %c0_40, %c0_41] : memref<9x8x128xbf16, #tpu.memory_space<vmem>>, vector<1x8x128xbf16>
    %59 = vector.shape_cast %58 : vector<1x8x128xbf16> to vector<8x128xbf16>
    %cst_42 = arith.constant dense<0.000000e+00> : vector<80x128xf32>
    %60 = tpu.matmul %57, %59, %cst_42 {dimension_numbers = #tpu.dot_dimension_numbers<[1], [0], [0], [1], [0, 0, 1, 1], [], []>} : vector<80x8xbf16>, vector<8x128xbf16>, vector<80x128xf32> -> vector<80x128xf32>
    %61 = arith.addf %55, %60 : vector<80x128xf32>
    %c0_43 = arith.constant 0 : index
    %c0_44 = arith.constant 0 : index
    %62 = vector.load %arg4[%c0_43, %c0_44] : memref<1x128xf32, #tpu.memory_space<vmem>>, vector<1x128xf32>
    %63 = vector.broadcast %62 : vector<1x128xf32> to vector<80x128xf32>
    %64 = arith.addf %61, %63 : vector<80x128xf32>
    %cst_45 = arith.constant 0.000000e+00 : f32
    %65 = vector.broadcast %cst_45 : f32 to vector<80x128xf32>
    %66 = arith.maximumf %64, %65 : vector<80x128xf32>
    %67 = arith.truncf %66 : vector<80x128xf32> to vector<80x128xbf16>
    %c0_46 = arith.constant 0 : index
    %c0_47 = arith.constant 0 : index
    %c0_48 = arith.constant 0 : index
    %68 = vector.load %arg5[%c0_46, %c0_47, %c0_48] : memref<1x80x128xbf16, #tpu.memory_space<vmem>>, vector<1x80x128xbf16>
    %69 = vector.shape_cast %68 : vector<1x80x128xbf16> to vector<80x128xbf16>
    %70 = vector.shape_cast %67 : vector<80x128xbf16> to vector<1x80x128xbf16>
    tpu.vector_store %arg5[%c0_46, %c0_47, %c0_48], %70 {strides = array<i32>} : memref<1x80x128xbf16, #tpu.memory_space<vmem>>, vector<1x80x128xbf16>,
    return
  }
  func.func @transform_0(%arg0: i32, %arg1: i32) -> (i32, i32, i32) {
    %c0_i32 = arith.constant 0 : i32
    %c0_i32_0 = arith.constant 0 : i32
    %c0_i32_1 = arith.constant 0 : i32
    return %arg0, %c0_i32, %c0_i32_0 : i32, i32, i32
  }
  func.func @transform_1(%arg0: i32, %arg1: i32) -> (i32, i32, i32) {
    %c0_i32 = arith.constant 0 : i32
    %c0_i32_0 = arith.constant 0 : i32
    %c0_i32_1 = arith.constant 0 : i32
    %c0_i32_2 = arith.constant 0 : i32
    return %c0_i32, %c0_i32_0, %c0_i32_1 : i32, i32, i32
  }
  func.func @transform_2(%arg0: i32, %arg1: i32) -> (i32, i32) {
    %c0_i32 = arith.constant 0 : i32
    %c0_i32_0 = arith.constant 0 : i32
    %c0_i32_1 = arith.constant 0 : i32
    return %c0_i32, %c0_i32_0 : i32, i32
  }
  func.func @transform_3(%arg0: i32, %arg1: i32) -> (i32, i32, i32) {
    %c0_i32 = arith.constant 0 : i32
    %c0_i32_0 = arith.constant 0 : i32
    return %arg0, %arg1, %c0_i32 : i32, i32, i32
  }
}

</mosaic_0001>

<llo_original>
// kernel: _lambda_.6
$region0: #{_lambda_.6}
  #allocation0 [shape = 'u32[]', space=smem, size = 0x4, offset = 0x4, fixed_abs, tag = 'smem constant byte address 0x4 - core index']
  #allocation1 [shape = 'u32[144,128]{1,0:T(1,128)}', space=vmem, size = 0x12000, scoped, tag = 'internal scratch']
  #allocation2 [shape = 'f32[96,16]{1,0:T(8,128)}', space=vmem, size = 0xc000, scoped, tag = 'scratch operand']
  %s0 = inlined_call_operand.vmem [shape: bf16[2,96,16], index: 0, kind: input, shape index: {}]
  %s1 = inlined_call_operand.vmem [shape: bf16[4,16,128], index: 1, kind: input, shape index: {}]
  %s2 = inlined_call_operand.vmem [shape: f32[1,128], index: 2, kind: input, shape index: {}]
  %s3 = inlined_call_operand.vmem [shape: bf16[2,80,128], index: 3, kind: output, shape index: {}]
  %s4 = sld [smem:[#allocation0]]
  $region45: #{_lambda_.6} parent=0
    _
  %s6 = ssub.s32 1, %s4
  %s7 = scalar_select 0, %s6, %s4
  loop: start=0, step=1, limit=4
  $region2: #{_lambda_.6} parent=0 // loop_pre_header
    _
  $region3: #{_lambda_.6} parent=0 // loop_header
    %s9 = sphi 0, %s13
    %p10 = scmp.ge.s32.totalorder %s9, 4
    %s16 = sphi 0, %s28
    %s17 = sphi 0, %s24
    %s18 = sphi 0, %s16
    %s19 = sphi 0, %s17
    %s20 = sphi 0, %s18
    %s21 = sphi 0, %s19
    %s31 = sphi 0, %s33
    %s34 = sphi 0, %s31
    %s35 = sphi 0, %s34
    %s51 = sphi 0, %s35
    %s55 = sphi 0, %s55
    %s57 = sphi 0, %s55
    %s58 = sphi 0, %s57
    %s72 = sphi 0, %s58
    %s76 = sphi 0, %s76
    %s78 = sphi 0, %s76
    %s79 = sphi 0, %s78
    %s93 = sphi 0, %s79
    %s101 = sphi 0, %s103
    %s104 = sphi 0, %s101
    %s105 = sphi 0, %s104
    %s121 = sphi 0, %s105
  $region4: #{_lambda_.6} parent=0 // loop_header_branch
    %12 = sbr.rel (%p10) target = $region8
  $region5: #{_lambda_.6} parent=0 // loop_body
    %s14 = ssub.s32 %s9, 1
    %s15 = ssub.s32 %s9, 2
    %s22 = sadd.s32 1, %s17
    %p23 = scmp.ge.s32.totalorder %s22, 1
    %s24 = scalar_select %p23, 0, %s22
    %s25 = sadd.s32 1, %s16
    %s26 = scalar_select %p23, %s25, %s16
    %p27 = scmp.ge.s32.totalorder %s26, 2
    %s28 = scalar_select %p27, 0, %s26
    %s29 = ssub.s32 %s16, %s28
    %p30 = scmp.eq.s32.totalorder %s29, 0
    %s32 = sadd.s32 %s31, 1
    %s33 = scalar_select %p30, %s31, %s32
    %p36 = pneg %p30
    %p37 = scmp.eq.s32.totalorder %s9, 1
    %p38 = por %p36, %p37
    %p39 = scmp.ne.s32.totalorder %s31, %s34
    %p40 = scmp.eq.s32.totalorder %s9, 0
    %p41 = por %p39, %p40
    %p42 = scmp.ne.s32.totalorder %s31, %s34
    %p43 = scmp.eq.s32.totalorder %s14, 1
    %p44 = por %p42, %p43
    %p45 = scmp.ne.s32.totalorder %s34, %s35
    %p46 = scmp.eq.s32.totalorder %s14, 0
    %p47 = por %p45, %p46
    %p48 = scmp.ne.s32.totalorder %s34, %s35
    %p49 = scmp.eq.s32.totalorder %s15, 1
    %p50 = por %p48, %p49
    %p52 = scmp.ne.s32.totalorder %s35, %s51
    %p53 = scmp.eq.s32.totalorder %s15, 0
    %p54 = por %p52, %p53
    %s56 = sadd.s32 %s55, 1
    %p59 = scmp.eq.s32.totalorder %s9, 1
    %p60 = scmp.ne.s32.totalorder %s55, %s57
    %p61 = scmp.eq.s32.totalorder %s9, 0
    %p62 = por %p60, %p61
    %p63 = scmp.ne.s32.totalorder %s55, %s57
    %p64 = scmp.eq.s32.totalorder %s14, 1
    %p65 = por %p63, %p64
    %p66 = scmp.ne.s32.totalorder %s57, %s58
    %p67 = scmp.eq.s32.totalorder %s14, 0
    %p68 = por %p66, %p67
    %p69 = scmp.ne.s32.totalorder %s57, %s58
    %p70 = scmp.eq.s32.totalorder %s15, 1
    %p71 = por %p69, %p70
    %p73 = scmp.ne.s32.totalorder %s58, %s72
    %p74 = scmp.eq.s32.totalorder %s15, 0
    %p75 = por %p73, %p74
    %s77 = sadd.s32 %s76, 1
    %p80 = scmp.eq.s32.totalorder %s9, 1
    %p81 = scmp.ne.s32.totalorder %s76, %s78
    %p82 = scmp.eq.s32.totalorder %s9, 0
    %p83 = por %p81, %p82
    %p84 = scmp.ne.s32.totalorder %s76, %s78
    %p85 = scmp.eq.s32.totalorder %s14, 1
    %p86 = por %p84, %p85
    %p87 = scmp.ne.s32.totalorder %s78, %s79
    %p88 = scmp.eq.s32.totalorder %s14, 0
    %p89 = por %p87, %p88
    %p90 = scmp.ne.s32.totalorder %s78, %s79
    %p91 = scmp.eq.s32.totalorder %s15, 1
    %p92 = por %p90, %p91
    %p94 = scmp.ne.s32.totalorder %s79, %s93
    %p95 = scmp.eq.s32.totalorder %s15, 0
    %p96 = por %p94, %p95
    %s97 = ssub.s32 %s16, %s28
    %s98 = ssub.s32 %s17, %s24
    %s99 = sor.u32 %s97, %s98
    %p100 = scmp.eq.s32.totalorder %s99, 0
    %s102 = sadd.s32 %s101, 1
    %s103 = scalar_select %p100, %s101, %s102
    %p106 = pneg %p100
    %p107 = scmp.eq.s32.totalorder %s9, 1
    %p108 = por %p106, %p107
    %p109 = scmp.ne.s32.totalorder %s101, %s104
    %p110 = scmp.eq.s32.totalorder %s9, 0
    %p111 = por %p109, %p110
    %p112 = scmp.ne.s32.totalorder %s101, %s104
    %p113 = scmp.eq.s32.totalorder %s14, 1
    %p114 = por %p112, %p113
    %p115 = scmp.ne.s32.totalorder %s104, %s105
    %p116 = scmp.eq.s32.totalorder %s14, 0
    %p117 = por %p115, %p116
    %p118 = scmp.ne.s32.totalorder %s104, %s105
    %p119 = scmp.eq.s32.totalorder %s15, 1
    %p120 = por %p118, %p119
    %p122 = scmp.ne.s32.totalorder %s105, %s121
    %p123 = scmp.eq.s32.totalorder %s15, 0
    %p124 = por %p122, %p123
    %p125 = scmp.le.s32.totalorder 1, %s9
    %p126 = scmp.lt.s32.totalorder %s9, 3
    %p127 = pnand %p125, %p126
    %p128 = pneg %p127
    // Predicated region
    $region9: #{_lambda_.6} parent=5 // pred_check
      _
    $region10: #{_lambda_.6} parent=5 // pred_check_branch
      %130 = sbr.rel (%p127) target = $region12
    $region11: #{_lambda_.6} parent=5 // pred_region
      %s131 = ssub.s32 %s9, 1
      // Predicated region
      $region13: #{_lambda_.6} parent=11 // pred_check
        %p132 = pneg %p68
      $region14: #{_lambda_.6} parent=11 // pred_check_branch
        %134 = sbr.rel (%p132) target = $region16
      $region15: #{_lambda_.6} parent=11 // pred_region
        _
      $region16: #{_lambda_.6} parent=11 // pred_fallthru
        _
      // Predicated region
      $region17: #{_lambda_.6} parent=11 // pred_check
        %p135 = pneg %p89
      $region18: #{_lambda_.6} parent=11 // pred_check_branch
        %137 = sbr.rel (%p135) target = $region20
      $region19: #{_lambda_.6} parent=11 // pred_region
        _
      $region20: #{_lambda_.6} parent=11 // pred_fallthru
        _
    $region12: #{_lambda_.6} parent=5 // pred_fallthru
      _
    %p138 = scmp.lt.s32.totalorder %s9, 2
    // Predicated region
    $region21: #{_lambda_.6} parent=5 // pred_check
      %p139 = pneg %p138
    $region22: #{_lambda_.6} parent=5 // pred_check_branch
      %141 = sbr.rel (%p139) target = $region24
    $region23: #{_lambda_.6} parent=5 // pred_region
      // Predicated region
      $region25: #{_lambda_.6} parent=23 // pred_check
        %p142 = pneg %p41
      $region26: #{_lambda_.6} parent=23 // pred_check_branch
        %144 = sbr.rel (%p142) target = $region28
      $region27: #{_lambda_.6} parent=23 // pred_region
        %p145 = scmp.lt.s32.totalorder %s16, 1
        %s146 = scalar_select %p145, %s16, 1
        %s147 = smul.addr %s146, 12
        %s148 = smul.addr %s147, 4
        %s149 = scalar_lea.vmem %s0, %s148
      $region28: #{_lambda_.6} parent=23 // pred_fallthru
        _
    $region24: #{_lambda_.6} parent=5 // pred_fallthru
      _
    %p150 = scmp.le.s32.totalorder 1, %s9
    %p151 = scmp.lt.s32.totalorder %s9, 3
    %p152 = pnand %p150, %p151
    %p153 = pneg %p152
    // Predicated region
    $region29: #{_lambda_.6} parent=5 // pred_check
      _
    $region30: #{_lambda_.6} parent=5 // pred_check_branch
      %155 = sbr.rel (%p152) target = $region32
    $region31: #{_lambda_.6} parent=5 // pred_region
      %s156 = ssub.s32 %s9, 1
      %p157 = scmp.lt.s32.totalorder %s18, 1
      %s158 = scalar_select %p157, %s18, 1
      %s159 = smul.addr %s158, 12
      %s160 = smul.addr %s159, 4
      %s161 = scalar_lea.vmem %s0, %s160
      %p162 = pneg %p47
      %p163 = pneg %p44
      %p164 = pneg %p68
      %p165 = pneg %p65
      %p166 = pneg %p89
      %p167 = pneg %p86
      %p168 = pneg %p117
      %p169 = pneg %p114
      %s170 = smul.u32 10, %s19
      %p171 = scmp.lt.s32.totalorder %s18, 1
      %s172 = scalar_select %p171, %s18, 1
      %p173 = scmp.lt.s32.totalorder %s170, 9
      %s174 = scalar_select %p173, %s170, 9
      %s175 = smul.addr %s172, 10
      %s176 = sadd.s32 %s174, %s175
      %s177 = smul.addr %s176, 4
      %s178 = scalar_lea.vmem %s3, %s177
      %p179 = scmp.lt.s32.totalorder %s18, 1
      %s180 = scalar_select %p179, %s18, 1
      %s181 = smul.addr %s180, 12
      %s182 = smul.addr %s181, 4
      %s183 = scalar_lea.vmem %s0, %s182
      %s184 = smul.u32 10, %s19
      %p185 = scmp.lt.s32.totalorder %s18, 1
      %s186 = scalar_select %p185, %s18, 1
      %p187 = scmp.lt.s32.totalorder %s184, 9
      %s188 = scalar_select %p187, %s184, 9
      %s189 = smul.addr %s186, 10
      %s190 = sadd.s32 %s188, %s189
      %s191 = smul.addr %s190, 4
      %s192 = scalar_lea.vmem %s3, %s191
      %s193 = smul.u32 10, %s19
      %s195 = smul.u32 %s19, 80
      %s196 = sshra.s32 %s195, 3
      %s197 = sand.u32 %s195, 7
      %s198 = smul.addr %s196, 4
      %s199 = scalar_lea.vmem %s183, %s198
      %v200 = vld [vmem:[%s199] sm:$0xf]
      %v201 = vld [vmem:[%s199 + $0x4] sm:$0xf]
      %v202 = vld [vmem:[%s199 + $0x8] sm:$0xf]
      %v203 = vld [vmem:[%s199 + $0xc] sm:$0xf]
      %v204 = vld [vmem:[%s199 + $0x10] sm:$0xf]
      %v205 = vld [vmem:[%s199 + $0x14] sm:$0xf]
      %v206 = vld [vmem:[%s199 + $0x18] sm:$0xf]
      %v207 = vld [vmem:[%s199 + $0x1c] sm:$0xf]
      %v208 = vld [vmem:[%s199 + $0x20] sm:$0xf]
      %v209 = vld [vmem:[%s199 + $0x24] sm:$0xf]
      %v210 = vld [vmem:[%s199 + $0x28] sm:$0xf]
      %v211 = vld [vmem:[%s199 + $0x2c] sm:$0xf]
      %v212 = vunpack.c.l.bf16 %v200
      %v213 = vunpack.c.l.bf16 %v201
      %v214 = vunpack.c.l.bf16 %v202
      %v215 = vunpack.c.l.bf16 %v203
      %v216 = vunpack.c.l.bf16 %v204
      %v217 = vunpack.c.l.bf16 %v205
      %v218 = vunpack.c.l.bf16 %v206
      %v219 = vunpack.c.l.bf16 %v207
      %v220 = vunpack.c.l.bf16 %v208
      %v221 = vunpack.c.l.bf16 %v209
      %v222 = vunpack.c.l.bf16 %v210
      %v223 = vunpack.c.l.bf16 %v211
      %vm224 = vcmask 130048
      %225 = vst.msk [vmem:[#allocation2] sm:$0xff] %vm224, %v212
      %226 = vst.msk [vmem:[#allocation2 + $0x8] sm:$0xff] %vm224, %v213
      %227 = vst.msk [vmem:[#allocation2 + $0x10] sm:$0xff] %vm224, %v214
      %228 = vst.msk [vmem:[#allocation2 + $0x18] sm:$0xff] %vm224, %v215
      %229 = vst.msk [vmem:[#allocation2 + $0x20] sm:$0xff] %vm224, %v216
      %230 = vst.msk [vmem:[#allocation2 + $0x28] sm:$0xff] %vm224, %v217
      %231 = vst.msk [vmem:[#allocation2 + $0x30] sm:$0xff] %vm224, %v218
      %232 = vst.msk [vmem:[#allocation2 + $0x38] sm:$0xff] %vm224, %v219
      %233 = vst.msk [vmem:[#allocation2 + $0x40] sm:$0xff] %vm224, %v220
      %234 = vst.msk [vmem:[#allocation2 + $0x48] sm:$0xff] %vm224, %v221
      %235 = vst.msk [vmem:[#allocation2 + $0x50] sm:$0xff] %vm224, %v222
      %236 = vst.msk [vmem:[#allocation2 + $0x58] sm:$0xff] %vm224, %v223
      %v237 = vld [vmem:[#allocation2] sm:$0xff]
      %v238 = vld [vmem:[#allocation2 + $0x8] sm:$0xff]
      %v239 = vld [vmem:[#allocation2 + $0x10] sm:$0xff]
      %v240 = vld [vmem:[#allocation2 + $0x18] sm:$0xff]
      %v241 = vld [vmem:[#allocation2 + $0x20] sm:$0xff]
      %v242 = vld [vmem:[#allocation2 + $0x28] sm:$0xff]
      %v243 = vld [vmem:[#allocation2 + $0x30] sm:$0xff]
      %v244 = vld [vmem:[#allocation2 + $0x38] sm:$0xff]
      %v245 = vld [vmem:[#allocation2 + $0x40] sm:$0xff]
      %v246 = vld [vmem:[#allocation2 + $0x48] sm:$0xff]
      %v247 = vpack.c.bf16 %v238, %v237
      %v248 = vpack.c.bf16 %v240, %v239
      %v249 = vpack.c.bf16 %v242, %v241
      %v250 = vpack.c.bf16 %v244, %v243
      %v251 = vpack.c.bf16 %v246, %v245
      %v252 = vld [vmem:[%s1] sm:$0xf]
      %v253 = vld [vmem:[%s1 + $0x4] sm:$0xf]
      %v254 = vld [vmem:[#allocation2 + $0x1] sm:$0xff]
      %v255 = vld [vmem:[#allocation2 + $0x9] sm:$0xff]
      %v256 = vld [vmem:[#allocation2 + $0x11] sm:$0xff]
      %v257 = vld [vmem:[#allocation2 + $0x19] sm:$0xff]
      %v258 = vld [vmem:[#allocation2 + $0x21] sm:$0xff]
      %v259 = vld [vmem:[#allocation2 + $0x29] sm:$0xff]
      %v260 = vld [vmem:[#allocation2 + $0x31] sm:$0xff]
      %v261 = vld [vmem:[#allocation2 + $0x39] sm:$0xff]
      %v262 = vld [vmem:[#allocation2 + $0x41] sm:$0xff]
      %v263 = vld [vmem:[#allocation2 + $0x49] sm:$0xff]
      %v264 = vpack.c.bf16 %v255, %v254
      %v265 = vpack.c.bf16 %v257, %v256
      %v266 = vpack.c.bf16 %v259, %v258
      %v267 = vpack.c.bf16 %v261, %v260
      %v268 = vpack.c.bf16 %v263, %v262
      %s269 = scalar_lea.vmem %s1, 8
      %v270 = vld [vmem:[%s269] sm:$0xf]
      %v271 = vld [vmem:[%s269 + $0x4] sm:$0xf]
      %v274 = vunpack.c.l.b16 %v270
      %v275 = vunpack.c.l.b16 %v271
      %v276 = vpack.c.b16 %v275, %v274
      %v279 = vsel %vm224, %v264, 0
      %v282 = vsel %vm224, %v265, 0
      %v285 = vsel %vm224, %v266, 0
      %v288 = vsel %vm224, %v267, 0
      %v291 = vsel %vm224, %v268, 0
      %293 = vmatprep.subr.bf16.mxu0 0
      %294 = vmatpush1.bf16.msra.mxu0 %v276
      %295 = vmatprep.subr.bf16.mxu0 0
      %296 = vmatpush1.bf16.msra.mxu0 0
      %297 = vmatprep.subr.bf16.mxu0 0
      %298 = vmatpush1.bf16.msra.mxu0 0
      %299 = vmatprep.subr.bf16.mxu0 0
      %300 = vmatpush1.bf16.msra.mxu0 0
      %301 = vmatprep.subr.bf16.mxu0 0
      %302 = vmatpush1.bf16.msra.mxu0 0
      %303 = vmatprep.subr.bf16.mxu0 0
      %304 = vmatpush1.bf16.msra.mxu0 0
      %305 = vmatprep.subr.bf16.mxu0 0
      %306 = vmatpush1.bf16.msra.mxu0 0
      %307 = vmatprep.subr.bf16.mxu0 0
      %308 = vmatpush1.bf16.msra.mxu0 0
      %309 = vmatprep.subr.bf16.mxu0 0
      %310 = vmatpush1.bf16.msra.mxu0 0
      %311 = vmatprep.subr.bf16.mxu0 0
      %312 = vmatpush1.bf16.msra.mxu0 0
      %313 = vmatprep.subr.bf16.mxu0 0
      %314 = vmatpush1.bf16.msra.mxu0 0
      %315 = vmatprep.subr.bf16.mxu0 0
      %316 = vmatpush1.bf16.msra.mxu0 0
      %317 = vmatprep.subr.bf16.mxu0 0
      %318 = vmatpush1.bf16.msra.mxu0 0
      %319 = vmatprep.subr.bf16.mxu0 0
      %320 = vmatpush1.bf16.msra.mxu0 0
      %321 = vmatprep.subr.bf16.mxu0 0
      %322 = vmatpush1.bf16.msra.mxu0 0
      %323 = vmatprep.subr.bf16.mxu0 0
      %324 = vmatpush1.bf16.msra.mxu0 0
      %325 = vmatprep.mubr.bf16.mxu0 0
      %326 = vmatmul.mubr.bf16.gmra.mrb[0].mxu0 %v279
      %v327 = vpop.f32.mrb[0].mxu0
      %v328 = vadd.f32 0.0, %v327
      %v329 = vpop.f32.mrb[0].mxu0
      %v330 = vpop.f32.mrb[0].mxu0
      %v331 = vadd.f32 0.0, %v330
      %v332 = vpop.f32.mrb[0].mxu0
      %333 = vmatprep.mubr.bf16.mxu0 0
      %334 = vmatmul.mubr.bf16.gmra.mrb[0].mxu0 %v282
      %v335 = vpop.f32.mrb[0].mxu0
      %v336 = vadd.f32 0.0, %v335
      %v337 = vpop.f32.mrb[0].mxu0
      %v338 = vpop.f32.mrb[0].mxu0
      %v339 = vadd.f32 0.0, %v338
      %v340 = vpop.f32.mrb[0].mxu0
      %341 = vmatprep.mubr.bf16.mxu0 0
      %342 = vmatmul.mubr.bf16.gmra.mrb[0].mxu0 %v285
      %v343 = vpop.f32.mrb[0].mxu0
      %v344 = vadd.f32 0.0, %v343
      %v345 = vpop.f32.mrb[0].mxu0
      %v346 = vpop.f32.mrb[0].mxu0
      %v347 = vadd.f32 0.0, %v346
      %v348 = vpop.f32.mrb[0].mxu0
      %349 = vmatprep.mubr.bf16.mxu0 0
      %350 = vmatmul.mubr.bf16.gmra.mrb[0].mxu0 %v288
      %v351 = vpop.f32.mrb[0].mxu0
      %v352 = vadd.f32 0.0, %v351
      %v353 = vpop.f32.mrb[0].mxu0
      %v354 = vpop.f32.mrb[0].mxu0
      %v355 = vadd.f32 0.0, %v354
      %v356 = vpop.f32.mrb[0].mxu0
      %357 = vmatprep.mubr.bf16.mxu0 0
      %358 = vmatmul.mubr.bf16.gmra.mrb[0].mxu0 %v291
      %v359 = vpop.f32.mrb[0].mxu0
      %v360 = vadd.f32 0.0, %v359
      %v361 = vpop.f32.mrb[0].mxu0
      %v362 = vpop.f32.mrb[0].mxu0
      %v363 = vadd.f32 0.0, %v362
      %v364 = vpop.f32.mrb[0].mxu0
      %365 = vdwg.mxu0
      %v368 = vunpack.c.l.b16 %v252
      %v369 = vunpack.c.l.b16 %v253
      %v370 = vpack.c.b16 %v369, %v368
      %v373 = vsel %vm224, %v247, 0
      %v376 = vsel %vm224, %v248, 0
      %v379 = vsel %vm224, %v249, 0
      %v382 = vsel %vm224, %v250, 0
      %v385 = vsel %vm224, %v251, 0
      %387 = vmatprep.subr.bf16.mxu0 0
      %388 = vmatpush1.bf16.msra.mxu0 %v370
      %389 = vmatprep.subr.bf16.mxu0 0
      %390 = vmatpush1.bf16.msra.mxu0 0
      %391 = vmatprep.subr.bf16.mxu0 0
      %392 = vmatpush1.bf16.msra.mxu0 0
      %393 = vmatprep.subr.bf16.mxu0 0
      %394 = vmatpush1.bf16.msra.mxu0 0
      %395 = vmatprep.subr.bf16.mxu0 0
      %396 = vmatpush1.bf16.msra.mxu0 0
      %397 = vmatprep.subr.bf16.mxu0 0
      %398 = vmatpush1.bf16.msra.mxu0 0
      %399 = vmatprep.subr.bf16.mxu0 0
      %400 = vmatpush1.bf16.msra.mxu0 0
      %401 = vmatprep.subr.bf16.mxu0 0
      %402 = vmatpush1.bf16.msra.mxu0 0
      %403 = vmatprep.subr.bf16.mxu0 0
      %404 = vmatpush1.bf16.msra.mxu0 0
      %405 = vmatprep.subr.bf16.mxu0 0
      %406 = vmatpush1.bf16.msra.mxu0 0
      %407 = vmatprep.subr.bf16.mxu0 0
      %408 = vmatpush1.bf16.msra.mxu0 0
      %409 = vmatprep.subr.bf16.mxu0 0
      %410 = vmatpush1.bf16.msra.mxu0 0
      %411 = vmatprep.subr.bf16.mxu0 0
      %412 = vmatpush1.bf16.msra.mxu0 0
      %413 = vmatprep.subr.bf16.mxu0 0
      %414 = vmatpush1.bf16.msra.mxu0 0
      %415 = vmatprep.subr.bf16.mxu0 0
      %416 = vmatpush1.bf16.msra.mxu0 0
      %417 = vmatprep.subr.bf16.mxu0 0
      %418 = vmatpush1.bf16.msra.mxu0 0
      %419 = vmatprep.mubr.bf16.mxu0 0
      %420 = vmatmul.mubr.bf16.gmra.mrb[0].mxu0 %v373
      %v421 = vpop.f32.mrb[0].mxu0
      %v422 = vadd.f32 %v328, %v421
      %v423 = vpop.f32.mrb[0].mxu0
      %v424 = vpop.f32.mrb[0].mxu0
      %v425 = vadd.f32 %v331, %v424
      %v426 = vpop.f32.mrb[0].mxu0
      %427 = vmatprep.mubr.bf16.mxu0 0
      %428 = vmatmul.mubr.bf16.gmra.mrb[0].mxu0 %v376
      %v429 = vpop.f32.mrb[0].mxu0
      %v430 = vadd.f32 %v336, %v429
      %v431 = vpop.f32.mrb[0].mxu0
      %v432 = vpop.f32.mrb[0].mxu0
      %v433 = vadd.f32 %v339, %v432
      %v434 = vpop.f32.mrb[0].mxu0
      %435 = vmatprep.mubr.bf16.mxu0 0
      %436 = vmatmul.mubr.bf16.gmra.mrb[0].mxu0 %v379
      %v437 = vpop.f32.mrb[0].mxu0
      %v438 = vadd.f32 %v344, %v437
      %v439 = vpop.f32.mrb[0].mxu0
      %v440 = vpop.f32.mrb[0].mxu0
      %v441 = vadd.f32 %v347, %v440
      %v442 = vpop.f32.mrb[0].mxu0
      %443 = vmatprep.mubr.bf16.mxu0 0
      %444 = vmatmul.mubr.bf16.gmra.mrb[0].mxu0 %v382
      %v445 = vpop.f32.mrb[0].mxu0
      %v446 = vadd.f32 %v352, %v445
      %v447 = vpop.f32.mrb[0].mxu0
      %v448 = vpop.f32.mrb[0].mxu0
      %v449 = vadd.f32 %v355, %v448
      %v450 = vpop.f32.mrb[0].mxu0
      %451 = vmatprep.mubr.bf16.mxu0 0
      %452 = vmatmul.mubr.bf16.gmra.mrb[0].mxu0 %v385
      %v453 = vpop.f32.mrb[0].mxu0
      %v454 = vadd.f32 %v360, %v453
      %v455 = vpop.f32.mrb[0].mxu0
      %v456 = vpop.f32.mrb[0].mxu0
      %v457 = vadd.f32 %v363, %v456
      %v458 = vpop.f32.mrb[0].mxu0
      %459 = vdwg.mxu0
      %v460 = vld [vmem:[#allocation2 + $0x9] sm:$0xff]
      %v461 = vld [vmem:[#allocation2 + $0x11] sm:$0xff]
      %v462 = vld [vmem:[#allocation2 + $0x19] sm:$0xff]
      %v463 = vld [vmem:[#allocation2 + $0x21] sm:$0xff]
      %v464 = vld [vmem:[#allocation2 + $0x29] sm:$0xff]
      %v465 = vld [vmem:[#allocation2 + $0x31] sm:$0xff]
      %v466 = vld [vmem:[#allocation2 + $0x39] sm:$0xff]
      %v467 = vld [vmem:[#allocation2 + $0x41] sm:$0xff]
      %v468 = vld [vmem:[#allocation2 + $0x49] sm:$0xff]
      %v469 = vld [vmem:[#allocation2 + $0x51] sm:$0xff]
      %v470 = vpack.c.bf16 %v461, %v460
      %v471 = vpack.c.bf16 %v463, %v462
      %v472 = vpack.c.bf16 %v465, %v464
      %v473 = vpack.c.bf16 %v467, %v466
      %v474 = vpack.c.bf16 %v469, %v468
      %s475 = scalar_lea.vmem %s1, 16
      %v476 = vld [vmem:[%s475] sm:$0xf]
      %v477 = vld [vmem:[%s475 + $0x4] sm:$0xf]
      %v480 = vunpack.c.l.b16 %v476
      %v481 = vunpack.c.l.b16 %v477
      %v482 = vpack.c.b16 %v481, %v480
      %v485 = vsel %vm224, %v470, 0
      %v488 = vsel %vm224, %v471, 0
      %v491 = vsel %vm224, %v472, 0
      %v494 = vsel %vm224, %v473, 0
      %v497 = vsel %vm224, %v474, 0
      %499 = vmatprep.subr.bf16.mxu0 0
      %500 = vmatpush1.bf16.msra.mxu0 %v482
      %501 = vmatprep.subr.bf16.mxu0 0
      %502 = vmatpush1.bf16.msra.mxu0 0
      %503 = vmatprep.subr.bf16.mxu0 0
      %504 = vmatpush1.bf16.msra.mxu0 0
      %505 = vmatprep.subr.bf16.mxu0 0
      %506 = vmatpush1.bf16.msra.mxu0 0
      %507 = vmatprep.subr.bf16.mxu0 0
      %508 = vmatpush1.bf16.msra.mxu0 0
      %509 = vmatprep.subr.bf16.mxu0 0
      %510 = vmatpush1.bf16.msra.mxu0 0
      %511 = vmatprep.subr.bf16.mxu0 0
      %512 = vmatpush1.bf16.msra.mxu0 0
      %513 = vmatprep.subr.bf16.mxu0 0
      %514 = vmatpush1.bf16.msra.mxu0 0
      %515 = vmatprep.subr.bf16.mxu0 0
      %516 = vmatpush1.bf16.msra.mxu0 0
      %517 = vmatprep.subr.bf16.mxu0 0
      %518 = vmatpush1.bf16.msra.mxu0 0
      %519 = vmatprep.subr.bf16.mxu0 0
      %520 = vmatpush1.bf16.msra.mxu0 0
      %521 = vmatprep.subr.bf16.mxu0 0
      %522 = vmatpush1.bf16.msra.mxu0 0
      %523 = vmatprep.subr.bf16.mxu0 0
      %524 = vmatpush1.bf16.msra.mxu0 0
      %525 = vmatprep.subr.bf16.mxu0 0
      %526 = vmatpush1.bf16.msra.mxu0 0
      %527 = vmatprep.subr.bf16.mxu0 0
      %528 = vmatpush1.bf16.msra.mxu0 0
      %529 = vmatprep.subr.bf16.mxu0 0
      %530 = vmatpush1.bf16.msra.mxu0 0
      %531 = vmatprep.mubr.bf16.mxu0 0
      %532 = vmatmul.mubr.bf16.gmra.mrb[0].mxu0 %v485
      %v533 = vpop.f32.mrb[0].mxu0
      %v534 = vadd.f32 0.0, %v533
      %v535 = vpop.f32.mrb[0].mxu0
      %v536 = vpop.f32.mrb[0].mxu0
      %v537 = vadd.f32 0.0, %v536
      %v538 = vpop.f32.mrb[0].mxu0
      %539 = vmatprep.mubr.bf16.mxu0 0
      %540 = vmatmul.mubr.bf16.gmra.mrb[0].mxu0 %v488
      %v541 = vpop.f32.mrb[0].mxu0
      %v542 = vadd.f32 0.0, %v541
      %v543 = vpop.f32.mrb[0].mxu0
      %v544 = vpop.f32.mrb[0].mxu0
      %v545 = vadd.f32 0.0, %v544
      %v546 = vpop.f32.mrb[0].mxu0
      %547 = vmatprep.mubr.bf16.mxu0 0
      %548 = vmatmul.mubr.bf16.gmra.mrb[0].mxu0 %v491
      %v549 = vpop.f32.mrb[0].mxu0
      %v550 = vadd.f32 0.0, %v549
      %v551 = vpop.f32.mrb[0].mxu0
      %v552 = vpop.f32.mrb[0].mxu0
      %v553 = vadd.f32 0.0, %v552
      %v554 = vpop.f32.mrb[0].mxu0
      %555 = vmatprep.mubr.bf16.mxu0 0
      %556 = vmatmul.mubr.bf16.gmra.mrb[0].mxu0 %v494
      %v557 = vpop.f32.mrb[0].mxu0
      %v558 = vadd.f32 0.0, %v557
      %v559 = vpop.f32.mrb[0].mxu0
      %v560 = vpop.f32.mrb[0].mxu0
      %v561 = vadd.f32 0.0, %v560
      %v562 = vpop.f32.mrb[0].mxu0
      %563 = vmatprep.mubr.bf16.mxu0 0
      %564 = vmatmul.mubr.bf16.gmra.mrb[0].mxu0 %v497
      %v565 = vpop.f32.mrb[0].mxu0
      %v566 = vadd.f32 0.0, %v565
      %v567 = vpop.f32.mrb[0].mxu0
      %v568 = vpop.f32.mrb[0].mxu0
      %v569 = vadd.f32 0.0, %v568
      %v570 = vpop.f32.mrb[0].mxu0
      %571 = vdwg.mxu0
      %v572 = vadd.f32 %v422, %v534
      %v573 = vadd.f32 %v425, %v537
      %v574 = vadd.f32 %v430, %v542
      %v575 = vadd.f32 %v433, %v545
      %v576 = vadd.f32 %v438, %v550
      %v577 = vadd.f32 %v441, %v553
      %v578 = vadd.f32 %v446, %v558
      %v579 = vadd.f32 %v449, %v561
      %v580 = vadd.f32 %v454, %v566
      %v581 = vadd.f32 %v457, %v569
      %v582 = vld [vmem:[#allocation2 + $0xa] sm:$0xff]
      %v583 = vld [vmem:[#allocation2 + $0x12] sm:$0xff]
      %v584 = vld [vmem:[#allocation2 + $0x1a] sm:$0xff]
      %v585 = vld [vmem:[#allocation2 + $0x22] sm:$0xff]
      %v586 = vld [vmem:[#allocation2 + $0x2a] sm:$0xff]
      %v587 = vld [vmem:[#allocation2 + $0x32] sm:$0xff]
      %v588 = vld [vmem:[#allocation2 + $0x3a] sm:$0xff]
      %v589 = vld [vmem:[#allocation2 + $0x42] sm:$0xff]
      %v590 = vld [vmem:[#allocation2 + $0x4a] sm:$0xff]
      %v591 = vld [vmem:[#allocation2 + $0x52] sm:$0xff]
      %v592 = vpack.c.bf16 %v583, %v582
      %v593 = vpack.c.bf16 %v585, %v584
      %v594 = vpack.c.bf16 %v587, %v586
      %v595 = vpack.c.bf16 %v589, %v588
      %v596 = vpack.c.bf16 %v591, %v590
      %s597 = scalar_lea.vmem %s1, 24
      %v598 = vld [vmem:[%s597] sm:$0xf]
      %v599 = vld [vmem:[%s597 + $0x4] sm:$0xf]
      %v602 = vunpack.c.l.b16 %v598
      %v603 = vunpack.c.l.b16 %v599
      %v604 = vpack.c.b16 %v603, %v602
      %v607 = vsel %vm224, %v592, 0
      %v610 = vsel %vm224, %v593, 0
      %v613 = vsel %vm224, %v594, 0
      %v616 = vsel %vm224, %v595, 0
      %v619 = vsel %vm224, %v596, 0
      %621 = vmatprep.subr.bf16.mxu0 0
      %622 = vmatpush1.bf16.msra.mxu0 %v604
      %623 = vmatprep.subr.bf16.mxu0 0
      %624 = vmatpush1.bf16.msra.mxu0 0
      %625 = vmatprep.subr.bf16.mxu0 0
      %626 = vmatpush1.bf16.msra.mxu0 0
      %627 = vmatprep.subr.bf16.mxu0 0
      %628 = vmatpush1.bf16.msra.mxu0 0
      %629 = vmatprep.subr.bf16.mxu0 0
      %630 = vmatpush1.bf16.msra.mxu0 0
      %631 = vmatprep.subr.bf16.mxu0 0
      %632 = vmatpush1.bf16.msra.mxu0 0
      %633 = vmatprep.subr.bf16.mxu0 0
      %634 = vmatpush1.bf16.msra.mxu0 0
      %635 = vmatprep.subr.bf16.mxu0 0
      %636 = vmatpush1.bf16.msra.mxu0 0
      %637 = vmatprep.subr.bf16.mxu0 0
      %638 = vmatpush1.bf16.msra.mxu0 0
      %639 = vmatprep.subr.bf16.mxu0 0
      %640 = vmatpush1.bf16.msra.mxu0 0
      %641 = vmatprep.subr.bf16.mxu0 0
      %642 = vmatpush1.bf16.msra.mxu0 0
      %643 = vmatprep.subr.bf16.mxu0 0
      %644 = vmatpush1.bf16.msra.mxu0 0
      %645 = vmatprep.subr.bf16.mxu0 0
      %646 = vmatpush1.bf16.msra.mxu0 0
      %647 = vmatprep.subr.bf16.mxu0 0
      %648 = vmatpush1.bf16.msra.mxu0 0
      %649 = vmatprep.subr.bf16.mxu0 0
      %650 = vmatpush1.bf16.msra.mxu0 0
      %651 = vmatprep.subr.bf16.mxu0 0
      %652 = vmatpush1.bf16.msra.mxu0 0
      %653 = vmatprep.mubr.bf16.mxu0 0
      %654 = vmatmul.mubr.bf16.gmra.mrb[0].mxu0 %v607
      %v655 = vpop.f32.mrb[0].mxu0
      %v656 = vadd.f32 0.0, %v655
      %v657 = vpop.f32.mrb[0].mxu0
      %v658 = vpop.f32.mrb[0].mxu0
      %v659 = vadd.f32 0.0, %v658
      %v660 = vpop.f32.mrb[0].mxu0
      %661 = vmatprep.mubr.bf16.mxu0 0
      %662 = vmatmul.mubr.bf16.gmra.mrb[0].mxu0 %v610
      %v663 = vpop.f32.mrb[0].mxu0
      %v664 = vadd.f32 0.0, %v663
      %v665 = vpop.f32.mrb[0].mxu0
      %v666 = vpop.f32.mrb[0].mxu0
      %v667 = vadd.f32 0.0, %v666
      %v668 = vpop.f32.mrb[0].mxu0
      %669 = vmatprep.mubr.bf16.mxu0 0
      %670 = vmatmul.mubr.bf16.gmra.mrb[0].mxu0 %v613
      %v671 = vpop.f32.mrb[0].mxu0
      %v672 = vadd.f32 0.0, %v671
      %v673 = vpop.f32.mrb[0].mxu0
      %v674 = vpop.f32.mrb[0].mxu0
      %v675 = vadd.f32 0.0, %v674
      %v676 = vpop.f32.mrb[0].mxu0
      %677 = vmatprep.mubr.bf16.mxu0 0
      %678 = vmatmul.mubr.bf16.gmra.mrb[0].mxu0 %v616
      %v679 = vpop.f32.mrb[0].mxu0
      %v680 = vadd.f32 0.0, %v679
      %v681 = vpop.f32.mrb[0].mxu0
      %v682 = vpop.f32.mrb[0].mxu0
      %v683 = vadd.f32 0.0, %v682
      %v684 = vpop.f32.mrb[0].mxu0
      %685 = vmatprep.mubr.bf16.mxu0 0
      %686 = vmatmul.mubr.bf16.gmra.mrb[0].mxu0 %v619
      %v687 = vpop.f32.mrb[0].mxu0
      %v688 = vadd.f32 0.0, %v687
      %v689 = vpop.f32.mrb[0].mxu0
      %v690 = vpop.f32.mrb[0].mxu0
      %v691 = vadd.f32 0.0, %v690
      %v692 = vpop.f32.mrb[0].mxu0
      %693 = vdwg.mxu0
      %v694 = vadd.f32 %v572, %v656
      %v695 = vadd.f32 %v573, %v659
      %v696 = vadd.f32 %v574, %v664
      %v697 = vadd.f32 %v575, %v667
      %v698 = vadd.f32 %v576, %v672
      %v699 = vadd.f32 %v577, %v675
      %v700 = vadd.f32 %v578, %v680
      %v701 = vadd.f32 %v579, %v683
      %v702 = vadd.f32 %v580, %v688
      %v703 = vadd.f32 %v581, %v691
      %v704 = vld [vmem:[%s2] sm:$0x1]
      %v706 = vlaneseq
      %v707 = vshrl.u32 %v706, 7
      %v708 = vsub.s32 0, %v707
      %v709 = vrot.slane %v704, %v708
      %v711 = vadd.f32 %v694, %v709
      %v712 = vadd.f32 %v695, %v709
      %v713 = vadd.f32 %v696, %v709
      %v714 = vadd.f32 %v697, %v709
      %v715 = vadd.f32 %v698, %v709
      %v716 = vadd.f32 %v699, %v709
      %v717 = vadd.f32 %v700, %v709
      %v718 = vadd.f32 %v701, %v709
      %v719 = vadd.f32 %v702, %v709
      %v720 = vadd.f32 %v703, %v709
      %v721 = vmax.f32 %v711, 0.0
      %v722 = vmax.f32 %v712, 0.0
      %v723 = vmax.f32 %v713, 0.0
      %v724 = vmax.f32 %v714, 0.0
      %v725 = vmax.f32 %v715, 0.0
      %v726 = vmax.f32 %v716, 0.0
      %v727 = vmax.f32 %v717, 0.0
      %v728 = vmax.f32 %v718, 0.0
      %v729 = vmax.f32 %v719, 0.0
      %v730 = vmax.f32 %v720, 0.0
      %v731 = vpack.c.bf16 %v722, %v721
      %v732 = vpack.c.bf16 %v724, %v723
      %v733 = vpack.c.bf16 %v726, %v725
      %v734 = vpack.c.bf16 %v728, %v727
      %v735 = vpack.c.bf16 %v730, %v729
      %v741 = vunpack.c.l.b16 %v731
      %v742 = vunpack.c.h.b16 %v731
      %v743 = vunpack.c.l.b16 %v732
      %v744 = vunpack.c.h.b16 %v732
      %v745 = vunpack.c.l.b16 %v733
      %v746 = vunpack.c.h.b16 %v733
      %v747 = vunpack.c.l.b16 %v734
      %v748 = vunpack.c.h.b16 %v734
      %v749 = vunpack.c.l.b16 %v735
      %v750 = vunpack.c.h.b16 %v735
      %v751 = vpack.c.b16 %v741, %v741
      %v752 = vpack.c.b16 %v742, %v742
      %v753 = vpack.c.b16 %v743, %v743
      %v754 = vpack.c.b16 %v744, %v744
      %v755 = vpack.c.b16 %v745, %v745
      %v756 = vpack.c.b16 %v746, %v746
      %v757 = vpack.c.b16 %v747, %v747
      %v758 = vpack.c.b16 %v748, %v748
      %v759 = vpack.c.b16 %v749, %v749
      %v760 = vpack.c.b16 %v750, %v750
      %771 = vst [vmem:[%s192] sm:$0xf] %v751
      %772 = vst [vmem:[%s192 + $0x4] sm:$0xf] %v752
      %773 = vst [vmem:[%s192 + $0x8] sm:$0xf] %v753
      %774 = vst [vmem:[%s192 + $0xc] sm:$0xf] %v754
      %775 = vst [vmem:[%s192 + $0x10] sm:$0xf] %v755
      %776 = vst [vmem:[%s192 + $0x14] sm:$0xf] %v756
      %777 = vst [vmem:[%s192 + $0x18] sm:$0xf] %v757
      %778 = vst [vmem:[%s192 + $0x1c] sm:$0xf] %v758
      %779 = vst [vmem:[%s192 + $0x20] sm:$0xf] %v759
      %780 = vst [vmem:[%s192 + $0x24] sm:$0xf] %v760
      %s781 = smul.u32 10, %s19
      %p782 = scmp.lt.s32.totalorder %s18, 1
      %s783 = scalar_select %p782, %s18, 1
      %p784 = scmp.lt.s32.totalorder %s781, 9
      %s785 = scalar_select %p784, %s781, 9
      %s786 = smul.addr %s783, 10
      %s787 = sadd.s32 %s785, %s786
      %s788 = smul.addr %s787, 4
      %s789 = scalar_lea.vmem %s3, %s788
      // Predicated region
      $region33: #{_lambda_.6} parent=31 // pred_check
        %p790 = pneg %p114
      $region34: #{_lambda_.6} parent=31 // pred_check_branch
        %792 = sbr.rel (%p790) target = $region36
      $region35: #{_lambda_.6} parent=31 // pred_region
        %s793 = smul.u32 10, %s19
      $region36: #{_lambda_.6} parent=31 // pred_fallthru
        _
    $region32: #{_lambda_.6} parent=5 // pred_fallthru
      _
    %p794 = scmp.le.s32.totalorder 2, %s9
    // Predicated region
    $region37: #{_lambda_.6} parent=5 // pred_check
      %p795 = pneg %p794
    $region38: #{_lambda_.6} parent=5 // pred_check_branch
      %797 = sbr.rel (%p795) target = $region40
    $region39: #{_lambda_.6} parent=5 // pred_region
      %s798 = ssub.s32 %s9, 2
      // Predicated region
      $region41: #{_lambda_.6} parent=39 // pred_check
        %p799 = pneg %p120
      $region42: #{_lambda_.6} parent=39 // pred_check_branch
        %801 = sbr.rel (%p799) target = $region44
      $region43: #{_lambda_.6} parent=39 // pred_region
        %s802 = smul.u32 10, %s21
        %p803 = scmp.lt.s32.totalorder %s20, 1
        %s804 = scalar_select %p803, %s20, 1
        %p805 = scmp.lt.s32.totalorder %s802, 9
        %s806 = scalar_select %p805, %s802, 9
        %s807 = smul.addr %s804, 10
        %s808 = sadd.s32 %s806, %s807
        %s809 = smul.addr %s808, 4
        %s810 = scalar_lea.vmem %s3, %s809
      $region44: #{_lambda_.6} parent=39 // pred_fallthru
        _
    $region40: #{_lambda_.6} parent=5 // pred_fallthru
      _
  $region6: #{_lambda_.6} parent=0 // loop_footer
    %s13 = sadd.s32 1, %s9
  $region7: #{_lambda_.6} parent=0 // loop_footer_branch
    %8 = sbr.rel target = $region3
  $region8: #{_lambda_.6} parent=0 // loop_exit
    _

// kernel: _lambda_.5
$region0: #{_lambda_.5}
  #allocation0 [shape = 'u32[]', space=smem, size = 0x4, offset = 0x4, fixed_abs, tag = 'smem constant byte address 0x4 - core index']
  #allocation1 [shape = 'u32[144,128]{1,0:T(1,128)}', space=vmem, size = 0x12000, scoped, tag = 'internal scratch']
  #allocation2 [shape = 'f32[64,8]{1,0:T(8,128)}', space=vmem, size = 0x8000, scoped, tag = 'scratch operand']
  %s0 = inlined_call_operand.vmem [shape: bf16[2,64,8], index: 0, kind: input, shape index: {}]
  %s1 = inlined_call_operand.vmem [shape: bf16[1,8,128], index: 1, kind: input, shape index: {}]
  %s2 = inlined_call_operand.vmem [shape: f32[1,128], index: 2, kind: input, shape index: {}]
  %s3 = inlined_call_operand.vmem [shape: bf16[2,64,128], index: 3, kind: output, shape index: {}]
  %s4 = sld [smem:[#allocation0]]
  $region45: #{_lambda_.5} parent=0
    _
  %s6 = ssub.s32 1, %s4
  %s7 = scalar_select 0, %s6, %s4
  loop: start=0, step=1, limit=4
  $region2: #{_lambda_.5} parent=0 // loop_pre_header
    _
  $region3: #{_lambda_.5} parent=0 // loop_header
    %s9 = sphi 0, %s13
    %p10 = scmp.ge.s32.totalorder %s9, 4
    %s16 = sphi 0, %s28
    %s17 = sphi 0, %s24
    %s18 = sphi 0, %s16
    %s19 = sphi 0, %s17
    %s20 = sphi 0, %s18
    %s21 = sphi 0, %s19
    %s31 = sphi 0, %s33
    %s34 = sphi 0, %s31
    %s35 = sphi 0, %s34
    %s51 = sphi 0, %s35
    %s55 = sphi 0, %s55
    %s57 = sphi 0, %s55
    %s58 = sphi 0, %s57
    %s72 = sphi 0, %s58
    %s76 = sphi 0, %s76
    %s78 = sphi 0, %s76
    %s79 = sphi 0, %s78
    %s93 = sphi 0, %s79
    %s101 = sphi 0, %s103
    %s104 = sphi 0, %s101
    %s105 = sphi 0, %s104
    %s121 = sphi 0, %s105
  $region4: #{_lambda_.5} parent=0 // loop_header_branch
    %12 = sbr.rel (%p10) target = $region8
  $region5: #{_lambda_.5} parent=0 // loop_body
    %s14 = ssub.s32 %s9, 1
    %s15 = ssub.s32 %s9, 2
    %s22 = sadd.s32 1, %s17
    %p23 = scmp.ge.s32.totalorder %s22, 1
    %s24 = scalar_select %p23, 0, %s22
    %s25 = sadd.s32 1, %s16
    %s26 = scalar_select %p23, %s25, %s16
    %p27 = scmp.ge.s32.totalorder %s26, 2
    %s28 = scalar_select %p27, 0, %s26
    %s29 = ssub.s32 %s16, %s28
    %p30 = scmp.eq.s32.totalorder %s29, 0
    %s32 = sadd.s32 %s31, 1
    %s33 = scalar_select %p30, %s31, %s32
    %p36 = pneg %p30
    %p37 = scmp.eq.s32.totalorder %s9, 1
    %p38 = por %p36, %p37
    %p39 = scmp.ne.s32.totalorder %s31, %s34
    %p40 = scmp.eq.s32.totalorder %s9, 0
    %p41 = por %p39, %p40
    %p42 = scmp.ne.s32.totalorder %s31, %s34
    %p43 = scmp.eq.s32.totalorder %s14, 1
    %p44 = por %p42, %p43
    %p45 = scmp.ne.s32.totalorder %s34, %s35
    %p46 = scmp.eq.s32.totalorder %s14, 0
    %p47 = por %p45, %p46
    %p48 = scmp.ne.s32.totalorder %s34, %s35
    %p49 = scmp.eq.s32.totalorder %s15, 1
    %p50 = por %p48, %p49
    %p52 = scmp.ne.s32.totalorder %s35, %s51
    %p53 = scmp.eq.s32.totalorder %s15, 0
    %p54 = por %p52, %p53
    %s56 = sadd.s32 %s55, 1
    %p59 = scmp.eq.s32.totalorder %s9, 1
    %p60 = scmp.ne.s32.totalorder %s55, %s57
    %p61 = scmp.eq.s32.totalorder %s9, 0
    %p62 = por %p60, %p61
    %p63 = scmp.ne.s32.totalorder %s55, %s57
    %p64 = scmp.eq.s32.totalorder %s14, 1
    %p65 = por %p63, %p64
    %p66 = scmp.ne.s32.totalorder %s57, %s58
    %p67 = scmp.eq.s32.totalorder %s14, 0
    %p68 = por %p66, %p67
    %p69 = scmp.ne.s32.totalorder %s57, %s58
    %p70 = scmp.eq.s32.totalorder %s15, 1
    %p71 = por %p69, %p70
    %p73 = scmp.ne.s32.totalorder %s58, %s72
    %p74 = scmp.eq.s32.totalorder %s15, 0
    %p75 = por %p73, %p74
    %s77 = sadd.s32 %s76, 1
    %p80 = scmp.eq.s32.totalorder %s9, 1
    %p81 = scmp.ne.s32.totalorder %s76, %s78
    %p82 = scmp.eq.s32.totalorder %s9, 0
    %p83 = por %p81, %p82
    %p84 = scmp.ne.s32.totalorder %s76, %s78
    %p85 = scmp.eq.s32.totalorder %s14, 1
    %p86 = por %p84, %p85
    %p87 = scmp.ne.s32.totalorder %s78, %s79
    %p88 = scmp.eq.s32.totalorder %s14, 0
    %p89 = por %p87, %p88
    %p90 = scmp.ne.s32.totalorder %s78, %s79
    %p91 = scmp.eq.s32.totalorder %s15, 1
    %p92 = por %p90, %p91
    %p94 = scmp.ne.s32.totalorder %s79, %s93
    %p95 = scmp.eq.s32.totalorder %s15, 0
    %p96 = por %p94, %p95
    %s97 = ssub.s32 %s16, %s28
    %s98 = ssub.s32 %s17, %s24
    %s99 = sor.u32 %s97, %s98
    %p100 = scmp.eq.s32.totalorder %s99, 0
    %s102 = sadd.s32 %s101, 1
    %s103 = scalar_select %p100, %s101, %s102
    %p106 = pneg %p100
    %p107 = scmp.eq.s32.totalorder %s9, 1
    %p108 = por %p106, %p107
    %p109 = scmp.ne.s32.totalorder %s101, %s104
    %p110 = scmp.eq.s32.totalorder %s9, 0
    %p111 = por %p109, %p110
    %p112 = scmp.ne.s32.totalorder %s101, %s104
    %p113 = scmp.eq.s32.totalorder %s14, 1
    %p114 = por %p112, %p113
    %p115 = scmp.ne.s32.totalorder %s104, %s105
    %p116 = scmp.eq.s32.totalorder %s14, 0
    %p117 = por %p115, %p116
    %p118 = scmp.ne.s32.totalorder %s104, %s105
    %p119 = scmp.eq.s32.totalorder %s15, 1
    %p120 = por %p118, %p119
    %p122 = scmp.ne.s32.totalorder %s105, %s121
    %p123 = scmp.eq.s32.totalorder %s15, 0
    %p124 = por %p122, %p123
    %p125 = scmp.le.s32.totalorder 1, %s9
    %p126 = scmp.lt.s32.totalorder %s9, 3
    %p127 = pnand %p125, %p126
    %p128 = pneg %p127
    // Predicated region
    $region9: #{_lambda_.5} parent=5 // pred_check
      _
    $region10: #{_lambda_.5} parent=5 // pred_check_branch
      %130 = sbr.rel (%p127) target = $region12
    $region11: #{_lambda_.5} parent=5 // pred_region
      %s131 = ssub.s32 %s9, 1
      // Predicated region
      $region13: #{_lambda_.5} parent=11 // pred_check
        %p132 = pneg %p68
      $region14: #{_lambda_.5} parent=11 // pred_check_branch
        %134 = sbr.rel (%p132) target = $region16
      $region15: #{_lambda_.5} parent=11 // pred_region
        _
      $region16: #{_lambda_.5} parent=11 // pred_fallthru
        _
      // Predicated region
      $region17: #{_lambda_.5} parent=11 // pred_check
        %p135 = pneg %p89
      $region18: #{_lambda_.5} parent=11 // pred_check_branch
        %137 = sbr.rel (%p135) target = $region20
      $region19: #{_lambda_.5} parent=11 // pred_region
        _
      $region20: #{_lambda_.5} parent=11 // pred_fallthru
        _
    $region12: #{_lambda_.5} parent=5 // pred_fallthru
      _
    %p138 = scmp.lt.s32.totalorder %s9, 2
    // Predicated region
    $region21: #{_lambda_.5} parent=5 // pred_check
      %p139 = pneg %p138
    $region22: #{_lambda_.5} parent=5 // pred_check_branch
      %141 = sbr.rel (%p139) target = $region24
    $region23: #{_lambda_.5} parent=5 // pred_region
      // Predicated region
      $region25: #{_lambda_.5} parent=23 // pred_check
        %p142 = pneg %p41
      $region26: #{_lambda_.5} parent=23 // pred_check_branch
        %144 = sbr.rel (%p142) target = $region28
      $region27: #{_lambda_.5} parent=23 // pred_region
        %p145 = scmp.lt.s32.totalorder %s16, 1
        %s146 = scalar_select %p145, %s16, 1
        %s147 = smul.addr %s146, 8
        %s148 = smul.addr %s147, 4
        %s149 = scalar_lea.vmem %s0, %s148
      $region28: #{_lambda_.5} parent=23 // pred_fallthru
        _
    $region24: #{_lambda_.5} parent=5 // pred_fallthru
      _
    %p150 = scmp.le.s32.totalorder 1, %s9
    %p151 = scmp.lt.s32.totalorder %s9, 3
    %p152 = pnand %p150, %p151
    %p153 = pneg %p152
    // Predicated region
    $region29: #{_lambda_.5} parent=5 // pred_check
      _
    $region30: #{_lambda_.5} parent=5 // pred_check_branch
      %155 = sbr.rel (%p152) target = $region32
    $region31: #{_lambda_.5} parent=5 // pred_region
      %s156 = ssub.s32 %s9, 1
      %p157 = scmp.lt.s32.totalorder %s18, 1
      %s158 = scalar_select %p157, %s18, 1
      %s159 = smul.addr %s158, 8
      %s160 = smul.addr %s159, 4
      %s161 = scalar_lea.vmem %s0, %s160
      %p162 = pneg %p47
      %p163 = pneg %p44
      %p164 = pneg %p68
      %p165 = pneg %p65
      %p166 = pneg %p89
      %p167 = pneg %p86
      %p168 = pneg %p117
      %p169 = pneg %p114
      %s170 = smul.u32 8, %s19
      %p171 = scmp.lt.s32.totalorder %s18, 1
      %s172 = scalar_select %p171, %s18, 1
      %p173 = scmp.lt.s32.totalorder %s170, 7
      %s174 = scalar_select %p173, %s170, 7
      %s175 = smul.addr %s172, 8
      %s176 = sadd.s32 %s174, %s175
      %s177 = smul.addr %s176, 4
      %s178 = scalar_lea.vmem %s3, %s177
      %p179 = scmp.lt.s32.totalorder %s18, 1
      %s180 = scalar_select %p179, %s18, 1
      %s181 = smul.addr %s180, 8
      %s182 = smul.addr %s181, 4
      %s183 = scalar_lea.vmem %s0, %s182
      %s184 = smul.u32 8, %s19
      %p185 = scmp.lt.s32.totalorder %s18, 1
      %s186 = scalar_select %p185, %s18, 1
      %p187 = scmp.lt.s32.totalorder %s184, 7
      %s188 = scalar_select %p187, %s184, 7
      %s189 = smul.addr %s186, 8
      %s190 = sadd.s32 %s188, %s189
      %s191 = smul.addr %s190, 4
      %s192 = scalar_lea.vmem %s3, %s191
      %s193 = smul.u32 8, %s19
      %s195 = smul.u32 %s19, 64
      %s196 = sshra.s32 %s195, 3
      %s197 = sand.u32 %s195, 7
      %s198 = smul.addr %s196, 4
      %s199 = scalar_lea.vmem %s183, %s198
      %v200 = vld [vmem:[%s199] sm:$0xf]
      %v201 = vld [vmem:[%s199 + $0x4] sm:$0xf]
      %v202 = vld [vmem:[%s199 + $0x8] sm:$0xf]
      %v203 = vld [vmem:[%s199 + $0xc] sm:$0xf]
      %v204 = vld [vmem:[%s199 + $0x10] sm:$0xf]
      %v205 = vld [vmem:[%s199 + $0x14] sm:$0xf]
      %v206 = vld [vmem:[%s199 + $0x18] sm:$0xf]
      %v207 = vld [vmem:[%s199 + $0x1c] sm:$0xf]
      %v208 = vunpack.c.l.bf16 %v200
      %v209 = vunpack.c.l.bf16 %v201
      %v210 = vunpack.c.l.bf16 %v202
      %v211 = vunpack.c.l.bf16 %v203
      %v212 = vunpack.c.l.bf16 %v204
      %v213 = vunpack.c.l.bf16 %v205
      %v214 = vunpack.c.l.bf16 %v206
      %v215 = vunpack.c.l.bf16 %v207
      %vm216 = vcmask 64512
      %217 = vst.msk [vmem:[#allocation2] sm:$0xff] %vm216, %v208
      %218 = vst.msk [vmem:[#allocation2 + $0x8] sm:$0xff] %vm216, %v209
      %219 = vst.msk [vmem:[#allocation2 + $0x10] sm:$0xff] %vm216, %v210
      %220 = vst.msk [vmem:[#allocation2 + $0x18] sm:$0xff] %vm216, %v211
      %221 = vst.msk [vmem:[#allocation2 + $0x20] sm:$0xff] %vm216, %v212
      %222 = vst.msk [vmem:[#allocation2 + $0x28] sm:$0xff] %vm216, %v213
      %223 = vst.msk [vmem:[#allocation2 + $0x30] sm:$0xff] %vm216, %v214
      %224 = vst.msk [vmem:[#allocation2 + $0x38] sm:$0xff] %vm216, %v215
      %v225 = vld [vmem:[#allocation2] sm:$0xff]
      %v226 = vld [vmem:[#allocation2 + $0x8] sm:$0xff]
      %v227 = vld [vmem:[#allocation2 + $0x10] sm:$0xff]
      %v228 = vld [vmem:[#allocation2 + $0x18] sm:$0xff]
      %v229 = vld [vmem:[#allocation2 + $0x20] sm:$0xff]
      %v230 = vld [vmem:[#allocation2 + $0x28] sm:$0xff]
      %v231 = vld [vmem:[#allocation2 + $0x30] sm:$0xff]
      %v232 = vld [vmem:[#allocation2 + $0x38] sm:$0xff]
      %v233 = vpack.c.bf16 %v226, %v225
      %v234 = vpack.c.bf16 %v228, %v227
      %v235 = vpack.c.bf16 %v230, %v229
      %v236 = vpack.c.bf16 %v232, %v231
      %v237 = vld [vmem:[%s1] sm:$0xf]
      %v238 = vld [vmem:[%s2] sm:$0x1]
      %v240 = vlaneseq
      %v241 = vshrl.u32 %v240, 7
      %v242 = vsub.s32 0, %v241
      %v243 = vrot.slane %v238, %v242
      %v246 = vsel %vm216, %v233, 0
      %v249 = vsel %vm216, %v234, 0
      %v252 = vsel %vm216, %v235, 0
      %v255 = vsel %vm216, %v236, 0
      %vm257 = vcmask 1043456
      %v259 = vsel %vm257, %v237, 0
      %261 = vmatprep.subr.bf16.mxu0 0
      %262 = vmatpush1.bf16.msra.mxu0 %v259
      %263 = vmatprep.subr.bf16.mxu0 0
      %264 = vmatpush1.bf16.msra.mxu0 0
      %265 = vmatprep.subr.bf16.mxu0 0
      %266 = vmatpush1.bf16.msra.mxu0 0
      %267 = vmatprep.subr.bf16.mxu0 0
      %268 = vmatpush1.bf16.msra.mxu0 0
      %269 = vmatprep.subr.bf16.mxu0 0
      %270 = vmatpush1.bf16.msra.mxu0 0
      %271 = vmatprep.subr.bf16.mxu0 0
      %272 = vmatpush1.bf16.msra.mxu0 0
      %273 = vmatprep.subr.bf16.mxu0 0
      %274 = vmatpush1.bf16.msra.mxu0 0
      %275 = vmatprep.subr.bf16.mxu0 0
      %276 = vmatpush1.bf16.msra.mxu0 0
      %277 = vmatprep.subr.bf16.mxu0 0
      %278 = vmatpush1.bf16.msra.mxu0 0
      %279 = vmatprep.subr.bf16.mxu0 0
      %280 = vmatpush1.bf16.msra.mxu0 0
      %281 = vmatprep.subr.bf16.mxu0 0
      %282 = vmatpush1.bf16.msra.mxu0 0
      %283 = vmatprep.subr.bf16.mxu0 0
      %284 = vmatpush1.bf16.msra.mxu0 0
      %285 = vmatprep.subr.bf16.mxu0 0
      %286 = vmatpush1.bf16.msra.mxu0 0
      %287 = vmatprep.subr.bf16.mxu0 0
      %288 = vmatpush1.bf16.msra.mxu0 0
      %289 = vmatprep.subr.bf16.mxu0 0
      %290 = vmatpush1.bf16.msra.mxu0 0
      %291 = vmatprep.subr.bf16.mxu0 0
      %292 = vmatpush1.bf16.msra.mxu0 0
      %293 = vmatprep.mubr.bf16.mxu0 0
      %294 = vmatmul.mubr.bf16.gmra.mrb[0].mxu0 %v246
      %v295 = vpop.f32.mrb[0].mxu0
      %v296 = vadd.f32 %v243, %v295
      %v297 = vpop.f32.mrb[0].mxu0
      %v298 = vpop.f32.mrb[0].mxu0
      %v299 = vadd.f32 %v243, %v298
      %v300 = vpop.f32.mrb[0].mxu0
      %301 = vmatprep.mubr.bf16.mxu0 0
      %302 = vmatmul.mubr.bf16.gmra.mrb[0].mxu0 %v249
      %v303 = vpop.f32.mrb[0].mxu0
      %v304 = vadd.f32 %v243, %v303
      %v305 = vpop.f32.mrb[0].mxu0
      %v306 = vpop.f32.mrb[0].mxu0
      %v307 = vadd.f32 %v243, %v306
      %v308 = vpop.f32.mrb[0].mxu0
      %309 = vmatprep.mubr.bf16.mxu0 0
      %310 = vmatmul.mubr.bf16.gmra.mrb[0].mxu0 %v252
      %v311 = vpop.f32.mrb[0].mxu0
      %v312 = vadd.f32 %v243, %v311
      %v313 = vpop.f32.mrb[0].mxu0
      %v314 = vpop.f32.mrb[0].mxu0
      %v315 = vadd.f32 %v243, %v314
      %v316 = vpop.f32.mrb[0].mxu0
      %317 = vmatprep.mubr.bf16.mxu0 0
      %318 = vmatmul.mubr.bf16.gmra.mrb[0].mxu0 %v255
      %v319 = vpop.f32.mrb[0].mxu0
      %v320 = vadd.f32 %v243, %v319
      %v321 = vpop.f32.mrb[0].mxu0
      %v322 = vpop.f32.mrb[0].mxu0
      %v323 = vadd.f32 %v243, %v322
      %v324 = vpop.f32.mrb[0].mxu0
      %325 = vdwg.mxu0
      %v326 = vpack.c.bf16 %v299, %v296
      %v327 = vpack.c.bf16 %v307, %v304
      %v328 = vpack.c.bf16 %v315, %v312
      %v329 = vpack.c.bf16 %v323, %v320
      %v334 = vunpack.c.l.b16 %v326
      %v335 = vunpack.c.h.b16 %v326
      %v336 = vunpack.c.l.b16 %v327
      %v337 = vunpack.c.h.b16 %v327
      %v338 = vunpack.c.l.b16 %v328
      %v339 = vunpack.c.h.b16 %v328
      %v340 = vunpack.c.l.b16 %v329
      %v341 = vunpack.c.h.b16 %v329
      %v342 = vpack.c.b16 %v334, %v334
      %v343 = vpack.c.b16 %v335, %v335
      %v344 = vpack.c.b16 %v336, %v336
      %v345 = vpack.c.b16 %v337, %v337
      %v346 = vpack.c.b16 %v338, %v338
      %v347 = vpack.c.b16 %v339, %v339
      %v348 = vpack.c.b16 %v340, %v340
      %v349 = vpack.c.b16 %v341, %v341
      %358 = vst [vmem:[%s192] sm:$0xf] %v342
      %359 = vst [vmem:[%s192 + $0x4] sm:$0xf] %v343
      %360 = vst [vmem:[%s192 + $0x8] sm:$0xf] %v344
      %361 = vst [vmem:[%s192 + $0xc] sm:$0xf] %v345
      %362 = vst [vmem:[%s192 + $0x10] sm:$0xf] %v346
      %363 = vst [vmem:[%s192 + $0x14] sm:$0xf] %v347
      %364 = vst [vmem:[%s192 + $0x18] sm:$0xf] %v348
      %365 = vst [vmem:[%s192 + $0x1c] sm:$0xf] %v349
      %s366 = smul.u32 8, %s19
      %p367 = scmp.lt.s32.totalorder %s18, 1
      %s368 = scalar_select %p367, %s18, 1
      %p369 = scmp.lt.s32.totalorder %s366, 7
      %s370 = scalar_select %p369, %s366, 7
      %s371 = smul.addr %s368, 8
      %s372 = sadd.s32 %s370, %s371
      %s373 = smul.addr %s372, 4
      %s374 = scalar_lea.vmem %s3, %s373
      // Predicated region
      $region33: #{_lambda_.5} parent=31 // pred_check
        %p375 = pneg %p114
      $region34: #{_lambda_.5} parent=31 // pred_check_branch
        %377 = sbr.rel (%p375) target = $region36
      $region35: #{_lambda_.5} parent=31 // pred_region
        %s378 = smul.u32 8, %s19
      $region36: #{_lambda_.5} parent=31 // pred_fallthru
        _
    $region32: #{_lambda_.5} parent=5 // pred_fallthru
      _
    %p379 = scmp.le.s32.totalorder 2, %s9
    // Predicated region
    $region37: #{_lambda_.5} parent=5 // pred_check
      %p380 = pneg %p379
    $region38: #{_lambda_.5} parent=5 // pred_check_branch
      %382 = sbr.rel (%p380) target = $region40
    $region39: #{_lambda_.5} parent=5 // pred_region
      %s383 = ssub.s32 %s9, 2
      // Predicated region
      $region41: #{_lambda_.5} parent=39 // pred_check
        %p384 = pneg %p120
      $region42: #{_lambda_.5} parent=39 // pred_check_branch
        %386 = sbr.rel (%p384) target = $region44
      $region43: #{_lambda_.5} parent=39 // pred_region
        %s387 = smul.u32 8, %s21
        %p388 = scmp.lt.s32.totalorder %s20, 1
        %s389 = scalar_select %p388, %s20, 1
        %p390 = scmp.lt.s32.totalorder %s387, 7
        %s391 = scalar_select %p390, %s387, 7
        %s392 = smul.addr %s389, 8
        %s393 = sadd.s32 %s391, %s392
        %s394 = smul.addr %s393, 4
        %s395 = scalar_lea.vmem %s3, %s394
      $region44: #{_lambda_.5} parent=39 // pred_fallthru
        _
    $region40: #{_lambda_.5} parent=5 // pred_fallthru
      _
  $region6: #{_lambda_.5} parent=0 // loop_footer
    %s13 = sadd.s32 1, %s9
  $region7: #{_lambda_.5} parent=0 // loop_footer_branch
    %8 = sbr.rel target = $region3
  $region8: #{_lambda_.5} parent=0 // loop_exit
    _

// kernel: _lambda_.7
$region0: #{_lambda_.7}
  #allocation0 [shape = 'u32[]', space=smem, size = 0x4, offset = 0x4, fixed_abs, tag = 'smem constant byte address 0x4 - core index']
  #allocation1 [shape = 'u32[144,128]{1,0:T(1,128)}', space=vmem, size = 0x12000, scoped, tag = 'internal scratch']
  #allocation2 [shape = 'f32[112,8]{1,0:T(8,128)}', space=vmem, size = 0xe000, scoped, tag = 'scratch operand']
  %s0 = inlined_call_operand.vmem [shape: bf16[2,112,8], index: 0, kind: input, shape index: {}]
  %s1 = inlined_call_operand.vmem [shape: bf16[9,8,128], index: 1, kind: input, shape index: {}]
  %s2 = inlined_call_operand.vmem [shape: f32[1,128], index: 2, kind: input, shape index: {}]
  %s3 = inlined_call_operand.vmem [shape: bf16[2,80,128], index: 3, kind: input, shape index: {}]
  %s4 = inlined_call_operand.vmem [shape: bf16[2,80,128], index: 4, kind: output, shape index: {}]
  %s5 = sld [smem:[#allocation0]]
  $region49: #{_lambda_.7} parent=0
    _
  %s7 = ssub.s32 1, %s5
  %s8 = scalar_select 0, %s7, %s5
  loop: start=0, step=1, limit=4
  $region2: #{_lambda_.7} parent=0 // loop_pre_header
    _
  $region3: #{_lambda_.7} parent=0 // loop_header
    %s10 = sphi 0, %s14
    %p11 = scmp.ge.s32.totalorder %s10, 4
    %s17 = sphi 0, %s29
    %s18 = sphi 0, %s25
    %s19 = sphi 0, %s17
    %s20 = sphi 0, %s18
    %s21 = sphi 0, %s19
    %s22 = sphi 0, %s20
    %s32 = sphi 0, %s34
    %s35 = sphi 0, %s32
    %s36 = sphi 0, %s35
    %s52 = sphi 0, %s36
    %s56 = sphi 0, %s56
    %s58 = sphi 0, %s56
    %s59 = sphi 0, %s58
    %s73 = sphi 0, %s59
    %s77 = sphi 0, %s77
    %s79 = sphi 0, %s77
    %s80 = sphi 0, %s79
    %s94 = sphi 0, %s80
    %s102 = sphi 0, %s104
    %s105 = sphi 0, %s102
    %s106 = sphi 0, %s105
    %s122 = sphi 0, %s106
    %s130 = sphi 0, %s132
    %s133 = sphi 0, %s130
    %s134 = sphi 0, %s133
    %s150 = sphi 0, %s134
  $region4: #{_lambda_.7} parent=0 // loop_header_branch
    %13 = sbr.rel (%p11) target = $region8
  $region5: #{_lambda_.7} parent=0 // loop_body
    %s15 = ssub.s32 %s10, 1
    %s16 = ssub.s32 %s10, 2
    %s23 = sadd.s32 1, %s18
    %p24 = scmp.ge.s32.totalorder %s23, 1
    %s25 = scalar_select %p24, 0, %s23
    %s26 = sadd.s32 1, %s17
    %s27 = scalar_select %p24, %s26, %s17
    %p28 = scmp.ge.s32.totalorder %s27, 2
    %s29 = scalar_select %p28, 0, %s27
    %s30 = ssub.s32 %s17, %s29
    %p31 = scmp.eq.s32.totalorder %s30, 0
    %s33 = sadd.s32 %s32, 1
    %s34 = scalar_select %p31, %s32, %s33
    %p37 = pneg %p31
    %p38 = scmp.eq.s32.totalorder %s10, 1
    %p39 = por %p37, %p38
    %p40 = scmp.ne.s32.totalorder %s32, %s35
    %p41 = scmp.eq.s32.totalorder %s10, 0
    %p42 = por %p40, %p41
    %p43 = scmp.ne.s32.totalorder %s32, %s35
    %p44 = scmp.eq.s32.totalorder %s15, 1
    %p45 = por %p43, %p44
    %p46 = scmp.ne.s32.totalorder %s35, %s36
    %p47 = scmp.eq.s32.totalorder %s15, 0
    %p48 = por %p46, %p47
    %p49 = scmp.ne.s32.totalorder %s35, %s36
    %p50 = scmp.eq.s32.totalorder %s16, 1
    %p51 = por %p49, %p50
    %p53 = scmp.ne.s32.totalorder %s36, %s52
    %p54 = scmp.eq.s32.totalorder %s16, 0
    %p55 = por %p53, %p54
    %s57 = sadd.s32 %s56, 1
    %p60 = scmp.eq.s32.totalorder %s10, 1
    %p61 = scmp.ne.s32.totalorder %s56, %s58
    %p62 = scmp.eq.s32.totalorder %s10, 0
    %p63 = por %p61, %p62
    %p64 = scmp.ne.s32.totalorder %s56, %s58
    %p65 = scmp.eq.s32.totalorder %s15, 1
    %p66 = por %p64, %p65
    %p67 = scmp.ne.s32.totalorder %s58, %s59
    %p68 = scmp.eq.s32.totalorder %s15, 0
    %p69 = por %p67, %p68
    %p70 = scmp.ne.s32.totalorder %s58, %s59
    %p71 = scmp.eq.s32.totalorder %s16, 1
    %p72 = por %p70, %p71
    %p74 = scmp.ne.s32.totalorder %s59, %s73
    %p75 = scmp.eq.s32.totalorder %s16, 0
    %p76 = por %p74, %p75
    %s78 = sadd.s32 %s77, 1
    %p81 = scmp.eq.s32.totalorder %s10, 1
    %p82 = scmp.ne.s32.totalorder %s77, %s79
    %p83 = scmp.eq.s32.totalorder %s10, 0
    %p84 = por %p82, %p83
    %p85 = scmp.ne.s32.totalorder %s77, %s79
    %p86 = scmp.eq.s32.totalorder %s15, 1
    %p87 = por %p85, %p86
    %p88 = scmp.ne.s32.totalorder %s79, %s80
    %p89 = scmp.eq.s32.totalorder %s15, 0
    %p90 = por %p88, %p89
    %p91 = scmp.ne.s32.totalorder %s79, %s80
    %p92 = scmp.eq.s32.totalorder %s16, 1
    %p93 = por %p91, %p92
    %p95 = scmp.ne.s32.totalorder %s80, %s94
    %p96 = scmp.eq.s32.totalorder %s16, 0
    %p97 = por %p95, %p96
    %s98 = ssub.s32 %s17, %s29
    %s99 = ssub.s32 %s18, %s25
    %s100 = sor.u32 %s98, %s99
    %p101 = scmp.eq.s32.totalorder %s100, 0
    %s103 = sadd.s32 %s102, 1
    %s104 = scalar_select %p101, %s102, %s103
    %p107 = pneg %p101
    %p108 = scmp.eq.s32.totalorder %s10, 1
    %p109 = por %p107, %p108
    %p110 = scmp.ne.s32.totalorder %s102, %s105
    %p111 = scmp.eq.s32.totalorder %s10, 0
    %p112 = por %p110, %p111
    %p113 = scmp.ne.s32.totalorder %s102, %s105
    %p114 = scmp.eq.s32.totalorder %s15, 1
    %p115 = por %p113, %p114
    %p116 = scmp.ne.s32.totalorder %s105, %s106
    %p117 = scmp.eq.s32.totalorder %s15, 0
    %p118 = por %p116, %p117
    %p119 = scmp.ne.s32.totalorder %s105, %s106
    %p120 = scmp.eq.s32.totalorder %s16, 1
    %p121 = por %p119, %p120
    %p123 = scmp.ne.s32.totalorder %s106, %s122
    %p124 = scmp.eq.s32.totalorder %s16, 0
    %p125 = por %p123, %p124
    %s126 = ssub.s32 %s17, %s29
    %s127 = ssub.s32 %s18, %s25
    %s128 = sor.u32 %s126, %s127
    %p129 = scmp.eq.s32.totalorder %s128, 0
    %s131 = sadd.s32 %s130, 1
    %s132 = scalar_select %p129, %s130, %s131
    %p135 = pneg %p129
    %p136 = scmp.eq.s32.totalorder %s10, 1
    %p137 = por %p135, %p136
    %p138 = scmp.ne.s32.totalorder %s130, %s133
    %p139 = scmp.eq.s32.totalorder %s10, 0
    %p140 = por %p138, %p139
    %p141 = scmp.ne.s32.totalorder %s130, %s133
    %p142 = scmp.eq.s32.totalorder %s15, 1
    %p143 = por %p141, %p142
    %p144 = scmp.ne.s32.totalorder %s133, %s134
    %p145 = scmp.eq.s32.totalorder %s15, 0
    %p146 = por %p144, %p145
    %p147 = scmp.ne.s32.totalorder %s133, %s134
    %p148 = scmp.eq.s32.totalorder %s16, 1
    %p149 = por %p147, %p148
    %p151 = scmp.ne.s32.totalorder %s134, %s150
    %p152 = scmp.eq.s32.totalorder %s16, 0
    %p153 = por %p151, %p152
    %p154 = scmp.le.s32.totalorder 1, %s10
    %p155 = scmp.lt.s32.totalorder %s10, 3
    %p156 = pnand %p154, %p155
    %p157 = pneg %p156
    // Predicated region
    $region9: #{_lambda_.7} parent=5 // pred_check
      _
    $region10: #{_lambda_.7} parent=5 // pred_check_branch
      %159 = sbr.rel (%p156) target = $region12
    $region11: #{_lambda_.7} parent=5 // pred_region
      %s160 = ssub.s32 %s10, 1
      // Predicated region
      $region13: #{_lambda_.7} parent=11 // pred_check
        %p161 = pneg %p69
      $region14: #{_lambda_.7} parent=11 // pred_check_branch
        %163 = sbr.rel (%p161) target = $region16
      $region15: #{_lambda_.7} parent=11 // pred_region
        _
      $region16: #{_lambda_.7} parent=11 // pred_fallthru
        _
      // Predicated region
      $region17: #{_lambda_.7} parent=11 // pred_check
        %p164 = pneg %p90
      $region18: #{_lambda_.7} parent=11 // pred_check_branch
        %166 = sbr.rel (%p164) target = $region20
      $region19: #{_lambda_.7} parent=11 // pred_region
        _
      $region20: #{_lambda_.7} parent=11 // pred_fallthru
        _
    $region12: #{_lambda_.7} parent=5 // pred_fallthru
      _
    %p167 = scmp.lt.s32.totalorder %s10, 2
    // Predicated region
    $region21: #{_lambda_.7} parent=5 // pred_check
      %p168 = pneg %p167
    $region22: #{_lambda_.7} parent=5 // pred_check_branch
      %170 = sbr.rel (%p168) target = $region24
    $region23: #{_lambda_.7} parent=5 // pred_region
      // Predicated region
      $region25: #{_lambda_.7} parent=23 // pred_check
        %p171 = pneg %p42
      $region26: #{_lambda_.7} parent=23 // pred_check_branch
        %173 = sbr.rel (%p171) target = $region28
      $region27: #{_lambda_.7} parent=23 // pred_region
        %p174 = scmp.lt.s32.totalorder %s17, 1
        %s175 = scalar_select %p174, %s17, 1
        %s176 = smul.addr %s175, 14
        %s177 = smul.addr %s176, 4
        %s178 = scalar_lea.vmem %s0, %s177
      $region28: #{_lambda_.7} parent=23 // pred_fallthru
        _
      // Predicated region
      $region29: #{_lambda_.7} parent=23 // pred_check
        %p179 = pneg %p112
      $region30: #{_lambda_.7} parent=23 // pred_check_branch
        %181 = sbr.rel (%p179) target = $region32
      $region31: #{_lambda_.7} parent=23 // pred_region
        %s182 = smul.u32 10, %s18
        %p183 = scmp.lt.s32.totalorder %s17, 1
        %s184 = scalar_select %p183, %s17, 1
        %p185 = scmp.lt.s32.totalorder %s182, 9
        %s186 = scalar_select %p185, %s182, 9
        %s187 = smul.addr %s184, 10
        %s188 = sadd.s32 %s186, %s187
        %s189 = smul.addr %s188, 4
        %s190 = scalar_lea.vmem %s3, %s189
        %s191 = smul.u32 10, %s18
      $region32: #{_lambda_.7} parent=23 // pred_fallthru
        _
    $region24: #{_lambda_.7} parent=5 // pred_fallthru
      _
    %p192 = scmp.le.s32.totalorder 1, %s10
    %p193 = scmp.lt.s32.totalorder %s10, 3
    %p194 = pnand %p192, %p193
    %p195 = pneg %p194
    // Predicated region
    $region33: #{_lambda_.7} parent=5 // pred_check
      _
    $region34: #{_lambda_.7} parent=5 // pred_check_branch
      %197 = sbr.rel (%p194) target = $region36
    $region35: #{_lambda_.7} parent=5 // pred_region
      %s198 = ssub.s32 %s10, 1
      %p199 = scmp.lt.s32.totalorder %s19, 1
      %s200 = scalar_select %p199, %s19, 1
      %s201 = smul.addr %s200, 14
      %s202 = smul.addr %s201, 4
      %s203 = scalar_lea.vmem %s0, %s202
      %p204 = pneg %p48
      %p205 = pneg %p45
      %p206 = pneg %p69
      %p207 = pneg %p66
      %p208 = pneg %p90
      %p209 = pneg %p87
      %s210 = smul.u32 10, %s20
      %p211 = scmp.lt.s32.totalorder %s19, 1
      %s212 = scalar_select %p211, %s19, 1
      %p213 = scmp.lt.s32.totalorder %s210, 9
      %s214 = scalar_select %p213, %s210, 9
      %s215 = smul.addr %s212, 10
      %s216 = sadd.s32 %s214, %s215
      %s217 = smul.addr %s216, 4
      %s218 = scalar_lea.vmem %s3, %s217
      %p219 = pneg %p118
      %p220 = pneg %p115
      %p221 = pneg %p146
      %p222 = pneg %p143
      %s223 = smul.u32 10, %s20
      %p224 = scmp.lt.s32.totalorder %s19, 1
      %s225 = scalar_select %p224, %s19, 1
      %p226 = scmp.lt.s32.totalorder %s223, 9
      %s227 = scalar_select %p226, %s223, 9
      %s228 = smul.addr %s225, 10
      %s229 = sadd.s32 %s227, %s228
      %s230 = smul.addr %s229, 4
      %s231 = scalar_lea.vmem %s4, %s230
      %p232 = scmp.lt.s32.totalorder %s19, 1
      %s233 = scalar_select %p232, %s19, 1
      %s234 = smul.addr %s233, 14
      %s235 = smul.addr %s234, 4
      %s236 = scalar_lea.vmem %s0, %s235
      %s237 = smul.u32 10, %s20
      %p238 = scmp.lt.s32.totalorder %s19, 1
      %s239 = scalar_select %p238, %s19, 1
      %p240 = scmp.lt.s32.totalorder %s237, 9
      %s241 = scalar_select %p240, %s237, 9
      %s242 = smul.addr %s239, 10
      %s243 = sadd.s32 %s241, %s242
      %s244 = smul.addr %s243, 4
      %s245 = scalar_lea.vmem %s3, %s244
      %s246 = smul.u32 10, %s20
      %s247 = smul.u32 10, %s20
      %p248 = scmp.lt.s32.totalorder %s19, 1
      %s249 = scalar_select %p248, %s19, 1
      %p250 = scmp.lt.s32.totalorder %s247, 9
      %s251 = scalar_select %p250, %s247, 9
      %s252 = smul.addr %s249, 10
      %s253 = sadd.s32 %s251, %s252
      %s254 = smul.addr %s253, 4
      %s255 = scalar_lea.vmem %s4, %s254
      %s256 = smul.u32 10, %s20
      %s258 = smul.u32 %s20, 80
      %s259 = sshra.s32 %s258, 3
      %s260 = sand.u32 %s258, 7
      %s261 = smul.addr %s259, 4
      %s262 = scalar_lea.vmem %s236, %s261
      %v263 = vld [vmem:[%s262] sm:$0xf]
      %v264 = vld [vmem:[%s262 + $0x4] sm:$0xf]
      %v265 = vld [vmem:[%s262 + $0x8] sm:$0xf]
      %v266 = vld [vmem:[%s262 + $0xc] sm:$0xf]
      %v267 = vld [vmem:[%s262 + $0x10] sm:$0xf]
      %v268 = vld [vmem:[%s262 + $0x14] sm:$0xf]
      %v269 = vld [vmem:[%s262 + $0x18] sm:$0xf]
      %v270 = vld [vmem:[%s262 + $0x1c] sm:$0xf]
      %v271 = vld [vmem:[%s262 + $0x20] sm:$0xf]
      %v272 = vld [vmem:[%s262 + $0x24] sm:$0xf]
      %v273 = vld [vmem:[%s262 + $0x28] sm:$0xf]
      %v274 = vld [vmem:[%s262 + $0x2c] sm:$0xf]
      %v275 = vld [vmem:[%s262 + $0x30] sm:$0xf]
      %v276 = vld [vmem:[%s262 + $0x34] sm:$0xf]
      %v277 = vunpack.c.l.bf16 %v263
      %v278 = vunpack.c.l.bf16 %v264
      %v279 = vunpack.c.l.bf16 %v265
      %v280 = vunpack.c.l.bf16 %v266
      %v281 = vunpack.c.l.bf16 %v267
      %v282 = vunpack.c.l.bf16 %v268
      %v283 = vunpack.c.l.bf16 %v269
      %v284 = vunpack.c.l.bf16 %v270
      %v285 = vunpack.c.l.bf16 %v271
      %v286 = vunpack.c.l.bf16 %v272
      %v287 = vunpack.c.l.bf16 %v273
      %v288 = vunpack.c.l.bf16 %v274
      %v289 = vunpack.c.l.bf16 %v275
      %v290 = vunpack.c.l.bf16 %v276
      %vm291 = vcmask 64512
      %292 = vst.msk [vmem:[#allocation2] sm:$0xff] %vm291, %v277
      %293 = vst.msk [vmem:[#allocation2 + $0x8] sm:$0xff] %vm291, %v278
      %294 = vst.msk [vmem:[#allocation2 + $0x10] sm:$0xff] %vm291, %v279
      %295 = vst.msk [vmem:[#allocation2 + $0x18] sm:$0xff] %vm291, %v280
      %296 = vst.msk [vmem:[#allocation2 + $0x20] sm:$0xff] %vm291, %v281
      %297 = vst.msk [vmem:[#allocation2 + $0x28] sm:$0xff] %vm291, %v282
      %298 = vst.msk [vmem:[#allocation2 + $0x30] sm:$0xff] %vm291, %v283
      %299 = vst.msk [vmem:[#allocation2 + $0x38] sm:$0xff] %vm291, %v284
      %300 = vst.msk [vmem:[#allocation2 + $0x40] sm:$0xff] %vm291, %v285
      %301 = vst.msk [vmem:[#allocation2 + $0x48] sm:$0xff] %vm291, %v286
      %302 = vst.msk [vmem:[#allocation2 + $0x50] sm:$0xff] %vm291, %v287
      %303 = vst.msk [vmem:[#allocation2 + $0x58] sm:$0xff] %vm291, %v288
      %304 = vst.msk [vmem:[#allocation2 + $0x60] sm:$0xff] %vm291, %v289
      %305 = vst.msk [vmem:[#allocation2 + $0x68] sm:$0xff] %vm291, %v290
      %v306 = vld [vmem:[#allocation2] sm:$0xff]
      %v307 = vld [vmem:[#allocation2 + $0x8] sm:$0xff]
      %v308 = vld [vmem:[#allocation2 + $0x10] sm:$0xff]
      %v309 = vld [vmem:[#allocation2 + $0x18] sm:$0xff]
      %v310 = vld [vmem:[#allocation2 + $0x20] sm:$0xff]
      %v311 = vld [vmem:[#allocation2 + $0x28] sm:$0xff]
      %v312 = vld [vmem:[#allocation2 + $0x30] sm:$0xff]
      %v313 = vld [vmem:[#allocation2 + $0x38] sm:$0xff]
      %v314 = vld [vmem:[#allocation2 + $0x40] sm:$0xff]
      %v315 = vld [vmem:[#allocation2 + $0x48] sm:$0xff]
      %v316 = vpack.c.bf16 %v307, %v306
      %v317 = vpack.c.bf16 %v309, %v308
      %v318 = vpack.c.bf16 %v311, %v310
      %v319 = vpack.c.bf16 %v313, %v312
      %v320 = vpack.c.bf16 %v315, %v314
      %v321 = vld [vmem:[%s1] sm:$0xf]
      %v322 = vld [vmem:[#allocation2 + $0x1] sm:$0xff]
      %v323 = vld [vmem:[#allocation2 + $0x9] sm:$0xff]
      %v324 = vld [vmem:[#allocation2 + $0x11] sm:$0xff]
      %v325 = vld [vmem:[#allocation2 + $0x19] sm:$0xff]
      %v326 = vld [vmem:[#allocation2 + $0x21] sm:$0xff]
      %v327 = vld [vmem:[#allocation2 + $0x29] sm:$0xff]
      %v328 = vld [vmem:[#allocation2 + $0x31] sm:$0xff]
      %v329 = vld [vmem:[#allocation2 + $0x39] sm:$0xff]
      %v330 = vld [vmem:[#allocation2 + $0x41] sm:$0xff]
      %v331 = vld [vmem:[#allocation2 + $0x49] sm:$0xff]
      %v332 = vpack.c.bf16 %v323, %v322
      %v333 = vpack.c.bf16 %v325, %v324
      %v334 = vpack.c.bf16 %v327, %v326
      %v335 = vpack.c.bf16 %v329, %v328
      %v336 = vpack.c.bf16 %v331, %v330
      %s337 = scalar_lea.vmem %s1, 4
      %v338 = vld [vmem:[%s337] sm:$0xf]
      %v340 = vsel %vm291, %v332, 0
      %v343 = vsel %vm291, %v333, 0
      %v346 = vsel %vm291, %v334, 0
      %v349 = vsel %vm291, %v335, 0
      %v352 = vsel %vm291, %v336, 0
      %vm354 = vcmask 1043456
      %v356 = vsel %vm354, %v338, 0
      %358 = vmatprep.subr.bf16.mxu0 0
      %359 = vmatpush1.bf16.msra.mxu0 %v356
      %360 = vmatprep.subr.bf16.mxu0 0
      %361 = vmatpush1.bf16.msra.mxu0 0
      %362 = vmatprep.subr.bf16.mxu0 0
      %363 = vmatpush1.bf16.msra.mxu0 0
      %364 = vmatprep.subr.bf16.mxu0 0
      %365 = vmatpush1.bf16.msra.mxu0 0
      %366 = vmatprep.subr.bf16.mxu0 0
      %367 = vmatpush1.bf16.msra.mxu0 0
      %368 = vmatprep.subr.bf16.mxu0 0
      %369 = vmatpush1.bf16.msra.mxu0 0
      %370 = vmatprep.subr.bf16.mxu0 0
      %371 = vmatpush1.bf16.msra.mxu0 0
      %372 = vmatprep.subr.bf16.mxu0 0
      %373 = vmatpush1.bf16.msra.mxu0 0
      %374 = vmatprep.subr.bf16.mxu0 0
      %375 = vmatpush1.bf16.msra.mxu0 0
      %376 = vmatprep.subr.bf16.mxu0 0
      %377 = vmatpush1.bf16.msra.mxu0 0
      %378 = vmatprep.subr.bf16.mxu0 0
      %379 = vmatpush1.bf16.msra.mxu0 0
      %380 = vmatprep.subr.bf16.mxu0 0
      %381 = vmatpush1.bf16.msra.mxu0 0
      %382 = vmatprep.subr.bf16.mxu0 0
      %383 = vmatpush1.bf16.msra.mxu0 0
      %384 = vmatprep.subr.bf16.mxu0 0
      %385 = vmatpush1.bf16.msra.mxu0 0
      %386 = vmatprep.subr.bf16.mxu0 0
      %387 = vmatpush1.bf16.msra.mxu0 0
      %388 = vmatprep.subr.bf16.mxu0 0
      %389 = vmatpush1.bf16.msra.mxu0 0
      %390 = vmatprep.mubr.bf16.mxu0 0
      %391 = vmatmul.mubr.bf16.gmra.mrb[0].mxu0 %v340
      %v392 = vpop.f32.mrb[0].mxu0
      %v393 = vadd.f32 0.0, %v392
      %v394 = vpop.f32.mrb[0].mxu0
      %v395 = vpop.f32.mrb[0].mxu0
      %v396 = vadd.f32 0.0, %v395
      %v397 = vpop.f32.mrb[0].mxu0
      %398 = vmatprep.mubr.bf16.mxu0 0
      %399 = vmatmul.mubr.bf16.gmra.mrb[0].mxu0 %v343
      %v400 = vpop.f32.mrb[0].mxu0
      %v401 = vadd.f32 0.0, %v400
      %v402 = vpop.f32.mrb[0].mxu0
      %v403 = vpop.f32.mrb[0].mxu0
      %v404 = vadd.f32 0.0, %v403
      %v405 = vpop.f32.mrb[0].mxu0
      %406 = vmatprep.mubr.bf16.mxu0 0
      %407 = vmatmul.mubr.bf16.gmra.mrb[0].mxu0 %v346
      %v408 = vpop.f32.mrb[0].mxu0
      %v409 = vadd.f32 0.0, %v408
      %v410 = vpop.f32.mrb[0].mxu0
      %v411 = vpop.f32.mrb[0].mxu0
      %v412 = vadd.f32 0.0, %v411
      %v413 = vpop.f32.mrb[0].mxu0
      %414 = vmatprep.mubr.bf16.mxu0 0
      %415 = vmatmul.mubr.bf16.gmra.mrb[0].mxu0 %v349
      %v416 = vpop.f32.mrb[0].mxu0
      %v417 = vadd.f32 0.0, %v416
      %v418 = vpop.f32.mrb[0].mxu0
      %v419 = vpop.f32.mrb[0].mxu0
      %v420 = vadd.f32 0.0, %v419
      %v421 = vpop.f32.mrb[0].mxu0
      %422 = vmatprep.mubr.bf16.mxu0 0
      %423 = vmatmul.mubr.bf16.gmra.mrb[0].mxu0 %v352
      %v424 = vpop.f32.mrb[0].mxu0
      %v425 = vadd.f32 0.0, %v424
      %v426 = vpop.f32.mrb[0].mxu0
      %v427 = vpop.f32.mrb[0].mxu0
      %v428 = vadd.f32 0.0, %v427
      %v429 = vpop.f32.mrb[0].mxu0
      %430 = vdwg.mxu0
      %v432 = vsel %vm291, %v316, 0
      %v435 = vsel %vm291, %v317, 0
      %v438 = vsel %vm291, %v318, 0
      %v441 = vsel %vm291, %v319, 0
      %v444 = vsel %vm291, %v320, 0
      %v447 = vsel %vm354, %v321, 0
      %449 = vmatprep.subr.bf16.mxu0 0
      %450 = vmatpush1.bf16.msra.mxu0 %v447
      %451 = vmatprep.subr.bf16.mxu0 0
      %452 = vmatpush1.bf16.msra.mxu0 0
      %453 = vmatprep.subr.bf16.mxu0 0
      %454 = vmatpush1.bf16.msra.mxu0 0
      %455 = vmatprep.subr.bf16.mxu0 0
      %456 = vmatpush1.bf16.msra.mxu0 0
      %457 = vmatprep.subr.bf16.mxu0 0
      %458 = vmatpush1.bf16.msra.mxu0 0
      %459 = vmatprep.subr.bf16.mxu0 0
      %460 = vmatpush1.bf16.msra.mxu0 0
      %461 = vmatprep.subr.bf16.mxu0 0
      %462 = vmatpush1.bf16.msra.mxu0 0
      %463 = vmatprep.subr.bf16.mxu0 0
      %464 = vmatpush1.bf16.msra.mxu0 0
      %465 = vmatprep.subr.bf16.mxu0 0
      %466 = vmatpush1.bf16.msra.mxu0 0
      %467 = vmatprep.subr.bf16.mxu0 0
      %468 = vmatpush1.bf16.msra.mxu0 0
      %469 = vmatprep.subr.bf16.mxu0 0
      %470 = vmatpush1.bf16.msra.mxu0 0
      %471 = vmatprep.subr.bf16.mxu0 0
      %472 = vmatpush1.bf16.msra.mxu0 0
      %473 = vmatprep.subr.bf16.mxu0 0
      %474 = vmatpush1.bf16.msra.mxu0 0
      %475 = vmatprep.subr.bf16.mxu0 0
      %476 = vmatpush1.bf16.msra.mxu0 0
      %477 = vmatprep.subr.bf16.mxu0 0
      %478 = vmatpush1.bf16.msra.mxu0 0
      %479 = vmatprep.subr.bf16.mxu0 0
      %480 = vmatpush1.bf16.msra.mxu0 0
      %481 = vmatprep.mubr.bf16.mxu0 0
      %482 = vmatmul.mubr.bf16.gmra.mrb[0].mxu0 %v432
      %v483 = vpop.f32.mrb[0].mxu0
      %v484 = vadd.f32 %v393, %v483
      %v485 = vpop.f32.mrb[0].mxu0
      %v486 = vpop.f32.mrb[0].mxu0
      %v487 = vadd.f32 %v396, %v486
      %v488 = vpop.f32.mrb[0].mxu0
      %489 = vmatprep.mubr.bf16.mxu0 0
      %490 = vmatmul.mubr.bf16.gmra.mrb[0].mxu0 %v435
      %v491 = vpop.f32.mrb[0].mxu0
      %v492 = vadd.f32 %v401, %v491
      %v493 = vpop.f32.mrb[0].mxu0
      %v494 = vpop.f32.mrb[0].mxu0
      %v495 = vadd.f32 %v404, %v494
      %v496 = vpop.f32.mrb[0].mxu0
      %497 = vmatprep.mubr.bf16.mxu0 0
      %498 = vmatmul.mubr.bf16.gmra.mrb[0].mxu0 %v438
      %v499 = vpop.f32.mrb[0].mxu0
      %v500 = vadd.f32 %v409, %v499
      %v501 = vpop.f32.mrb[0].mxu0
      %v502 = vpop.f32.mrb[0].mxu0
      %v503 = vadd.f32 %v412, %v502
      %v504 = vpop.f32.mrb[0].mxu0
      %505 = vmatprep.mubr.bf16.mxu0 0
      %506 = vmatmul.mubr.bf16.gmra.mrb[0].mxu0 %v441
      %v507 = vpop.f32.mrb[0].mxu0
      %v508 = vadd.f32 %v417, %v507
      %v509 = vpop.f32.mrb[0].mxu0
      %v510 = vpop.f32.mrb[0].mxu0
      %v511 = vadd.f32 %v420, %v510
      %v512 = vpop.f32.mrb[0].mxu0
      %513 = vmatprep.mubr.bf16.mxu0 0
      %514 = vmatmul.mubr.bf16.gmra.mrb[0].mxu0 %v444
      %v515 = vpop.f32.mrb[0].mxu0
      %v516 = vadd.f32 %v425, %v515
      %v517 = vpop.f32.mrb[0].mxu0
      %v518 = vpop.f32.mrb[0].mxu0
      %v519 = vadd.f32 %v428, %v518
      %v520 = vpop.f32.mrb[0].mxu0
      %521 = vdwg.mxu0
      %v522 = vld [vmem:[#allocation2 + $0x2] sm:$0xff]
      %v523 = vld [vmem:[#allocation2 + $0xa] sm:$0xff]
      %v524 = vld [vmem:[#allocation2 + $0x12] sm:$0xff]
      %v525 = vld [vmem:[#allocation2 + $0x1a] sm:$0xff]
      %v526 = vld [vmem:[#allocation2 + $0x22] sm:$0xff]
      %v527 = vld [vmem:[#allocation2 + $0x2a] sm:$0xff]
      %v528 = vld [vmem:[#allocation2 + $0x32] sm:$0xff]
      %v529 = vld [vmem:[#allocation2 + $0x3a] sm:$0xff]
      %v530 = vld [vmem:[#allocation2 + $0x42] sm:$0xff]
      %v531 = vld [vmem:[#allocation2 + $0x4a] sm:$0xff]
      %v532 = vpack.c.bf16 %v523, %v522
      %v533 = vpack.c.bf16 %v525, %v524
      %v534 = vpack.c.bf16 %v527, %v526
      %v535 = vpack.c.bf16 %v529, %v528
      %v536 = vpack.c.bf16 %v531, %v530
      %s537 = scalar_lea.vmem %s1, 8
      %v538 = vld [vmem:[%s537] sm:$0xf]
      %v540 = vsel %vm291, %v532, 0
      %v543 = vsel %vm291, %v533, 0
      %v546 = vsel %vm291, %v534, 0
      %v549 = vsel %vm291, %v535, 0
      %v552 = vsel %vm291, %v536, 0
      %v555 = vsel %vm354, %v538, 0
      %557 = vmatprep.subr.bf16.mxu0 0
      %558 = vmatpush1.bf16.msra.mxu0 %v555
      %559 = vmatprep.subr.bf16.mxu0 0
      %560 = vmatpush1.bf16.msra.mxu0 0
      %561 = vmatprep.subr.bf16.mxu0 0
      %562 = vmatpush1.bf16.msra.mxu0 0
      %563 = vmatprep.subr.bf16.mxu0 0
      %564 = vmatpush1.bf16.msra.mxu0 0
      %565 = vmatprep.subr.bf16.mxu0 0
      %566 = vmatpush1.bf16.msra.mxu0 0
      %567 = vmatprep.subr.bf16.mxu0 0
      %568 = vmatpush1.bf16.msra.mxu0 0
      %569 = vmatprep.subr.bf16.mxu0 0
      %570 = vmatpush1.bf16.msra.mxu0 0
      %571 = vmatprep.subr.bf16.mxu0 0
      %572 = vmatpush1.bf16.msra.mxu0 0
      %573 = vmatprep.subr.bf16.mxu0 0
      %574 = vmatpush1.bf16.msra.mxu0 0
      %575 = vmatprep.subr.bf16.mxu0 0
      %576 = vmatpush1.bf16.msra.mxu0 0
      %577 = vmatprep.subr.bf16.mxu0 0
      %578 = vmatpush1.bf16.msra.mxu0 0
      %579 = vmatprep.subr.bf16.mxu0 0
      %580 = vmatpush1.bf16.msra.mxu0 0
      %581 = vmatprep.subr.bf16.mxu0 0
      %582 = vmatpush1.bf16.msra.mxu0 0
      %583 = vmatprep.subr.bf16.mxu0 0
      %584 = vmatpush1.bf16.msra.mxu0 0
      %585 = vmatprep.subr.bf16.mxu0 0
      %586 = vmatpush1.bf16.msra.mxu0 0
      %587 = vmatprep.subr.bf16.mxu0 0
      %588 = vmatpush1.bf16.msra.mxu0 0
      %589 = vmatprep.mubr.bf16.mxu0 0
      %590 = vmatmul.mubr.bf16.gmra.mrb[0].mxu0 %v540
      %v591 = vpop.f32.mrb[0].mxu0
      %v592 = vadd.f32 0.0, %v591
      %v593 = vpop.f32.mrb[0].mxu0
      %v594 = vpop.f32.mrb[0].mxu0
      %v595 = vadd.f32 0.0, %v594
      %v596 = vpop.f32.mrb[0].mxu0
      %597 = vmatprep.mubr.bf16.mxu0 0
      %598 = vmatmul.mubr.bf16.gmra.mrb[0].mxu0 %v543
      %v599 = vpop.f32.mrb[0].mxu0
      %v600 = vadd.f32 0.0, %v599
      %v601 = vpop.f32.mrb[0].mxu0
      %v602 = vpop.f32.mrb[0].mxu0
      %v603 = vadd.f32 0.0, %v602
      %v604 = vpop.f32.mrb[0].mxu0
      %605 = vmatprep.mubr.bf16.mxu0 0
      %606 = vmatmul.mubr.bf16.gmra.mrb[0].mxu0 %v546
      %v607 = vpop.f32.mrb[0].mxu0
      %v608 = vadd.f32 0.0, %v607
      %v609 = vpop.f32.mrb[0].mxu0
      %v610 = vpop.f32.mrb[0].mxu0
      %v611 = vadd.f32 0.0, %v610
      %v612 = vpop.f32.mrb[0].mxu0
      %613 = vmatprep.mubr.bf16.mxu0 0
      %614 = vmatmul.mubr.bf16.gmra.mrb[0].mxu0 %v549
      %v615 = vpop.f32.mrb[0].mxu0
      %v616 = vadd.f32 0.0, %v615
      %v617 = vpop.f32.mrb[0].mxu0
      %v618 = vpop.f32.mrb[0].mxu0
      %v619 = vadd.f32 0.0, %v618
      %v620 = vpop.f32.mrb[0].mxu0
      %621 = vmatprep.mubr.bf16.mxu0 0
      %622 = vmatmul.mubr.bf16.gmra.mrb[0].mxu0 %v552
      %v623 = vpop.f32.mrb[0].mxu0
      %v624 = vadd.f32 0.0, %v623
      %v625 = vpop.f32.mrb[0].mxu0
      %v626 = vpop.f32.mrb[0].mxu0
      %v627 = vadd.f32 0.0, %v626
      %v628 = vpop.f32.mrb[0].mxu0
      %629 = vdwg.mxu0
      %v630 = vadd.f32 %v484, %v592
      %v631 = vadd.f32 %v487, %v595
      %v632 = vadd.f32 %v492, %v600
      %v633 = vadd.f32 %v495, %v603
      %v634 = vadd.f32 %v500, %v608
      %v635 = vadd.f32 %v503, %v611
      %v636 = vadd.f32 %v508, %v616
      %v637 = vadd.f32 %v511, %v619
      %v638 = vadd.f32 %v516, %v624
      %v639 = vadd.f32 %v519, %v627
      %v640 = vld [vmem:[#allocation2 + $0xa] sm:$0xff]
      %v641 = vld [vmem:[#allocation2 + $0x12] sm:$0xff]
      %v642 = vld [vmem:[#allocation2 + $0x1a] sm:$0xff]
      %v643 = vld [vmem:[#allocation2 + $0x22] sm:$0xff]
      %v644 = vld [vmem:[#allocation2 + $0x2a] sm:$0xff]
      %v645 = vld [vmem:[#allocation2 + $0x32] sm:$0xff]
      %v646 = vld [vmem:[#allocation2 + $0x3a] sm:$0xff]
      %v647 = vld [vmem:[#allocation2 + $0x42] sm:$0xff]
      %v648 = vld [vmem:[#allocation2 + $0x4a] sm:$0xff]
      %v649 = vld [vmem:[#allocation2 + $0x52] sm:$0xff]
      %v650 = vpack.c.bf16 %v641, %v640
      %v651 = vpack.c.bf16 %v643, %v642
      %v652 = vpack.c.bf16 %v645, %v644
      %v653 = vpack.c.bf16 %v647, %v646
      %v654 = vpack.c.bf16 %v649, %v648
      %s655 = scalar_lea.vmem %s1, 12
      %v656 = vld [vmem:[%s655] sm:$0xf]
      %v658 = vsel %vm291, %v650, 0
      %v661 = vsel %vm291, %v651, 0
      %v664 = vsel %vm291, %v652, 0
      %v667 = vsel %vm291, %v653, 0
      %v670 = vsel %vm291, %v654, 0
      %v673 = vsel %vm354, %v656, 0
      %675 = vmatprep.subr.bf16.mxu0 0
      %676 = vmatpush1.bf16.msra.mxu0 %v673
      %677 = vmatprep.subr.bf16.mxu0 0
      %678 = vmatpush1.bf16.msra.mxu0 0
      %679 = vmatprep.subr.bf16.mxu0 0
      %680 = vmatpush1.bf16.msra.mxu0 0
      %681 = vmatprep.subr.bf16.mxu0 0
      %682 = vmatpush1.bf16.msra.mxu0 0
      %683 = vmatprep.subr.bf16.mxu0 0
      %684 = vmatpush1.bf16.msra.mxu0 0
      %685 = vmatprep.subr.bf16.mxu0 0
      %686 = vmatpush1.bf16.msra.mxu0 0
      %687 = vmatprep.subr.bf16.mxu0 0
      %688 = vmatpush1.bf16.msra.mxu0 0
      %689 = vmatprep.subr.bf16.mxu0 0
      %690 = vmatpush1.bf16.msra.mxu0 0
      %691 = vmatprep.subr.bf16.mxu0 0
      %692 = vmatpush1.bf16.msra.mxu0 0
      %693 = vmatprep.subr.bf16.mxu0 0
      %694 = vmatpush1.bf16.msra.mxu0 0
      %695 = vmatprep.subr.bf16.mxu0 0
      %696 = vmatpush1.bf16.msra.mxu0 0
      %697 = vmatprep.subr.bf16.mxu0 0
      %698 = vmatpush1.bf16.msra.mxu0 0
      %699 = vmatprep.subr.bf16.mxu0 0
      %700 = vmatpush1.bf16.msra.mxu0 0
      %701 = vmatprep.subr.bf16.mxu0 0
      %702 = vmatpush1.bf16.msra.mxu0 0
      %703 = vmatprep.subr.bf16.mxu0 0
      %704 = vmatpush1.bf16.msra.mxu0 0
      %705 = vmatprep.subr.bf16.mxu0 0
      %706 = vmatpush1.bf16.msra.mxu0 0
      %707 = vmatprep.mubr.bf16.mxu0 0
      %708 = vmatmul.mubr.bf16.gmra.mrb[0].mxu0 %v658
      %v709 = vpop.f32.mrb[0].mxu0
      %v710 = vadd.f32 0.0, %v709
      %v711 = vpop.f32.mrb[0].mxu0
      %v712 = vpop.f32.mrb[0].mxu0
      %v713 = vadd.f32 0.0, %v712
      %v714 = vpop.f32.mrb[0].mxu0
      %715 = vmatprep.mubr.bf16.mxu0 0
      %716 = vmatmul.mubr.bf16.gmra.mrb[0].mxu0 %v661
      %v717 = vpop.f32.mrb[0].mxu0
      %v718 = vadd.f32 0.0, %v717
      %v719 = vpop.f32.mrb[0].mxu0
      %v720 = vpop.f32.mrb[0].mxu0
      %v721 = vadd.f32 0.0, %v720
      %v722 = vpop.f32.mrb[0].mxu0
      %723 = vmatprep.mubr.bf16.mxu0 0
      %724 = vmatmul.mubr.bf16.gmra.mrb[0].mxu0 %v664
      %v725 = vpop.f32.mrb[0].mxu0
      %v726 = vadd.f32 0.0, %v725
      %v727 = vpop.f32.mrb[0].mxu0
      %v728 = vpop.f32.mrb[0].mxu0
      %v729 = vadd.f32 0.0, %v728
      %v730 = vpop.f32.mrb[0].mxu0
      %731 = vmatprep.mubr.bf16.mxu0 0
      %732 = vmatmul.mubr.bf16.gmra.mrb[0].mxu0 %v667
      %v733 = vpop.f32.mrb[0].mxu0
      %v734 = vadd.f32 0.0, %v733
      %v735 = vpop.f32.mrb[0].mxu0
      %v736 = vpop.f32.mrb[0].mxu0
      %v737 = vadd.f32 0.0, %v736
      %v738 = vpop.f32.mrb[0].mxu0
      %739 = vmatprep.mubr.bf16.mxu0 0
      %740 = vmatmul.mubr.bf16.gmra.mrb[0].mxu0 %v670
      %v741 = vpop.f32.mrb[0].mxu0
      %v742 = vadd.f32 0.0, %v741
      %v743 = vpop.f32.mrb[0].mxu0
      %v744 = vpop.f32.mrb[0].mxu0
      %v745 = vadd.f32 0.0, %v744
      %v746 = vpop.f32.mrb[0].mxu0
      %747 = vdwg.mxu0
      %v748 = vadd.f32 %v630, %v710
      %v749 = vadd.f32 %v631, %v713
      %v750 = vadd.f32 %v632, %v718
      %v751 = vadd.f32 %v633, %v721
      %v752 = vadd.f32 %v634, %v726
      %v753 = vadd.f32 %v635, %v729
      %v754 = vadd.f32 %v636, %v734
      %v755 = vadd.f32 %v637, %v737
      %v756 = vadd.f32 %v638, %v742
      %v757 = vadd.f32 %v639, %v745
      %v758 = vld [vmem:[#allocation2 + $0xb] sm:$0xff]
      %v759 = vld [vmem:[#allocation2 + $0x13] sm:$0xff]
      %v760 = vld [vmem:[#allocation2 + $0x1b] sm:$0xff]
      %v761 = vld [vmem:[#allocation2 + $0x23] sm:$0xff]
      %v762 = vld [vmem:[#allocation2 + $0x2b] sm:$0xff]
      %v763 = vld [vmem:[#allocation2 + $0x33] sm:$0xff]
      %v764 = vld [vmem:[#allocation2 + $0x3b] sm:$0xff]
      %v765 = vld [vmem:[#allocation2 + $0x43] sm:$0xff]
      %v766 = vld [vmem:[#allocation2 + $0x4b] sm:$0xff]
      %v767 = vld [vmem:[#allocation2 + $0x53] sm:$0xff]
      %v768 = vpack.c.bf16 %v759, %v758
      %v769 = vpack.c.bf16 %v761, %v760
      %v770 = vpack.c.bf16 %v763, %v762
      %v771 = vpack.c.bf16 %v765, %v764
      %v772 = vpack.c.bf16 %v767, %v766
      %s773 = scalar_lea.vmem %s1, 16
      %v774 = vld [vmem:[%s773] sm:$0xf]
      %v776 = vsel %vm291, %v768, 0
      %v779 = vsel %vm291, %v769, 0
      %v782 = vsel %vm291, %v770, 0
      %v785 = vsel %vm291, %v771, 0
      %v788 = vsel %vm291, %v772, 0
      %v791 = vsel %vm354, %v774, 0
      %793 = vmatprep.subr.bf16.mxu0 0
      %794 = vmatpush1.bf16.msra.mxu0 %v791
      %795 = vmatprep.subr.bf16.mxu0 0
      %796 = vmatpush1.bf16.msra.mxu0 0
      %797 = vmatprep.subr.bf16.mxu0 0
      %798 = vmatpush1.bf16.msra.mxu0 0
      %799 = vmatprep.subr.bf16.mxu0 0
      %800 = vmatpush1.bf16.msra.mxu0 0
      %801 = vmatprep.subr.bf16.mxu0 0
      %802 = vmatpush1.bf16.msra.mxu0 0
      %803 = vmatprep.subr.bf16.mxu0 0
      %804 = vmatpush1.bf16.msra.mxu0 0
      %805 = vmatprep.subr.bf16.mxu0 0
      %806 = vmatpush1.bf16.msra.mxu0 0
      %807 = vmatprep.subr.bf16.mxu0 0
      %808 = vmatpush1.bf16.msra.mxu0 0
      %809 = vmatprep.subr.bf16.mxu0 0
      %810 = vmatpush1.bf16.msra.mxu0 0
      %811 = vmatprep.subr.bf16.mxu0 0
      %812 = vmatpush1.bf16.msra.mxu0 0
      %813 = vmatprep.subr.bf16.mxu0 0
      %814 = vmatpush1.bf16.msra.mxu0 0
      %815 = vmatprep.subr.bf16.mxu0 0
      %816 = vmatpush1.bf16.msra.mxu0 0
      %817 = vmatprep.subr.bf16.mxu0 0
      %818 = vmatpush1.bf16.msra.mxu0 0
      %819 = vmatprep.subr.bf16.mxu0 0
      %820 = vmatpush1.bf16.msra.mxu0 0
      %821 = vmatprep.subr.bf16.mxu0 0
      %822 = vmatpush1.bf16.msra.mxu0 0
      %823 = vmatprep.subr.bf16.mxu0 0
      %824 = vmatpush1.bf16.msra.mxu0 0
      %825 = vmatprep.mubr.bf16.mxu0 0
      %826 = vmatmul.mubr.bf16.gmra.mrb[0].mxu0 %v776
      %v827 = vpop.f32.mrb[0].mxu0
      %v828 = vadd.f32 0.0, %v827
      %v829 = vpop.f32.mrb[0].mxu0
      %v830 = vpop.f32.mrb[0].mxu0
      %v831 = vadd.f32 0.0, %v830
      %v832 = vpop.f32.mrb[0].mxu0
      %833 = vmatprep.mubr.bf16.mxu0 0
      %834 = vmatmul.mubr.bf16.gmra.mrb[0].mxu0 %v779
      %v835 = vpop.f32.mrb[0].mxu0
      %v836 = vadd.f32 0.0, %v835
      %v837 = vpop.f32.mrb[0].mxu0
      %v838 = vpop.f32.mrb[0].mxu0
      %v839 = vadd.f32 0.0, %v838
      %v840 = vpop.f32.mrb[0].mxu0
      %841 = vmatprep.mubr.bf16.mxu0 0
      %842 = vmatmul.mubr.bf16.gmra.mrb[0].mxu0 %v782
      %v843 = vpop.f32.mrb[0].mxu0
      %v844 = vadd.f32 0.0, %v843
      %v845 = vpop.f32.mrb[0].mxu0
      %v846 = vpop.f32.mrb[0].mxu0
      %v847 = vadd.f32 0.0, %v846
      %v848 = vpop.f32.mrb[0].mxu0
      %849 = vmatprep.mubr.bf16.mxu0 0
      %850 = vmatmul.mubr.bf16.gmra.mrb[0].mxu0 %v785
      %v851 = vpop.f32.mrb[0].mxu0
      %v852 = vadd.f32 0.0, %v851
      %v853 = vpop.f32.mrb[0].mxu0
      %v854 = vpop.f32.mrb[0].mxu0
      %v855 = vadd.f32 0.0, %v854
      %v856 = vpop.f32.mrb[0].mxu0
      %857 = vmatprep.mubr.bf16.mxu0 0
      %858 = vmatmul.mubr.bf16.gmra.mrb[0].mxu0 %v788
      %v859 = vpop.f32.mrb[0].mxu0
      %v860 = vadd.f32 0.0, %v859
      %v861 = vpop.f32.mrb[0].mxu0
      %v862 = vpop.f32.mrb[0].mxu0
      %v863 = vadd.f32 0.0, %v862
      %v864 = vpop.f32.mrb[0].mxu0
      %865 = vdwg.mxu0
      %v866 = vadd.f32 %v748, %v828
      %v867 = vadd.f32 %v749, %v831
      %v868 = vadd.f32 %v750, %v836
      %v869 = vadd.f32 %v751, %v839
      %v870 = vadd.f32 %v752, %v844
      %v871 = vadd.f32 %v753, %v847
      %v872 = vadd.f32 %v754, %v852
      %v873 = vadd.f32 %v755, %v855
      %v874 = vadd.f32 %v756, %v860
      %v875 = vadd.f32 %v757, %v863
      %v876 = vld [vmem:[#allocation2 + $0xc] sm:$0xff]
      %v877 = vld [vmem:[#allocation2 + $0x14] sm:$0xff]
      %v878 = vld [vmem:[#allocation2 + $0x1c] sm:$0xff]
      %v879 = vld [vmem:[#allocation2 + $0x24] sm:$0xff]
      %v880 = vld [vmem:[#allocation2 + $0x2c] sm:$0xff]
      %v881 = vld [vmem:[#allocation2 + $0x34] sm:$0xff]
      %v882 = vld [vmem:[#allocation2 + $0x3c] sm:$0xff]
      %v883 = vld [vmem:[#allocation2 + $0x44] sm:$0xff]
      %v884 = vld [vmem:[#allocation2 + $0x4c] sm:$0xff]
      %v885 = vld [vmem:[#allocation2 + $0x54] sm:$0xff]
      %v886 = vpack.c.bf16 %v877, %v876
      %v887 = vpack.c.bf16 %v879, %v878
      %v888 = vpack.c.bf16 %v881, %v880
      %v889 = vpack.c.bf16 %v883, %v882
      %v890 = vpack.c.bf16 %v885, %v884
      %s891 = scalar_lea.vmem %s1, 20
      %v892 = vld [vmem:[%s891] sm:$0xf]
      %v894 = vsel %vm291, %v886, 0
      %v897 = vsel %vm291, %v887, 0
      %v900 = vsel %vm291, %v888, 0
      %v903 = vsel %vm291, %v889, 0
      %v906 = vsel %vm291, %v890, 0
      %v909 = vsel %vm354, %v892, 0
      %911 = vmatprep.subr.bf16.mxu0 0
      %912 = vmatpush1.bf16.msra.mxu0 %v909
      %913 = vmatprep.subr.bf16.mxu0 0
      %914 = vmatpush1.bf16.msra.mxu0 0
      %915 = vmatprep.subr.bf16.mxu0 0
      %916 = vmatpush1.bf16.msra.mxu0 0
      %917 = vmatprep.subr.bf16.mxu0 0
      %918 = vmatpush1.bf16.msra.mxu0 0
      %919 = vmatprep.subr.bf16.mxu0 0
      %920 = vmatpush1.bf16.msra.mxu0 0
      %921 = vmatprep.subr.bf16.mxu0 0
      %922 = vmatpush1.bf16.msra.mxu0 0
      %923 = vmatprep.subr.bf16.mxu0 0
      %924 = vmatpush1.bf16.msra.mxu0 0
      %925 = vmatprep.subr.bf16.mxu0 0
      %926 = vmatpush1.bf16.msra.mxu0 0
      %927 = vmatprep.subr.bf16.mxu0 0
      %928 = vmatpush1.bf16.msra.mxu0 0
      %929 = vmatprep.subr.bf16.mxu0 0
      %930 = vmatpush1.bf16.msra.mxu0 0
      %931 = vmatprep.subr.bf16.mxu0 0
      %932 = vmatpush1.bf16.msra.mxu0 0
      %933 = vmatprep.subr.bf16.mxu0 0
      %934 = vmatpush1.bf16.msra.mxu0 0
      %935 = vmatprep.subr.bf16.mxu0 0
      %936 = vmatpush1.bf16.msra.mxu0 0
      %937 = vmatprep.subr.bf16.mxu0 0
      %938 = vmatpush1.bf16.msra.mxu0 0
      %939 = vmatprep.subr.bf16.mxu0 0
      %940 = vmatpush1.bf16.msra.mxu0 0
      %941 = vmatprep.subr.bf16.mxu0 0
      %942 = vmatpush1.bf16.msra.mxu0 0
      %943 = vmatprep.mubr.bf16.mxu0 0
      %944 = vmatmul.mubr.bf16.gmra.mrb[0].mxu0 %v894
      %v945 = vpop.f32.mrb[0].mxu0
      %v946 = vadd.f32 0.0, %v945
      %v947 = vpop.f32.mrb[0].mxu0
      %v948 = vpop.f32.mrb[0].mxu0
      %v949 = vadd.f32 0.0, %v948
      %v950 = vpop.f32.mrb[0].mxu0
      %951 = vmatprep.mubr.bf16.mxu0 0
      %952 = vmatmul.mubr.bf16.gmra.mrb[0].mxu0 %v897
      %v953 = vpop.f32.mrb[0].mxu0
      %v954 = vadd.f32 0.0, %v953
      %v955 = vpop.f32.mrb[0].mxu0
      %v956 = vpop.f32.mrb[0].mxu0
      %v957 = vadd.f32 0.0, %v956
      %v958 = vpop.f32.mrb[0].mxu0
      %959 = vmatprep.mubr.bf16.mxu0 0
      %960 = vmatmul.mubr.bf16.gmra.mrb[0].mxu0 %v900
      %v961 = vpop.f32.mrb[0].mxu0
      %v962 = vadd.f32 0.0, %v961
      %v963 = vpop.f32.mrb[0].mxu0
      %v964 = vpop.f32.mrb[0].mxu0
      %v965 = vadd.f32 0.0, %v964
      %v966 = vpop.f32.mrb[0].mxu0
      %967 = vmatprep.mubr.bf16.mxu0 0
      %968 = vmatmul.mubr.bf16.gmra.mrb[0].mxu0 %v903
      %v969 = vpop.f32.mrb[0].mxu0
      %v970 = vadd.f32 0.0, %v969
      %v971 = vpop.f32.mrb[0].mxu0
      %v972 = vpop.f32.mrb[0].mxu0
      %v973 = vadd.f32 0.0, %v972
      %v974 = vpop.f32.mrb[0].mxu0
      %975 = vmatprep.mubr.bf16.mxu0 0
      %976 = vmatmul.mubr.bf16.gmra.mrb[0].mxu0 %v906
      %v977 = vpop.f32.mrb[0].mxu0
      %v978 = vadd.f32 0.0, %v977
      %v979 = vpop.f32.mrb[0].mxu0
      %v980 = vpop.f32.mrb[0].mxu0
      %v981 = vadd.f32 0.0, %v980
      %v982 = vpop.f32.mrb[0].mxu0
      %983 = vdwg.mxu0
      %v984 = vadd.f32 %v866, %v946
      %v985 = vadd.f32 %v867, %v949
      %v986 = vadd.f32 %v868, %v954
      %v987 = vadd.f32 %v869, %v957
      %v988 = vadd.f32 %v870, %v962
      %v989 = vadd.f32 %v871, %v965
      %v990 = vadd.f32 %v872, %v970
      %v991 = vadd.f32 %v873, %v973
      %v992 = vadd.f32 %v874, %v978
      %v993 = vadd.f32 %v875, %v981
      %v994 = vld [vmem:[#allocation2 + $0x14] sm:$0xff]
      %v995 = vld [vmem:[#allocation2 + $0x1c] sm:$0xff]
      %v996 = vld [vmem:[#allocation2 + $0x24] sm:$0xff]
      %v997 = vld [vmem:[#allocation2 + $0x2c] sm:$0xff]
      %v998 = vld [vmem:[#allocation2 + $0x34] sm:$0xff]
      %v999 = vld [vmem:[#allocation2 + $0x3c] sm:$0xff]
      %v1000 = vld [vmem:[#allocation2 + $0x44] sm:$0xff]
      %v1001 = vld [vmem:[#allocation2 + $0x4c] sm:$0xff]
      %v1002 = vld [vmem:[#allocation2 + $0x54] sm:$0xff]
      %v1003 = vld [vmem:[#allocation2 + $0x5c] sm:$0xff]
      %v1004 = vpack.c.bf16 %v995, %v994
      %v1005 = vpack.c.bf16 %v997, %v996
      %v1006 = vpack.c.bf16 %v999, %v998
      %v1007 = vpack.c.bf16 %v1001, %v1000
      %v1008 = vpack.c.bf16 %v1003, %v1002
      %s1009 = scalar_lea.vmem %s1, 24
      %v1010 = vld [vmem:[%s1009] sm:$0xf]
      %v1012 = vsel %vm291, %v1004, 0
      %v1015 = vsel %vm291, %v1005, 0
      %v1018 = vsel %vm291, %v1006, 0
      %v1021 = vsel %vm291, %v1007, 0
      %v1024 = vsel %vm291, %v1008, 0
      %v1027 = vsel %vm354, %v1010, 0
      %1029 = vmatprep.subr.bf16.mxu0 0
      %1030 = vmatpush1.bf16.msra.mxu0 %v1027
      %1031 = vmatprep.subr.bf16.mxu0 0
      %1032 = vmatpush1.bf16.msra.mxu0 0
      %1033 = vmatprep.subr.bf16.mxu0 0
      %1034 = vmatpush1.bf16.msra.mxu0 0
      %1035 = vmatprep.subr.bf16.mxu0 0
      %1036 = vmatpush1.bf16.msra.mxu0 0
      %1037 = vmatprep.subr.bf16.mxu0 0
      %1038 = vmatpush1.bf16.msra.mxu0 0
      %1039 = vmatprep.subr.bf16.mxu0 0
      %1040 = vmatpush1.bf16.msra.mxu0 0
      %1041 = vmatprep.subr.bf16.mxu0 0
      %1042 = vmatpush1.bf16.msra.mxu0 0
      %1043 = vmatprep.subr.bf16.mxu0 0
      %1044 = vmatpush1.bf16.msra.mxu0 0
      %1045 = vmatprep.subr.bf16.mxu0 0
      %1046 = vmatpush1.bf16.msra.mxu0 0
      %1047 = vmatprep.subr.bf16.mxu0 0
      %1048 = vmatpush1.bf16.msra.mxu0 0
      %1049 = vmatprep.subr.bf16.mxu0 0
      %1050 = vmatpush1.bf16.msra.mxu0 0
      %1051 = vmatprep.subr.bf16.mxu0 0
      %1052 = vmatpush1.bf16.msra.mxu0 0
      %1053 = vmatprep.subr.bf16.mxu0 0
      %1054 = vmatpush1.bf16.msra.mxu0 0
      %1055 = vmatprep.subr.bf16.mxu0 0
      %1056 = vmatpush1.bf16.msra.mxu0 0
      %1057 = vmatprep.subr.bf16.mxu0 0
      %1058 = vmatpush1.bf16.msra.mxu0 0
      %1059 = vmatprep.subr.bf16.mxu0 0
      %1060 = vmatpush1.bf16.msra.mxu0 0
      %1061 = vmatprep.mubr.bf16.mxu0 0
      %1062 = vmatmul.mubr.bf16.gmra.mrb[0].mxu0 %v1012
      %v1063 = vpop.f32.mrb[0].mxu0
      %v1064 = vadd.f32 0.0, %v1063
      %v1065 = vpop.f32.mrb[0].mxu0
      %v1066 = vpop.f32.mrb[0].mxu0
      %v1067 = vadd.f32 0.0, %v1066
      %v1068 = vpop.f32.mrb[0].mxu0
      %1069 = vmatprep.mubr.bf16.mxu0 0
      %1070 = vmatmul.mubr.bf16.gmra.mrb[0].mxu0 %v1015
      %v1071 = vpop.f32.mrb[0].mxu0
      %v1072 = vadd.f32 0.0, %v1071
      %v1073 = vpop.f32.mrb[0].mxu0
      %v1074 = vpop.f32.mrb[0].mxu0
      %v1075 = vadd.f32 0.0, %v1074
      %v1076 = vpop.f32.mrb[0].mxu0
      %1077 = vmatprep.mubr.bf16.mxu0 0
      %1078 = vmatmul.mubr.bf16.gmra.mrb[0].mxu0 %v1018
      %v1079 = vpop.f32.mrb[0].mxu0
      %v1080 = vadd.f32 0.0, %v1079
      %v1081 = vpop.f32.mrb[0].mxu0
      %v1082 = vpop.f32.mrb[0].mxu0
      %v1083 = vadd.f32 0.0, %v1082
      %v1084 = vpop.f32.mrb[0].mxu0
      %1085 = vmatprep.mubr.bf16.mxu0 0
      %1086 = vmatmul.mubr.bf16.gmra.mrb[0].mxu0 %v1021
      %v1087 = vpop.f32.mrb[0].mxu0
      %v1088 = vadd.f32 0.0, %v1087
      %v1089 = vpop.f32.mrb[0].mxu0
      %v1090 = vpop.f32.mrb[0].mxu0
      %v1091 = vadd.f32 0.0, %v1090
      %v1092 = vpop.f32.mrb[0].mxu0
      %1093 = vmatprep.mubr.bf16.mxu0 0
      %1094 = vmatmul.mubr.bf16.gmra.mrb[0].mxu0 %v1024
      %v1095 = vpop.f32.mrb[0].mxu0
      %v1096 = vadd.f32 0.0, %v1095
      %v1097 = vpop.f32.mrb[0].mxu0
      %v1098 = vpop.f32.mrb[0].mxu0
      %v1099 = vadd.f32 0.0, %v1098
      %v1100 = vpop.f32.mrb[0].mxu0
      %1101 = vdwg.mxu0
      %v1102 = vadd.f32 %v984, %v1064
      %v1103 = vadd.f32 %v985, %v1067
      %v1104 = vadd.f32 %v986, %v1072
      %v1105 = vadd.f32 %v987, %v1075
      %v1106 = vadd.f32 %v988, %v1080
      %v1107 = vadd.f32 %v989, %v1083
      %v1108 = vadd.f32 %v990, %v1088
      %v1109 = vadd.f32 %v991, %v1091
      %v1110 = vadd.f32 %v992, %v1096
      %v1111 = vadd.f32 %v993, %v1099
      %v1112 = vld [vmem:[#allocation2 + $0x15] sm:$0xff]
      %v1113 = vld [vmem:[#allocation2 + $0x1d] sm:$0xff]
      %v1114 = vld [vmem:[#allocation2 + $0x25] sm:$0xff]
      %v1115 = vld [vmem:[#allocation2 + $0x2d] sm:$0xff]
      %v1116 = vld [vmem:[#allocation2 + $0x35] sm:$0xff]
      %v1117 = vld [vmem:[#allocation2 + $0x3d] sm:$0xff]
      %v1118 = vld [vmem:[#allocation2 + $0x45] sm:$0xff]
      %v1119 = vld [vmem:[#allocation2 + $0x4d] sm:$0xff]
      %v1120 = vld [vmem:[#allocation2 + $0x55] sm:$0xff]
      %v1121 = vld [vmem:[#allocation2 + $0x5d] sm:$0xff]
      %v1122 = vpack.c.bf16 %v1113, %v1112
      %v1123 = vpack.c.bf16 %v1115, %v1114
      %v1124 = vpack.c.bf16 %v1117, %v1116
      %v1125 = vpack.c.bf16 %v1119, %v1118
      %v1126 = vpack.c.bf16 %v1121, %v1120
      %s1127 = scalar_lea.vmem %s1, 28
      %v1128 = vld [vmem:[%s1127] sm:$0xf]
      %v1130 = vsel %vm291, %v1122, 0
      %v1133 = vsel %vm291, %v1123, 0
      %v1136 = vsel %vm291, %v1124, 0
      %v1139 = vsel %vm291, %v1125, 0
      %v1142 = vsel %vm291, %v1126, 0
      %v1145 = vsel %vm354, %v1128, 0
      %1147 = vmatprep.subr.bf16.mxu0 0
      %1148 = vmatpush1.bf16.msra.mxu0 %v1145
      %1149 = vmatprep.subr.bf16.mxu0 0
      %1150 = vmatpush1.bf16.msra.mxu0 0
      %1151 = vmatprep.subr.bf16.mxu0 0
      %1152 = vmatpush1.bf16.msra.mxu0 0
      %1153 = vmatprep.subr.bf16.mxu0 0
      %1154 = vmatpush1.bf16.msra.mxu0 0
      %1155 = vmatprep.subr.bf16.mxu0 0
      %1156 = vmatpush1.bf16.msra.mxu0 0
      %1157 = vmatprep.subr.bf16.mxu0 0
      %1158 = vmatpush1.bf16.msra.mxu0 0
      %1159 = vmatprep.subr.bf16.mxu0 0
      %1160 = vmatpush1.bf16.msra.mxu0 0
      %1161 = vmatprep.subr.bf16.mxu0 0
      %1162 = vmatpush1.bf16.msra.mxu0 0
      %1163 = vmatprep.subr.bf16.mxu0 0
      %1164 = vmatpush1.bf16.msra.mxu0 0
      %1165 = vmatprep.subr.bf16.mxu0 0
      %1166 = vmatpush1.bf16.msra.mxu0 0
      %1167 = vmatprep.subr.bf16.mxu0 0
      %1168 = vmatpush1.bf16.msra.mxu0 0
      %1169 = vmatprep.subr.bf16.mxu0 0
      %1170 = vmatpush1.bf16.msra.mxu0 0
      %1171 = vmatprep.subr.bf16.mxu0 0
      %1172 = vmatpush1.bf16.msra.mxu0 0
      %1173 = vmatprep.subr.bf16.mxu0 0
      %1174 = vmatpush1.bf16.msra.mxu0 0
      %1175 = vmatprep.subr.bf16.mxu0 0
      %1176 = vmatpush1.bf16.msra.mxu0 0
      %1177 = vmatprep.subr.bf16.mxu0 0
      %1178 = vmatpush1.bf16.msra.mxu0 0
      %1179 = vmatprep.mubr.bf16.mxu0 0
      %1180 = vmatmul.mubr.bf16.gmra.mrb[0].mxu0 %v1130
      %v1181 = vpop.f32.mrb[0].mxu0
      %v1182 = vadd.f32 0.0, %v1181
      %v1183 = vpop.f32.mrb[0].mxu0
      %v1184 = vpop.f32.mrb[0].mxu0
      %v1185 = vadd.f32 0.0, %v1184
      %v1186 = vpop.f32.mrb[0].mxu0
      %1187 = vmatprep.mubr.bf16.mxu0 0
      %1188 = vmatmul.mubr.bf16.gmra.mrb[0].mxu0 %v1133
      %v1189 = vpop.f32.mrb[0].mxu0
      %v1190 = vadd.f32 0.0, %v1189
      %v1191 = vpop.f32.mrb[0].mxu0
      %v1192 = vpop.f32.mrb[0].mxu0
      %v1193 = vadd.f32 0.0, %v1192
      %v1194 = vpop.f32.mrb[0].mxu0
      %1195 = vmatprep.mubr.bf16.mxu0 0
      %1196 = vmatmul.mubr.bf16.gmra.mrb[0].mxu0 %v1136
      %v1197 = vpop.f32.mrb[0].mxu0
      %v1198 = vadd.f32 0.0, %v1197
      %v1199 = vpop.f32.mrb[0].mxu0
      %v1200 = vpop.f32.mrb[0].mxu0
      %v1201 = vadd.f32 0.0, %v1200
      %v1202 = vpop.f32.mrb[0].mxu0
      %1203 = vmatprep.mubr.bf16.mxu0 0
      %1204 = vmatmul.mubr.bf16.gmra.mrb[0].mxu0 %v1139
      %v1205 = vpop.f32.mrb[0].mxu0
      %v1206 = vadd.f32 0.0, %v1205
      %v1207 = vpop.f32.mrb[0].mxu0
      %v1208 = vpop.f32.mrb[0].mxu0
      %v1209 = vadd.f32 0.0, %v1208
      %v1210 = vpop.f32.mrb[0].mxu0
      %1211 = vmatprep.mubr.bf16.mxu0 0
      %1212 = vmatmul.mubr.bf16.gmra.mrb[0].mxu0 %v1142
      %v1213 = vpop.f32.mrb[0].mxu0
      %v1214 = vadd.f32 0.0, %v1213
      %v1215 = vpop.f32.mrb[0].mxu0
      %v1216 = vpop.f32.mrb[0].mxu0
      %v1217 = vadd.f32 0.0, %v1216
      %v1218 = vpop.f32.mrb[0].mxu0
      %1219 = vdwg.mxu0
      %v1220 = vadd.f32 %v1102, %v1182
      %v1221 = vadd.f32 %v1103, %v1185
      %v1222 = vadd.f32 %v1104, %v1190
      %v1223 = vadd.f32 %v1105, %v1193
      %v1224 = vadd.f32 %v1106, %v1198
      %v1225 = vadd.f32 %v1107, %v1201
      %v1226 = vadd.f32 %v1108, %v1206
      %v1227 = vadd.f32 %v1109, %v1209
      %v1228 = vadd.f32 %v1110, %v1214
      %v1229 = vadd.f32 %v1111, %v1217
      %v1230 = vld [vmem:[#allocation2 + $0x16] sm:$0xff]
      %v1231 = vld [vmem:[#allocation2 + $0x1e] sm:$0xff]
      %v1232 = vld [vmem:[#allocation2 + $0x26] sm:$0xff]
      %v1233 = vld [vmem:[#allocation2 + $0x2e] sm:$0xff]
      %v1234 = vld [vmem:[#allocation2 + $0x36] sm:$0xff]
      %v1235 = vld [vmem:[#allocation2 + $0x3e] sm:$0xff]
      %v1236 = vld [vmem:[#allocation2 + $0x46] sm:$0xff]
      %v1237 = vld [vmem:[#allocation2 + $0x4e] sm:$0xff]
      %v1238 = vld [vmem:[#allocation2 + $0x56] sm:$0xff]
      %v1239 = vld [vmem:[#allocation2 + $0x5e] sm:$0xff]
      %v1240 = vpack.c.bf16 %v1231, %v1230
      %v1241 = vpack.c.bf16 %v1233, %v1232
      %v1242 = vpack.c.bf16 %v1235, %v1234
      %v1243 = vpack.c.bf16 %v1237, %v1236
      %v1244 = vpack.c.bf16 %v1239, %v1238
      %s1245 = scalar_lea.vmem %s1, 32
      %v1246 = vld [vmem:[%s1245] sm:$0xf]
      %v1248 = vsel %vm291, %v1240, 0
      %v1251 = vsel %vm291, %v1241, 0
      %v1254 = vsel %vm291, %v1242, 0
      %v1257 = vsel %vm291, %v1243, 0
      %v1260 = vsel %vm291, %v1244, 0
      %v1263 = vsel %vm354, %v1246, 0
      %1265 = vmatprep.subr.bf16.mxu0 0
      %1266 = vmatpush1.bf16.msra.mxu0 %v1263
      %1267 = vmatprep.subr.bf16.mxu0 0
      %1268 = vmatpush1.bf16.msra.mxu0 0
      %1269 = vmatprep.subr.bf16.mxu0 0
      %1270 = vmatpush1.bf16.msra.mxu0 0
      %1271 = vmatprep.subr.bf16.mxu0 0
      %1272 = vmatpush1.bf16.msra.mxu0 0
      %1273 = vmatprep.subr.bf16.mxu0 0
      %1274 = vmatpush1.bf16.msra.mxu0 0
      %1275 = vmatprep.subr.bf16.mxu0 0
      %1276 = vmatpush1.bf16.msra.mxu0 0
      %1277 = vmatprep.subr.bf16.mxu0 0
      %1278 = vmatpush1.bf16.msra.mxu0 0
      %1279 = vmatprep.subr.bf16.mxu0 0
      %1280 = vmatpush1.bf16.msra.mxu0 0
      %1281 = vmatprep.subr.bf16.mxu0 0
      %1282 = vmatpush1.bf16.msra.mxu0 0
      %1283 = vmatprep.subr.bf16.mxu0 0
      %1284 = vmatpush1.bf16.msra.mxu0 0
      %1285 = vmatprep.subr.bf16.mxu0 0
      %1286 = vmatpush1.bf16.msra.mxu0 0
      %1287 = vmatprep.subr.bf16.mxu0 0
      %1288 = vmatpush1.bf16.msra.mxu0 0
      %1289 = vmatprep.subr.bf16.mxu0 0
      %1290 = vmatpush1.bf16.msra.mxu0 0
      %1291 = vmatprep.subr.bf16.mxu0 0
      %1292 = vmatpush1.bf16.msra.mxu0 0
      %1293 = vmatprep.subr.bf16.mxu0 0
      %1294 = vmatpush1.bf16.msra.mxu0 0
      %1295 = vmatprep.subr.bf16.mxu0 0
      %1296 = vmatpush1.bf16.msra.mxu0 0
      %1297 = vmatprep.mubr.bf16.mxu0 0
      %1298 = vmatmul.mubr.bf16.gmra.mrb[0].mxu0 %v1248
      %v1299 = vpop.f32.mrb[0].mxu0
      %v1300 = vadd.f32 0.0, %v1299
      %v1301 = vpop.f32.mrb[0].mxu0
      %v1302 = vpop.f32.mrb[0].mxu0
      %v1303 = vadd.f32 0.0, %v1302
      %v1304 = vpop.f32.mrb[0].mxu0
      %1305 = vmatprep.mubr.bf16.mxu0 0
      %1306 = vmatmul.mubr.bf16.gmra.mrb[0].mxu0 %v1251
      %v1307 = vpop.f32.mrb[0].mxu0
      %v1308 = vadd.f32 0.0, %v1307
      %v1309 = vpop.f32.mrb[0].mxu0
      %v1310 = vpop.f32.mrb[0].mxu0
      %v1311 = vadd.f32 0.0, %v1310
      %v1312 = vpop.f32.mrb[0].mxu0
      %1313 = vmatprep.mubr.bf16.mxu0 0
      %1314 = vmatmul.mubr.bf16.gmra.mrb[0].mxu0 %v1254
      %v1315 = vpop.f32.mrb[0].mxu0
      %v1316 = vadd.f32 0.0, %v1315
      %v1317 = vpop.f32.mrb[0].mxu0
      %v1318 = vpop.f32.mrb[0].mxu0
      %v1319 = vadd.f32 0.0, %v1318
      %v1320 = vpop.f32.mrb[0].mxu0
      %1321 = vmatprep.mubr.bf16.mxu0 0
      %1322 = vmatmul.mubr.bf16.gmra.mrb[0].mxu0 %v1257
      %v1323 = vpop.f32.mrb[0].mxu0
      %v1324 = vadd.f32 0.0, %v1323
      %v1325 = vpop.f32.mrb[0].mxu0
      %v1326 = vpop.f32.mrb[0].mxu0
      %v1327 = vadd.f32 0.0, %v1326
      %v1328 = vpop.f32.mrb[0].mxu0
      %1329 = vmatprep.mubr.bf16.mxu0 0
      %1330 = vmatmul.mubr.bf16.gmra.mrb[0].mxu0 %v1260
      %v1331 = vpop.f32.mrb[0].mxu0
      %v1332 = vadd.f32 0.0, %v1331
      %v1333 = vpop.f32.mrb[0].mxu0
      %v1334 = vpop.f32.mrb[0].mxu0
      %v1335 = vadd.f32 0.0, %v1334
      %v1336 = vpop.f32.mrb[0].mxu0
      %1337 = vdwg.mxu0
      %v1338 = vadd.f32 %v1220, %v1300
      %v1339 = vadd.f32 %v1221, %v1303
      %v1340 = vadd.f32 %v1222, %v1308
      %v1341 = vadd.f32 %v1223, %v1311
      %v1342 = vadd.f32 %v1224, %v1316
      %v1343 = vadd.f32 %v1225, %v1319
      %v1344 = vadd.f32 %v1226, %v1324
      %v1345 = vadd.f32 %v1227, %v1327
      %v1346 = vadd.f32 %v1228, %v1332
      %v1347 = vadd.f32 %v1229, %v1335
      %v1348 = vld [vmem:[%s2] sm:$0x1]
      %v1350 = vlaneseq
      %v1351 = vshrl.u32 %v1350, 7
      %v1352 = vsub.s32 0, %v1351
      %v1353 = vrot.slane %v1348, %v1352
      %v1355 = vadd.f32 %v1338, %v1353
      %v1356 = vadd.f32 %v1339, %v1353
      %v1357 = vadd.f32 %v1340, %v1353
      %v1358 = vadd.f32 %v1341, %v1353
      %v1359 = vadd.f32 %v1342, %v1353
      %v1360 = vadd.f32 %v1343, %v1353
      %v1361 = vadd.f32 %v1344, %v1353
      %v1362 = vadd.f32 %v1345, %v1353
      %v1363 = vadd.f32 %v1346, %v1353
      %v1364 = vadd.f32 %v1347, %v1353
      %v1365 = vld [vmem:[%s245] sm:$0xf]
      %v1366 = vld [vmem:[%s245 + $0x4] sm:$0xf]
      %v1367 = vld [vmem:[%s245 + $0x8] sm:$0xf]
      %v1368 = vld [vmem:[%s245 + $0xc] sm:$0xf]
      %v1369 = vld [vmem:[%s245 + $0x10] sm:$0xf]
      %v1370 = vld [vmem:[%s245 + $0x14] sm:$0xf]
      %v1371 = vld [vmem:[%s245 + $0x18] sm:$0xf]
      %v1372 = vld [vmem:[%s245 + $0x1c] sm:$0xf]
      %v1373 = vld [vmem:[%s245 + $0x20] sm:$0xf]
      %v1374 = vld [vmem:[%s245 + $0x24] sm:$0xf]
      %v1375 = vunpack.c.l.bf16 %v1365
      %v1376 = vunpack.c.l.bf16 %v1366
      %v1377 = vunpack.c.l.bf16 %v1367
      %v1378 = vunpack.c.l.bf16 %v1368
      %v1379 = vunpack.c.l.bf16 %v1369
      %v1380 = vunpack.c.l.bf16 %v1370
      %v1381 = vunpack.c.l.bf16 %v1371
      %v1382 = vunpack.c.l.bf16 %v1372
      %v1383 = vunpack.c.l.bf16 %v1373
      %v1384 = vunpack.c.l.bf16 %v1374
      %v1385 = vadd.f32 %v1355, %v1375
      %v1386 = vadd.f32 %v1356, %v1376
      %v1387 = vadd.f32 %v1357, %v1377
      %v1388 = vadd.f32 %v1358, %v1378
      %v1389 = vadd.f32 %v1359, %v1379
      %v1390 = vadd.f32 %v1360, %v1380
      %v1391 = vadd.f32 %v1361, %v1381
      %v1392 = vadd.f32 %v1362, %v1382
      %v1393 = vadd.f32 %v1363, %v1383
      %v1394 = vadd.f32 %v1364, %v1384
      %v1395 = vmax.f32 %v1385, 0.0
      %v1396 = vmax.f32 %v1386, 0.0
      %v1397 = vmax.f32 %v1387, 0.0
      %v1398 = vmax.f32 %v1388, 0.0
      %v1399 = vmax.f32 %v1389, 0.0
      %v1400 = vmax.f32 %v1390, 0.0
      %v1401 = vmax.f32 %v1391, 0.0
      %v1402 = vmax.f32 %v1392, 0.0
      %v1403 = vmax.f32 %v1393, 0.0
      %v1404 = vmax.f32 %v1394, 0.0
      %v1405 = vpack.c.bf16 %v1396, %v1395
      %v1406 = vpack.c.bf16 %v1398, %v1397
      %v1407 = vpack.c.bf16 %v1400, %v1399
      %v1408 = vpack.c.bf16 %v1402, %v1401
      %v1409 = vpack.c.bf16 %v1404, %v1403
      %v1415 = vunpack.c.l.b16 %v1405
      %v1416 = vunpack.c.h.b16 %v1405
      %v1417 = vunpack.c.l.b16 %v1406
      %v1418 = vunpack.c.h.b16 %v1406
      %v1419 = vunpack.c.l.b16 %v1407
      %v1420 = vunpack.c.h.b16 %v1407
      %v1421 = vunpack.c.l.b16 %v1408
      %v1422 = vunpack.c.h.b16 %v1408
      %v1423 = vunpack.c.l.b16 %v1409
      %v1424 = vunpack.c.h.b16 %v1409
      %v1425 = vpack.c.b16 %v1415, %v1415
      %v1426 = vpack.c.b16 %v1416, %v1416
      %v1427 = vpack.c.b16 %v1417, %v1417
      %v1428 = vpack.c.b16 %v1418, %v1418
      %v1429 = vpack.c.b16 %v1419, %v1419
      %v1430 = vpack.c.b16 %v1420, %v1420
      %v1431 = vpack.c.b16 %v1421, %v1421
      %v1432 = vpack.c.b16 %v1422, %v1422
      %v1433 = vpack.c.b16 %v1423, %v1423
      %v1434 = vpack.c.b16 %v1424, %v1424
      %1445 = vst [vmem:[%s255] sm:$0xf] %v1425
      %1446 = vst [vmem:[%s255 + $0x4] sm:$0xf] %v1426
      %1447 = vst [vmem:[%s255 + $0x8] sm:$0xf] %v1427
      %1448 = vst [vmem:[%s255 + $0xc] sm:$0xf] %v1428
      %1449 = vst [vmem:[%s255 + $0x10] sm:$0xf] %v1429
      %1450 = vst [vmem:[%s255 + $0x14] sm:$0xf] %v1430
      %1451 = vst [vmem:[%s255 + $0x18] sm:$0xf] %v1431
      %1452 = vst [vmem:[%s255 + $0x1c] sm:$0xf] %v1432
      %1453 = vst [vmem:[%s255 + $0x20] sm:$0xf] %v1433
      %1454 = vst [vmem:[%s255 + $0x24] sm:$0xf] %v1434
      %s1455 = smul.u32 10, %s20
      %p1456 = scmp.lt.s32.totalorder %s19, 1
      %s1457 = scalar_select %p1456, %s19, 1
      %p1458 = scmp.lt.s32.totalorder %s1455, 9
      %s1459 = scalar_select %p1458, %s1455, 9
      %s1460 = smul.addr %s1457, 10
      %s1461 = sadd.s32 %s1459, %s1460
      %s1462 = smul.addr %s1461, 4
      %s1463 = scalar_lea.vmem %s4, %s1462
      // Predicated region
      $region37: #{_lambda_.7} parent=35 // pred_check
        %p1464 = pneg %p143
      $region38: #{_lambda_.7} parent=35 // pred_check_branch
        %1466 = sbr.rel (%p1464) target = $region40
      $region39: #{_lambda_.7} parent=35 // pred_region
        %s1467 = smul.u32 10, %s20
      $region40: #{_lambda_.7} parent=35 // pred_fallthru
        _
    $region36: #{_lambda_.7} parent=5 // pred_fallthru
      _
    %p1468 = scmp.le.s32.totalorder 2, %s10
    // Predicated region
    $region41: #{_lambda_.7} parent=5 // pred_check
      %p1469 = pneg %p1468
    $region42: #{_lambda_.7} parent=5 // pred_check_branch
      %1471 = sbr.rel (%p1469) target = $region44
    $region43: #{_lambda_.7} parent=5 // pred_region
      %s1472 = ssub.s32 %s10, 2
      // Predicated region
      $region45: #{_lambda_.7} parent=43 // pred_check
        %p1473 = pneg %p149
      $region46: #{_lambda_.7} parent=43 // pred_check_branch
        %1475 = sbr.rel (%p1473) target = $region48
      $region47: #{_lambda_.7} parent=43 // pred_region
        %s1476 = smul.u32 10, %s22
        %p1477 = scmp.lt.s32.totalorder %s21, 1
        %s1478 = scalar_select %p1477, %s21, 1
        %p1479 = scmp.lt.s32.totalorder %s1476, 9
        %s1480 = scalar_select %p1479, %s1476, 9
        %s1481 = smul.addr %s1478, 10
        %s1482 = sadd.s32 %s1480, %s1481
        %s1483 = smul.addr %s1482, 4
        %s1484 = scalar_lea.vmem %s4, %s1483
      $region48: #{_lambda_.7} parent=43 // pred_fallthru
        _
    $region44: #{_lambda_.7} parent=5 // pred_fallthru
      _
  $region6: #{_lambda_.7} parent=0 // loop_footer
    %s14 = sadd.s32 1, %s10
  $region7: #{_lambda_.7} parent=0 // loop_footer_branch
    %9 = sbr.rel target = $region3
  $region8: #{_lambda_.7} parent=0 // loop_exit
    _

// kernel: _lambda_.8
$region0: #{_lambda_.8}
  #allocation0 [shape = 'u32[]', space=smem, size = 0x4, offset = 0x4, fixed_abs, tag = 'smem constant byte address 0x4 - core index']
  #allocation1 [shape = 'u32[144,128]{1,0:T(1,128)}', space=vmem, size = 0x12000, scoped, tag = 'internal scratch']
  #allocation2 [shape = 'f32[112,8]{1,0:T(8,128)}', space=vmem, size = 0xe000, scoped, tag = 'scratch operand']
  %s0 = inlined_call_operand.vmem [shape: bf16[2,112,8], index: 0, kind: input, shape index: {}]
  %s1 = inlined_call_operand.vmem [shape: bf16[9,8,128], index: 1, kind: input, shape index: {}]
  %s2 = inlined_call_operand.vmem [shape: f32[1,128], index: 2, kind: input, shape index: {}]
  %s3 = inlined_call_operand.vmem [shape: bf16[2,80,128], index: 3, kind: output, shape index: {}]
  %s4 = sld [smem:[#allocation0]]
  $region45: #{_lambda_.8} parent=0
    _
  %s6 = ssub.s32 1, %s4
  %s7 = scalar_select 0, %s6, %s4
  loop: start=0, step=1, limit=4
  $region2: #{_lambda_.8} parent=0 // loop_pre_header
    _
  $region3: #{_lambda_.8} parent=0 // loop_header
    %s9 = sphi 0, %s13
    %p10 = scmp.ge.s32.totalorder %s9, 4
    %s16 = sphi 0, %s28
    %s17 = sphi 0, %s24
    %s18 = sphi 0, %s16
    %s19 = sphi 0, %s17
    %s20 = sphi 0, %s18
    %s21 = sphi 0, %s19
    %s31 = sphi 0, %s33
    %s34 = sphi 0, %s31
    %s35 = sphi 0, %s34
    %s51 = sphi 0, %s35
    %s55 = sphi 0, %s55
    %s57 = sphi 0, %s55
    %s58 = sphi 0, %s57
    %s72 = sphi 0, %s58
    %s76 = sphi 0, %s76
    %s78 = sphi 0, %s76
    %s79 = sphi 0, %s78
    %s93 = sphi 0, %s79
    %s101 = sphi 0, %s103
    %s104 = sphi 0, %s101
    %s105 = sphi 0, %s104
    %s121 = sphi 0, %s105
  $region4: #{_lambda_.8} parent=0 // loop_header_branch
    %12 = sbr.rel (%p10) target = $region8
  $region5: #{_lambda_.8} parent=0 // loop_body
    %s14 = ssub.s32 %s9, 1
    %s15 = ssub.s32 %s9, 2
    %s22 = sadd.s32 1, %s17
    %p23 = scmp.ge.s32.totalorder %s22, 1
    %s24 = scalar_select %p23, 0, %s22
    %s25 = sadd.s32 1, %s16
    %s26 = scalar_select %p23, %s25, %s16
    %p27 = scmp.ge.s32.totalorder %s26, 2
    %s28 = scalar_select %p27, 0, %s26
    %s29 = ssub.s32 %s16, %s28
    %p30 = scmp.eq.s32.totalorder %s29, 0
    %s32 = sadd.s32 %s31, 1
    %s33 = scalar_select %p30, %s31, %s32
    %p36 = pneg %p30
    %p37 = scmp.eq.s32.totalorder %s9, 1
    %p38 = por %p36, %p37
    %p39 = scmp.ne.s32.totalorder %s31, %s34
    %p40 = scmp.eq.s32.totalorder %s9, 0
    %p41 = por %p39, %p40
    %p42 = scmp.ne.s32.totalorder %s31, %s34
    %p43 = scmp.eq.s32.totalorder %s14, 1
    %p44 = por %p42, %p43
    %p45 = scmp.ne.s32.totalorder %s34, %s35
    %p46 = scmp.eq.s32.totalorder %s14, 0
    %p47 = por %p45, %p46
    %p48 = scmp.ne.s32.totalorder %s34, %s35
    %p49 = scmp.eq.s32.totalorder %s15, 1
    %p50 = por %p48, %p49
    %p52 = scmp.ne.s32.totalorder %s35, %s51
    %p53 = scmp.eq.s32.totalorder %s15, 0
    %p54 = por %p52, %p53
    %s56 = sadd.s32 %s55, 1
    %p59 = scmp.eq.s32.totalorder %s9, 1
    %p60 = scmp.ne.s32.totalorder %s55, %s57
    %p61 = scmp.eq.s32.totalorder %s9, 0
    %p62 = por %p60, %p61
    %p63 = scmp.ne.s32.totalorder %s55, %s57
    %p64 = scmp.eq.s32.totalorder %s14, 1
    %p65 = por %p63, %p64
    %p66 = scmp.ne.s32.totalorder %s57, %s58
    %p67 = scmp.eq.s32.totalorder %s14, 0
    %p68 = por %p66, %p67
    %p69 = scmp.ne.s32.totalorder %s57, %s58
    %p70 = scmp.eq.s32.totalorder %s15, 1
    %p71 = por %p69, %p70
    %p73 = scmp.ne.s32.totalorder %s58, %s72
    %p74 = scmp.eq.s32.totalorder %s15, 0
    %p75 = por %p73, %p74
    %s77 = sadd.s32 %s76, 1
    %p80 = scmp.eq.s32.totalorder %s9, 1
    %p81 = scmp.ne.s32.totalorder %s76, %s78
    %p82 = scmp.eq.s32.totalorder %s9, 0
    %p83 = por %p81, %p82
    %p84 = scmp.ne.s32.totalorder %s76, %s78
    %p85 = scmp.eq.s32.totalorder %s14, 1
    %p86 = por %p84, %p85
    %p87 = scmp.ne.s32.totalorder %s78, %s79
    %p88 = scmp.eq.s32.totalorder %s14, 0
    %p89 = por %p87, %p88
    %p90 = scmp.ne.s32.totalorder %s78, %s79
    %p91 = scmp.eq.s32.totalorder %s15, 1
    %p92 = por %p90, %p91
    %p94 = scmp.ne.s32.totalorder %s79, %s93
    %p95 = scmp.eq.s32.totalorder %s15, 0
    %p96 = por %p94, %p95
    %s97 = ssub.s32 %s16, %s28
    %s98 = ssub.s32 %s17, %s24
    %s99 = sor.u32 %s97, %s98
    %p100 = scmp.eq.s32.totalorder %s99, 0
    %s102 = sadd.s32 %s101, 1
    %s103 = scalar_select %p100, %s101, %s102
    %p106 = pneg %p100
    %p107 = scmp.eq.s32.totalorder %s9, 1
    %p108 = por %p106, %p107
    %p109 = scmp.ne.s32.totalorder %s101, %s104
    %p110 = scmp.eq.s32.totalorder %s9, 0
    %p111 = por %p109, %p110
    %p112 = scmp.ne.s32.totalorder %s101, %s104
    %p113 = scmp.eq.s32.totalorder %s14, 1
    %p114 = por %p112, %p113
    %p115 = scmp.ne.s32.totalorder %s104, %s105
    %p116 = scmp.eq.s32.totalorder %s14, 0
    %p117 = por %p115, %p116
    %p118 = scmp.ne.s32.totalorder %s104, %s105
    %p119 = scmp.eq.s32.totalorder %s15, 1
    %p120 = por %p118, %p119
    %p122 = scmp.ne.s32.totalorder %s105, %s121
    %p123 = scmp.eq.s32.totalorder %s15, 0
    %p124 = por %p122, %p123
    %p125 = scmp.le.s32.totalorder 1, %s9
    %p126 = scmp.lt.s32.totalorder %s9, 3
    %p127 = pnand %p125, %p126
    %p128 = pneg %p127
    // Predicated region
    $region9: #{_lambda_.8} parent=5 // pred_check
      _
    $region10: #{_lambda_.8} parent=5 // pred_check_branch
      %130 = sbr.rel (%p127) target = $region12
    $region11: #{_lambda_.8} parent=5 // pred_region
      %s131 = ssub.s32 %s9, 1
      // Predicated region
      $region13: #{_lambda_.8} parent=11 // pred_check
        %p132 = pneg %p68
      $region14: #{_lambda_.8} parent=11 // pred_check_branch
        %134 = sbr.rel (%p132) target = $region16
      $region15: #{_lambda_.8} parent=11 // pred_region
        _
      $region16: #{_lambda_.8} parent=11 // pred_fallthru
        _
      // Predicated region
      $region17: #{_lambda_.8} parent=11 // pred_check
        %p135 = pneg %p89
      $region18: #{_lambda_.8} parent=11 // pred_check_branch
        %137 = sbr.rel (%p135) target = $region20
      $region19: #{_lambda_.8} parent=11 // pred_region
        _
      $region20: #{_lambda_.8} parent=11 // pred_fallthru
        _
    $region12: #{_lambda_.8} parent=5 // pred_fallthru
      _
    %p138 = scmp.lt.s32.totalorder %s9, 2
    // Predicated region
    $region21: #{_lambda_.8} parent=5 // pred_check
      %p139 = pneg %p138
    $region22: #{_lambda_.8} parent=5 // pred_check_branch
      %141 = sbr.rel (%p139) target = $region24
    $region23: #{_lambda_.8} parent=5 // pred_region
      // Predicated region
      $region25: #{_lambda_.8} parent=23 // pred_check
        %p142 = pneg %p41
      $region26: #{_lambda_.8} parent=23 // pred_check_branch
        %144 = sbr.rel (%p142) target = $region28
      $region27: #{_lambda_.8} parent=23 // pred_region
        %p145 = scmp.lt.s32.totalorder %s16, 1
        %s146 = scalar_select %p145, %s16, 1
        %s147 = smul.addr %s146, 14
        %s148 = smul.addr %s147, 4
        %s149 = scalar_lea.vmem %s0, %s148
      $region28: #{_lambda_.8} parent=23 // pred_fallthru
        _
    $region24: #{_lambda_.8} parent=5 // pred_fallthru
      _
    %p150 = scmp.le.s32.totalorder 1, %s9
    %p151 = scmp.lt.s32.totalorder %s9, 3
    %p152 = pnand %p150, %p151
    %p153 = pneg %p152
    // Predicated region
    $region29: #{_lambda_.8} parent=5 // pred_check
      _
    $region30: #{_lambda_.8} parent=5 // pred_check_branch
      %155 = sbr.rel (%p152) target = $region32
    $region31: #{_lambda_.8} parent=5 // pred_region
      %s156 = ssub.s32 %s9, 1
      %p157 = scmp.lt.s32.totalorder %s18, 1
      %s158 = scalar_select %p157, %s18, 1
      %s159 = smul.addr %s158, 14
      %s160 = smul.addr %s159, 4
      %s161 = scalar_lea.vmem %s0, %s160
      %p162 = pneg %p47
      %p163 = pneg %p44
      %p164 = pneg %p68
      %p165 = pneg %p65
      %p166 = pneg %p89
      %p167 = pneg %p86
      %p168 = pneg %p117
      %p169 = pneg %p114
      %s170 = smul.u32 10, %s19
      %p171 = scmp.lt.s32.totalorder %s18, 1
      %s172 = scalar_select %p171, %s18, 1
      %p173 = scmp.lt.s32.totalorder %s170, 9
      %s174 = scalar_select %p173, %s170, 9
      %s175 = smul.addr %s172, 10
      %s176 = sadd.s32 %s174, %s175
      %s177 = smul.addr %s176, 4
      %s178 = scalar_lea.vmem %s3, %s177
      %p179 = scmp.lt.s32.totalorder %s18, 1
      %s180 = scalar_select %p179, %s18, 1
      %s181 = smul.addr %s180, 14
      %s182 = smul.addr %s181, 4
      %s183 = scalar_lea.vmem %s0, %s182
      %s184 = smul.u32 10, %s19
      %p185 = scmp.lt.s32.totalorder %s18, 1
      %s186 = scalar_select %p185, %s18, 1
      %p187 = scmp.lt.s32.totalorder %s184, 9
      %s188 = scalar_select %p187, %s184, 9
      %s189 = smul.addr %s186, 10
      %s190 = sadd.s32 %s188, %s189
      %s191 = smul.addr %s190, 4
      %s192 = scalar_lea.vmem %s3, %s191
      %s193 = smul.u32 10, %s19
      %s195 = smul.u32 %s19, 80
      %s196 = sshra.s32 %s195, 3
      %s197 = sand.u32 %s195, 7
      %s198 = smul.addr %s196, 4
      %s199 = scalar_lea.vmem %s183, %s198
      %v200 = vld [vmem:[%s199] sm:$0xf]
      %v201 = vld [vmem:[%s199 + $0x4] sm:$0xf]
      %v202 = vld [vmem:[%s199 + $0x8] sm:$0xf]
      %v203 = vld [vmem:[%s199 + $0xc] sm:$0xf]
      %v204 = vld [vmem:[%s199 + $0x10] sm:$0xf]
      %v205 = vld [vmem:[%s199 + $0x14] sm:$0xf]
      %v206 = vld [vmem:[%s199 + $0x18] sm:$0xf]
      %v207 = vld [vmem:[%s199 + $0x1c] sm:$0xf]
      %v208 = vld [vmem:[%s199 + $0x20] sm:$0xf]
      %v209 = vld [vmem:[%s199 + $0x24] sm:$0xf]
      %v210 = vld [vmem:[%s199 + $0x28] sm:$0xf]
      %v211 = vld [vmem:[%s199 + $0x2c] sm:$0xf]
      %v212 = vld [vmem:[%s199 + $0x30] sm:$0xf]
      %v213 = vld [vmem:[%s199 + $0x34] sm:$0xf]
      %v214 = vunpack.c.l.bf16 %v200
      %v215 = vunpack.c.l.bf16 %v201
      %v216 = vunpack.c.l.bf16 %v202
      %v217 = vunpack.c.l.bf16 %v203
      %v218 = vunpack.c.l.bf16 %v204
      %v219 = vunpack.c.l.bf16 %v205
      %v220 = vunpack.c.l.bf16 %v206
      %v221 = vunpack.c.l.bf16 %v207
      %v222 = vunpack.c.l.bf16 %v208
      %v223 = vunpack.c.l.bf16 %v209
      %v224 = vunpack.c.l.bf16 %v210
      %v225 = vunpack.c.l.bf16 %v211
      %v226 = vunpack.c.l.bf16 %v212
      %v227 = vunpack.c.l.bf16 %v213
      %vm228 = vcmask 64512
      %229 = vst.msk [vmem:[#allocation2] sm:$0xff] %vm228, %v214
      %230 = vst.msk [vmem:[#allocation2 + $0x8] sm:$0xff] %vm228, %v215
      %231 = vst.msk [vmem:[#allocation2 + $0x10] sm:$0xff] %vm228, %v216
      %232 = vst.msk [vmem:[#allocation2 + $0x18] sm:$0xff] %vm228, %v217
      %233 = vst.msk [vmem:[#allocation2 + $0x20] sm:$0xff] %vm228, %v218
      %234 = vst.msk [vmem:[#allocation2 + $0x28] sm:$0xff] %vm228, %v219
      %235 = vst.msk [vmem:[#allocation2 + $0x30] sm:$0xff] %vm228, %v220
      %236 = vst.msk [vmem:[#allocation2 + $0x38] sm:$0xff] %vm228, %v221
      %237 = vst.msk [vmem:[#allocation2 + $0x40] sm:$0xff] %vm228, %v222
      %238 = vst.msk [vmem:[#allocation2 + $0x48] sm:$0xff] %vm228, %v223
      %239 = vst.msk [vmem:[#allocation2 + $0x50] sm:$0xff] %vm228, %v224
      %240 = vst.msk [vmem:[#allocation2 + $0x58] sm:$0xff] %vm228, %v225
      %241 = vst.msk [vmem:[#allocation2 + $0x60] sm:$0xff] %vm228, %v226
      %242 = vst.msk [vmem:[#allocation2 + $0x68] sm:$0xff] %vm228, %v227
      %v243 = vld [vmem:[#allocation2] sm:$0xff]
      %v244 = vld [vmem:[#allocation2 + $0x8] sm:$0xff]
      %v245 = vld [vmem:[#allocation2 + $0x10] sm:$0xff]
      %v246 = vld [vmem:[#allocation2 + $0x18] sm:$0xff]
      %v247 = vld [vmem:[#allocation2 + $0x20] sm:$0xff]
      %v248 = vld [vmem:[#allocation2 + $0x28] sm:$0xff]
      %v249 = vld [vmem:[#allocation2 + $0x30] sm:$0xff]
      %v250 = vld [vmem:[#allocation2 + $0x38] sm:$0xff]
      %v251 = vld [vmem:[#allocation2 + $0x40] sm:$0xff]
      %v252 = vld [vmem:[#allocation2 + $0x48] sm:$0xff]
      %v253 = vpack.c.bf16 %v244, %v243
      %v254 = vpack.c.bf16 %v246, %v245
      %v255 = vpack.c.bf16 %v248, %v247
      %v256 = vpack.c.bf16 %v250, %v249
      %v257 = vpack.c.bf16 %v252, %v251
      %v258 = vld [vmem:[%s1] sm:$0xf]
      %v259 = vld [vmem:[#allocation2 + $0x1] sm:$0xff]
      %v260 = vld [vmem:[#allocation2 + $0x9] sm:$0xff]
      %v261 = vld [vmem:[#allocation2 + $0x11] sm:$0xff]
      %v262 = vld [vmem:[#allocation2 + $0x19] sm:$0xff]
      %v263 = vld [vmem:[#allocation2 + $0x21] sm:$0xff]
      %v264 = vld [vmem:[#allocation2 + $0x29] sm:$0xff]
      %v265 = vld [vmem:[#allocation2 + $0x31] sm:$0xff]
      %v266 = vld [vmem:[#allocation2 + $0x39] sm:$0xff]
      %v267 = vld [vmem:[#allocation2 + $0x41] sm:$0xff]
      %v268 = vld [vmem:[#allocation2 + $0x49] sm:$0xff]
      %v269 = vpack.c.bf16 %v260, %v259
      %v270 = vpack.c.bf16 %v262, %v261
      %v271 = vpack.c.bf16 %v264, %v263
      %v272 = vpack.c.bf16 %v266, %v265
      %v273 = vpack.c.bf16 %v268, %v267
      %s274 = scalar_lea.vmem %s1, 4
      %v275 = vld [vmem:[%s274] sm:$0xf]
      %v277 = vsel %vm228, %v269, 0
      %v280 = vsel %vm228, %v270, 0
      %v283 = vsel %vm228, %v271, 0
      %v286 = vsel %vm228, %v272, 0
      %v289 = vsel %vm228, %v273, 0
      %vm291 = vcmask 1043456
      %v293 = vsel %vm291, %v275, 0
      %295 = vmatprep.subr.bf16.mxu0 0
      %296 = vmatpush1.bf16.msra.mxu0 %v293
      %297 = vmatprep.subr.bf16.mxu0 0
      %298 = vmatpush1.bf16.msra.mxu0 0
      %299 = vmatprep.subr.bf16.mxu0 0
      %300 = vmatpush1.bf16.msra.mxu0 0
      %301 = vmatprep.subr.bf16.mxu0 0
      %302 = vmatpush1.bf16.msra.mxu0 0
      %303 = vmatprep.subr.bf16.mxu0 0
      %304 = vmatpush1.bf16.msra.mxu0 0
      %305 = vmatprep.subr.bf16.mxu0 0
      %306 = vmatpush1.bf16.msra.mxu0 0
      %307 = vmatprep.subr.bf16.mxu0 0
      %308 = vmatpush1.bf16.msra.mxu0 0
      %309 = vmatprep.subr.bf16.mxu0 0
      %310 = vmatpush1.bf16.msra.mxu0 0
      %311 = vmatprep.subr.bf16.mxu0 0
      %312 = vmatpush1.bf16.msra.mxu0 0
      %313 = vmatprep.subr.bf16.mxu0 0
      %314 = vmatpush1.bf16.msra.mxu0 0
      %315 = vmatprep.subr.bf16.mxu0 0
      %316 = vmatpush1.bf16.msra.mxu0 0
      %317 = vmatprep.subr.bf16.mxu0 0
      %318 = vmatpush1.bf16.msra.mxu0 0
      %319 = vmatprep.subr.bf16.mxu0 0
      %320 = vmatpush1.bf16.msra.mxu0 0
      %321 = vmatprep.subr.bf16.mxu0 0
      %322 = vmatpush1.bf16.msra.mxu0 0
      %323 = vmatprep.subr.bf16.mxu0 0
      %324 = vmatpush1.bf16.msra.mxu0 0
      %325 = vmatprep.subr.bf16.mxu0 0
      %326 = vmatpush1.bf16.msra.mxu0 0
      %327 = vmatprep.mubr.bf16.mxu0 0
      %328 = vmatmul.mubr.bf16.gmra.mrb[0].mxu0 %v277
      %v329 = vpop.f32.mrb[0].mxu0
      %v330 = vadd.f32 0.0, %v329
      %v331 = vpop.f32.mrb[0].mxu0
      %v332 = vpop.f32.mrb[0].mxu0
      %v333 = vadd.f32 0.0, %v332
      %v334 = vpop.f32.mrb[0].mxu0
      %335 = vmatprep.mubr.bf16.mxu0 0
      %336 = vmatmul.mubr.bf16.gmra.mrb[0].mxu0 %v280
      %v337 = vpop.f32.mrb[0].mxu0
      %v338 = vadd.f32 0.0, %v337
      %v339 = vpop.f32.mrb[0].mxu0
      %v340 = vpop.f32.mrb[0].mxu0
      %v341 = vadd.f32 0.0, %v340
      %v342 = vpop.f32.mrb[0].mxu0
      %343 = vmatprep.mubr.bf16.mxu0 0
      %344 = vmatmul.mubr.bf16.gmra.mrb[0].mxu0 %v283
      %v345 = vpop.f32.mrb[0].mxu0
      %v346 = vadd.f32 0.0, %v345
      %v347 = vpop.f32.mrb[0].mxu0
      %v348 = vpop.f32.mrb[0].mxu0
      %v349 = vadd.f32 0.0, %v348
      %v350 = vpop.f32.mrb[0].mxu0
      %351 = vmatprep.mubr.bf16.mxu0 0
      %352 = vmatmul.mubr.bf16.gmra.mrb[0].mxu0 %v286
      %v353 = vpop.f32.mrb[0].mxu0
      %v354 = vadd.f32 0.0, %v353
      %v355 = vpop.f32.mrb[0].mxu0
      %v356 = vpop.f32.mrb[0].mxu0
      %v357 = vadd.f32 0.0, %v356
      %v358 = vpop.f32.mrb[0].mxu0
      %359 = vmatprep.mubr.bf16.mxu0 0
      %360 = vmatmul.mubr.bf16.gmra.mrb[0].mxu0 %v289
      %v361 = vpop.f32.mrb[0].mxu0
      %v362 = vadd.f32 0.0, %v361
      %v363 = vpop.f32.mrb[0].mxu0
      %v364 = vpop.f32.mrb[0].mxu0
      %v365 = vadd.f32 0.0, %v364
      %v366 = vpop.f32.mrb[0].mxu0
      %367 = vdwg.mxu0
      %v369 = vsel %vm228, %v253, 0
      %v372 = vsel %vm228, %v254, 0
      %v375 = vsel %vm228, %v255, 0
      %v378 = vsel %vm228, %v256, 0
      %v381 = vsel %vm228, %v257, 0
      %v384 = vsel %vm291, %v258, 0
      %386 = vmatprep.subr.bf16.mxu0 0
      %387 = vmatpush1.bf16.msra.mxu0 %v384
      %388 = vmatprep.subr.bf16.mxu0 0
      %389 = vmatpush1.bf16.msra.mxu0 0
      %390 = vmatprep.subr.bf16.mxu0 0
      %391 = vmatpush1.bf16.msra.mxu0 0
      %392 = vmatprep.subr.bf16.mxu0 0
      %393 = vmatpush1.bf16.msra.mxu0 0
      %394 = vmatprep.subr.bf16.mxu0 0
      %395 = vmatpush1.bf16.msra.mxu0 0
      %396 = vmatprep.subr.bf16.mxu0 0
      %397 = vmatpush1.bf16.msra.mxu0 0
      %398 = vmatprep.subr.bf16.mxu0 0
      %399 = vmatpush1.bf16.msra.mxu0 0
      %400 = vmatprep.subr.bf16.mxu0 0
      %401 = vmatpush1.bf16.msra.mxu0 0
      %402 = vmatprep.subr.bf16.mxu0 0
      %403 = vmatpush1.bf16.msra.mxu0 0
      %404 = vmatprep.subr.bf16.mxu0 0
      %405 = vmatpush1.bf16.msra.mxu0 0
      %406 = vmatprep.subr.bf16.mxu0 0
      %407 = vmatpush1.bf16.msra.mxu0 0
      %408 = vmatprep.subr.bf16.mxu0 0
      %409 = vmatpush1.bf16.msra.mxu0 0
      %410 = vmatprep.subr.bf16.mxu0 0
      %411 = vmatpush1.bf16.msra.mxu0 0
      %412 = vmatprep.subr.bf16.mxu0 0
      %413 = vmatpush1.bf16.msra.mxu0 0
      %414 = vmatprep.subr.bf16.mxu0 0
      %415 = vmatpush1.bf16.msra.mxu0 0
      %416 = vmatprep.subr.bf16.mxu0 0
      %417 = vmatpush1.bf16.msra.mxu0 0
      %418 = vmatprep.mubr.bf16.mxu0 0
      %419 = vmatmul.mubr.bf16.gmra.mrb[0].mxu0 %v369
      %v420 = vpop.f32.mrb[0].mxu0
      %v421 = vadd.f32 %v330, %v420
      %v422 = vpop.f32.mrb[0].mxu0
      %v423 = vpop.f32.mrb[0].mxu0
      %v424 = vadd.f32 %v333, %v423
      %v425 = vpop.f32.mrb[0].mxu0
      %426 = vmatprep.mubr.bf16.mxu0 0
      %427 = vmatmul.mubr.bf16.gmra.mrb[0].mxu0 %v372
      %v428 = vpop.f32.mrb[0].mxu0
      %v429 = vadd.f32 %v338, %v428
      %v430 = vpop.f32.mrb[0].mxu0
      %v431 = vpop.f32.mrb[0].mxu0
      %v432 = vadd.f32 %v341, %v431
      %v433 = vpop.f32.mrb[0].mxu0
      %434 = vmatprep.mubr.bf16.mxu0 0
      %435 = vmatmul.mubr.bf16.gmra.mrb[0].mxu0 %v375
      %v436 = vpop.f32.mrb[0].mxu0
      %v437 = vadd.f32 %v346, %v436
      %v438 = vpop.f32.mrb[0].mxu0
      %v439 = vpop.f32.mrb[0].mxu0
      %v440 = vadd.f32 %v349, %v439
      %v441 = vpop.f32.mrb[0].mxu0
      %442 = vmatprep.mubr.bf16.mxu0 0
      %443 = vmatmul.mubr.bf16.gmra.mrb[0].mxu0 %v378
      %v444 = vpop.f32.mrb[0].mxu0
      %v445 = vadd.f32 %v354, %v444
      %v446 = vpop.f32.mrb[0].mxu0
      %v447 = vpop.f32.mrb[0].mxu0
      %v448 = vadd.f32 %v357, %v447
      %v449 = vpop.f32.mrb[0].mxu0
      %450 = vmatprep.mubr.bf16.mxu0 0
      %451 = vmatmul.mubr.bf16.gmra.mrb[0].mxu0 %v381
      %v452 = vpop.f32.mrb[0].mxu0
      %v453 = vadd.f32 %v362, %v452
      %v454 = vpop.f32.mrb[0].mxu0
      %v455 = vpop.f32.mrb[0].mxu0
      %v456 = vadd.f32 %v365, %v455
      %v457 = vpop.f32.mrb[0].mxu0
      %458 = vdwg.mxu0
      %v459 = vld [vmem:[#allocation2 + $0x2] sm:$0xff]
      %v460 = vld [vmem:[#allocation2 + $0xa] sm:$0xff]
      %v461 = vld [vmem:[#allocation2 + $0x12] sm:$0xff]
      %v462 = vld [vmem:[#allocation2 + $0x1a] sm:$0xff]
      %v463 = vld [vmem:[#allocation2 + $0x22] sm:$0xff]
      %v464 = vld [vmem:[#allocation2 + $0x2a] sm:$0xff]
      %v465 = vld [vmem:[#allocation2 + $0x32] sm:$0xff]
      %v466 = vld [vmem:[#allocation2 + $0x3a] sm:$0xff]
      %v467 = vld [vmem:[#allocation2 + $0x42] sm:$0xff]
      %v468 = vld [vmem:[#allocation2 + $0x4a] sm:$0xff]
      %v469 = vpack.c.bf16 %v460, %v459
      %v470 = vpack.c.bf16 %v462, %v461
      %v471 = vpack.c.bf16 %v464, %v463
      %v472 = vpack.c.bf16 %v466, %v465
      %v473 = vpack.c.bf16 %v468, %v467
      %s474 = scalar_lea.vmem %s1, 8
      %v475 = vld [vmem:[%s474] sm:$0xf]
      %v477 = vsel %vm228, %v469, 0
      %v480 = vsel %vm228, %v470, 0
      %v483 = vsel %vm228, %v471, 0
      %v486 = vsel %vm228, %v472, 0
      %v489 = vsel %vm228, %v473, 0
      %v492 = vsel %vm291, %v475, 0
      %494 = vmatprep.subr.bf16.mxu0 0
      %495 = vmatpush1.bf16.msra.mxu0 %v492
      %496 = vmatprep.subr.bf16.mxu0 0
      %497 = vmatpush1.bf16.msra.mxu0 0
      %498 = vmatprep.subr.bf16.mxu0 0
      %499 = vmatpush1.bf16.msra.mxu0 0
      %500 = vmatprep.subr.bf16.mxu0 0
      %501 = vmatpush1.bf16.msra.mxu0 0
      %502 = vmatprep.subr.bf16.mxu0 0
      %503 = vmatpush1.bf16.msra.mxu0 0
      %504 = vmatprep.subr.bf16.mxu0 0
      %505 = vmatpush1.bf16.msra.mxu0 0
      %506 = vmatprep.subr.bf16.mxu0 0
      %507 = vmatpush1.bf16.msra.mxu0 0
      %508 = vmatprep.subr.bf16.mxu0 0
      %509 = vmatpush1.bf16.msra.mxu0 0
      %510 = vmatprep.subr.bf16.mxu0 0
      %511 = vmatpush1.bf16.msra.mxu0 0
      %512 = vmatprep.subr.bf16.mxu0 0
      %513 = vmatpush1.bf16.msra.mxu0 0
      %514 = vmatprep.subr.bf16.mxu0 0
      %515 = vmatpush1.bf16.msra.mxu0 0
      %516 = vmatprep.subr.bf16.mxu0 0
      %517 = vmatpush1.bf16.msra.mxu0 0
      %518 = vmatprep.subr.bf16.mxu0 0
      %519 = vmatpush1.bf16.msra.mxu0 0
      %520 = vmatprep.subr.bf16.mxu0 0
      %521 = vmatpush1.bf16.msra.mxu0 0
      %522 = vmatprep.subr.bf16.mxu0 0
      %523 = vmatpush1.bf16.msra.mxu0 0
      %524 = vmatprep.subr.bf16.mxu0 0
      %525 = vmatpush1.bf16.msra.mxu0 0
      %526 = vmatprep.mubr.bf16.mxu0 0
      %527 = vmatmul.mubr.bf16.gmra.mrb[0].mxu0 %v477
      %v528 = vpop.f32.mrb[0].mxu0
      %v529 = vadd.f32 0.0, %v528
      %v530 = vpop.f32.mrb[0].mxu0
      %v531 = vpop.f32.mrb[0].mxu0
      %v532 = vadd.f32 0.0, %v531
      %v533 = vpop.f32.mrb[0].mxu0
      %534 = vmatprep.mubr.bf16.mxu0 0
      %535 = vmatmul.mubr.bf16.gmra.mrb[0].mxu0 %v480
      %v536 = vpop.f32.mrb[0].mxu0
      %v537 = vadd.f32 0.0, %v536
      %v538 = vpop.f32.mrb[0].mxu0
      %v539 = vpop.f32.mrb[0].mxu0
      %v540 = vadd.f32 0.0, %v539
      %v541 = vpop.f32.mrb[0].mxu0
      %542 = vmatprep.mubr.bf16.mxu0 0
      %543 = vmatmul.mubr.bf16.gmra.mrb[0].mxu0 %v483
      %v544 = vpop.f32.mrb[0].mxu0
      %v545 = vadd.f32 0.0, %v544
      %v546 = vpop.f32.mrb[0].mxu0
      %v547 = vpop.f32.mrb[0].mxu0
      %v548 = vadd.f32 0.0, %v547
      %v549 = vpop.f32.mrb[0].mxu0
      %550 = vmatprep.mubr.bf16.mxu0 0
      %551 = vmatmul.mubr.bf16.gmra.mrb[0].mxu0 %v486
      %v552 = vpop.f32.mrb[0].mxu0
      %v553 = vadd.f32 0.0, %v552
      %v554 = vpop.f32.mrb[0].mxu0
      %v555 = vpop.f32.mrb[0].mxu0
      %v556 = vadd.f32 0.0, %v555
      %v557 = vpop.f32.mrb[0].mxu0
      %558 = vmatprep.mubr.bf16.mxu0 0
      %559 = vmatmul.mubr.bf16.gmra.mrb[0].mxu0 %v489
      %v560 = vpop.f32.mrb[0].mxu0
      %v561 = vadd.f32 0.0, %v560
      %v562 = vpop.f32.mrb[0].mxu0
      %v563 = vpop.f32.mrb[0].mxu0
      %v564 = vadd.f32 0.0, %v563
      %v565 = vpop.f32.mrb[0].mxu0
      %566 = vdwg.mxu0
      %v567 = vadd.f32 %v421, %v529
      %v568 = vadd.f32 %v424, %v532
      %v569 = vadd.f32 %v429, %v537
      %v570 = vadd.f32 %v432, %v540
      %v571 = vadd.f32 %v437, %v545
      %v572 = vadd.f32 %v440, %v548
      %v573 = vadd.f32 %v445, %v553
      %v574 = vadd.f32 %v448, %v556
      %v575 = vadd.f32 %v453, %v561
      %v576 = vadd.f32 %v456, %v564
      %v577 = vld [vmem:[#allocation2 + $0xa] sm:$0xff]
      %v578 = vld [vmem:[#allocation2 + $0x12] sm:$0xff]
      %v579 = vld [vmem:[#allocation2 + $0x1a] sm:$0xff]
      %v580 = vld [vmem:[#allocation2 + $0x22] sm:$0xff]
      %v581 = vld [vmem:[#allocation2 + $0x2a] sm:$0xff]
      %v582 = vld [vmem:[#allocation2 + $0x32] sm:$0xff]
      %v583 = vld [vmem:[#allocation2 + $0x3a] sm:$0xff]
      %v584 = vld [vmem:[#allocation2 + $0x42] sm:$0xff]
      %v585 = vld [vmem:[#allocation2 + $0x4a] sm:$0xff]
      %v586 = vld [vmem:[#allocation2 + $0x52] sm:$0xff]
      %v587 = vpack.c.bf16 %v578, %v577
      %v588 = vpack.c.bf16 %v580, %v579
      %v589 = vpack.c.bf16 %v582, %v581
      %v590 = vpack.c.bf16 %v584, %v583
      %v591 = vpack.c.bf16 %v586, %v585
      %s592 = scalar_lea.vmem %s1, 12
      %v593 = vld [vmem:[%s592] sm:$0xf]
      %v595 = vsel %vm228, %v587, 0
      %v598 = vsel %vm228, %v588, 0
      %v601 = vsel %vm228, %v589, 0
      %v604 = vsel %vm228, %v590, 0
      %v607 = vsel %vm228, %v591, 0
      %v610 = vsel %vm291, %v593, 0
      %612 = vmatprep.subr.bf16.mxu0 0
      %613 = vmatpush1.bf16.msra.mxu0 %v610
      %614 = vmatprep.subr.bf16.mxu0 0
      %615 = vmatpush1.bf16.msra.mxu0 0
      %616 = vmatprep.subr.bf16.mxu0 0
      %617 = vmatpush1.bf16.msra.mxu0 0
      %618 = vmatprep.subr.bf16.mxu0 0
      %619 = vmatpush1.bf16.msra.mxu0 0
      %620 = vmatprep.subr.bf16.mxu0 0
      %621 = vmatpush1.bf16.msra.mxu0 0
      %622 = vmatprep.subr.bf16.mxu0 0
      %623 = vmatpush1.bf16.msra.mxu0 0
      %624 = vmatprep.subr.bf16.mxu0 0
      %625 = vmatpush1.bf16.msra.mxu0 0
      %626 = vmatprep.subr.bf16.mxu0 0
      %627 = vmatpush1.bf16.msra.mxu0 0
      %628 = vmatprep.subr.bf16.mxu0 0
      %629 = vmatpush1.bf16.msra.mxu0 0
      %630 = vmatprep.subr.bf16.mxu0 0
      %631 = vmatpush1.bf16.msra.mxu0 0
      %632 = vmatprep.subr.bf16.mxu0 0
      %633 = vmatpush1.bf16.msra.mxu0 0
      %634 = vmatprep.subr.bf16.mxu0 0
      %635 = vmatpush1.bf16.msra.mxu0 0
      %636 = vmatprep.subr.bf16.mxu0 0
      %637 = vmatpush1.bf16.msra.mxu0 0
      %638 = vmatprep.subr.bf16.mxu0 0
      %639 = vmatpush1.bf16.msra.mxu0 0
      %640 = vmatprep.subr.bf16.mxu0 0
      %641 = vmatpush1.bf16.msra.mxu0 0
      %642 = vmatprep.subr.bf16.mxu0 0
      %643 = vmatpush1.bf16.msra.mxu0 0
      %644 = vmatprep.mubr.bf16.mxu0 0
      %645 = vmatmul.mubr.bf16.gmra.mrb[0].mxu0 %v595
      %v646 = vpop.f32.mrb[0].mxu0
      %v647 = vadd.f32 0.0, %v646
      %v648 = vpop.f32.mrb[0].mxu0
      %v649 = vpop.f32.mrb[0].mxu0
      %v650 = vadd.f32 0.0, %v649
      %v651 = vpop.f32.mrb[0].mxu0
      %652 = vmatprep.mubr.bf16.mxu0 0
      %653 = vmatmul.mubr.bf16.gmra.mrb[0].mxu0 %v598
      %v654 = vpop.f32.mrb[0].mxu0
      %v655 = vadd.f32 0.0, %v654
      %v656 = vpop.f32.mrb[0].mxu0
      %v657 = vpop.f32.mrb[0].mxu0
      %v658 = vadd.f32 0.0, %v657
      %v659 = vpop.f32.mrb[0].mxu0
      %660 = vmatprep.mubr.bf16.mxu0 0
      %661 = vmatmul.mubr.bf16.gmra.mrb[0].mxu0 %v601
      %v662 = vpop.f32.mrb[0].mxu0
      %v663 = vadd.f32 0.0, %v662
      %v664 = vpop.f32.mrb[0].mxu0
      %v665 = vpop.f32.mrb[0].mxu0
      %v666 = vadd.f32 0.0, %v665
      %v667 = vpop.f32.mrb[0].mxu0
      %668 = vmatprep.mubr.bf16.mxu0 0
      %669 = vmatmul.mubr.bf16.gmra.mrb[0].mxu0 %v604
      %v670 = vpop.f32.mrb[0].mxu0
      %v671 = vadd.f32 0.0, %v670
      %v672 = vpop.f32.mrb[0].mxu0
      %v673 = vpop.f32.mrb[0].mxu0
      %v674 = vadd.f32 0.0, %v673
      %v675 = vpop.f32.mrb[0].mxu0
      %676 = vmatprep.mubr.bf16.mxu0 0
      %677 = vmatmul.mubr.bf16.gmra.mrb[0].mxu0 %v607
      %v678 = vpop.f32.mrb[0].mxu0
      %v679 = vadd.f32 0.0, %v678
      %v680 = vpop.f32.mrb[0].mxu0
      %v681 = vpop.f32.mrb[0].mxu0
      %v682 = vadd.f32 0.0, %v681
      %v683 = vpop.f32.mrb[0].mxu0
      %684 = vdwg.mxu0
      %v685 = vadd.f32 %v567, %v647
      %v686 = vadd.f32 %v568, %v650
      %v687 = vadd.f32 %v569, %v655
      %v688 = vadd.f32 %v570, %v658
      %v689 = vadd.f32 %v571, %v663
      %v690 = vadd.f32 %v572, %v666
      %v691 = vadd.f32 %v573, %v671
      %v692 = vadd.f32 %v574, %v674
      %v693 = vadd.f32 %v575, %v679
      %v694 = vadd.f32 %v576, %v682
      %v695 = vld [vmem:[#allocation2 + $0xb] sm:$0xff]
      %v696 = vld [vmem:[#allocation2 + $0x13] sm:$0xff]
      %v697 = vld [vmem:[#allocation2 + $0x1b] sm:$0xff]
      %v698 = vld [vmem:[#allocation2 + $0x23] sm:$0xff]
      %v699 = vld [vmem:[#allocation2 + $0x2b] sm:$0xff]
      %v700 = vld [vmem:[#allocation2 + $0x33] sm:$0xff]
      %v701 = vld [vmem:[#allocation2 + $0x3b] sm:$0xff]
      %v702 = vld [vmem:[#allocation2 + $0x43] sm:$0xff]
      %v703 = vld [vmem:[#allocation2 + $0x4b] sm:$0xff]
      %v704 = vld [vmem:[#allocation2 + $0x53] sm:$0xff]
      %v705 = vpack.c.bf16 %v696, %v695
      %v706 = vpack.c.bf16 %v698, %v697
      %v707 = vpack.c.bf16 %v700, %v699
      %v708 = vpack.c.bf16 %v702, %v701
      %v709 = vpack.c.bf16 %v704, %v703
      %s710 = scalar_lea.vmem %s1, 16
      %v711 = vld [vmem:[%s710] sm:$0xf]
      %v713 = vsel %vm228, %v705, 0
      %v716 = vsel %vm228, %v706, 0
      %v719 = vsel %vm228, %v707, 0
      %v722 = vsel %vm228, %v708, 0
      %v725 = vsel %vm228, %v709, 0
      %v728 = vsel %vm291, %v711, 0
      %730 = vmatprep.subr.bf16.mxu0 0
      %731 = vmatpush1.bf16.msra.mxu0 %v728
      %732 = vmatprep.subr.bf16.mxu0 0
      %733 = vmatpush1.bf16.msra.mxu0 0
      %734 = vmatprep.subr.bf16.mxu0 0
      %735 = vmatpush1.bf16.msra.mxu0 0
      %736 = vmatprep.subr.bf16.mxu0 0
      %737 = vmatpush1.bf16.msra.mxu0 0
      %738 = vmatprep.subr.bf16.mxu0 0
      %739 = vmatpush1.bf16.msra.mxu0 0
      %740 = vmatprep.subr.bf16.mxu0 0
      %741 = vmatpush1.bf16.msra.mxu0 0
      %742 = vmatprep.subr.bf16.mxu0 0
      %743 = vmatpush1.bf16.msra.mxu0 0
      %744 = vmatprep.subr.bf16.mxu0 0
      %745 = vmatpush1.bf16.msra.mxu0 0
      %746 = vmatprep.subr.bf16.mxu0 0
      %747 = vmatpush1.bf16.msra.mxu0 0
      %748 = vmatprep.subr.bf16.mxu0 0
      %749 = vmatpush1.bf16.msra.mxu0 0
      %750 = vmatprep.subr.bf16.mxu0 0
      %751 = vmatpush1.bf16.msra.mxu0 0
      %752 = vmatprep.subr.bf16.mxu0 0
      %753 = vmatpush1.bf16.msra.mxu0 0
      %754 = vmatprep.subr.bf16.mxu0 0
      %755 = vmatpush1.bf16.msra.mxu0 0
      %756 = vmatprep.subr.bf16.mxu0 0
      %757 = vmatpush1.bf16.msra.mxu0 0
      %758 = vmatprep.subr.bf16.mxu0 0
      %759 = vmatpush1.bf16.msra.mxu0 0
      %760 = vmatprep.subr.bf16.mxu0 0
      %761 = vmatpush1.bf16.msra.mxu0 0
      %762 = vmatprep.mubr.bf16.mxu0 0
      %763 = vmatmul.mubr.bf16.gmra.mrb[0].mxu0 %v713
      %v764 = vpop.f32.mrb[0].mxu0
      %v765 = vadd.f32 0.0, %v764
      %v766 = vpop.f32.mrb[0].mxu0
      %v767 = vpop.f32.mrb[0].mxu0
      %v768 = vadd.f32 0.0, %v767
      %v769 = vpop.f32.mrb[0].mxu0
      %770 = vmatprep.mubr.bf16.mxu0 0
      %771 = vmatmul.mubr.bf16.gmra.mrb[0].mxu0 %v716
      %v772 = vpop.f32.mrb[0].mxu0
      %v773 = vadd.f32 0.0, %v772
      %v774 = vpop.f32.mrb[0].mxu0
      %v775 = vpop.f32.mrb[0].mxu0
      %v776 = vadd.f32 0.0, %v775
      %v777 = vpop.f32.mrb[0].mxu0
      %778 = vmatprep.mubr.bf16.mxu0 0
      %779 = vmatmul.mubr.bf16.gmra.mrb[0].mxu0 %v719
      %v780 = vpop.f32.mrb[0].mxu0
      %v781 = vadd.f32 0.0, %v780
      %v782 = vpop.f32.mrb[0].mxu0
      %v783 = vpop.f32.mrb[0].mxu0
      %v784 = vadd.f32 0.0, %v783
      %v785 = vpop.f32.mrb[0].mxu0
      %786 = vmatprep.mubr.bf16.mxu0 0
      %787 = vmatmul.mubr.bf16.gmra.mrb[0].mxu0 %v722
      %v788 = vpop.f32.mrb[0].mxu0
      %v789 = vadd.f32 0.0, %v788
      %v790 = vpop.f32.mrb[0].mxu0
      %v791 = vpop.f32.mrb[0].mxu0
      %v792 = vadd.f32 0.0, %v791
      %v793 = vpop.f32.mrb[0].mxu0
      %794 = vmatprep.mubr.bf16.mxu0 0
      %795 = vmatmul.mubr.bf16.gmra.mrb[0].mxu0 %v725
      %v796 = vpop.f32.mrb[0].mxu0
      %v797 = vadd.f32 0.0, %v796
      %v798 = vpop.f32.mrb[0].mxu0
      %v799 = vpop.f32.mrb[0].mxu0
      %v800 = vadd.f32 0.0, %v799
      %v801 = vpop.f32.mrb[0].mxu0
      %802 = vdwg.mxu0
      %v803 = vadd.f32 %v685, %v765
      %v804 = vadd.f32 %v686, %v768
      %v805 = vadd.f32 %v687, %v773
      %v806 = vadd.f32 %v688, %v776
      %v807 = vadd.f32 %v689, %v781
      %v808 = vadd.f32 %v690, %v784
      %v809 = vadd.f32 %v691, %v789
      %v810 = vadd.f32 %v692, %v792
      %v811 = vadd.f32 %v693, %v797
      %v812 = vadd.f32 %v694, %v800
      %v813 = vld [vmem:[#allocation2 + $0xc] sm:$0xff]
      %v814 = vld [vmem:[#allocation2 + $0x14] sm:$0xff]
      %v815 = vld [vmem:[#allocation2 + $0x1c] sm:$0xff]
      %v816 = vld [vmem:[#allocation2 + $0x24] sm:$0xff]
      %v817 = vld [vmem:[#allocation2 + $0x2c] sm:$0xff]
      %v818 = vld [vmem:[#allocation2 + $0x34] sm:$0xff]
      %v819 = vld [vmem:[#allocation2 + $0x3c] sm:$0xff]
      %v820 = vld [vmem:[#allocation2 + $0x44] sm:$0xff]
      %v821 = vld [vmem:[#allocation2 + $0x4c] sm:$0xff]
      %v822 = vld [vmem:[#allocation2 + $0x54] sm:$0xff]
      %v823 = vpack.c.bf16 %v814, %v813
      %v824 = vpack.c.bf16 %v816, %v815
      %v825 = vpack.c.bf16 %v818, %v817
      %v826 = vpack.c.bf16 %v820, %v819
      %v827 = vpack.c.bf16 %v822, %v821
      %s828 = scalar_lea.vmem %s1, 20
      %v829 = vld [vmem:[%s828] sm:$0xf]
      %v831 = vsel %vm228, %v823, 0
      %v834 = vsel %vm228, %v824, 0
      %v837 = vsel %vm228, %v825, 0
      %v840 = vsel %vm228, %v826, 0
      %v843 = vsel %vm228, %v827, 0
      %v846 = vsel %vm291, %v829, 0
      %848 = vmatprep.subr.bf16.mxu0 0
      %849 = vmatpush1.bf16.msra.mxu0 %v846
      %850 = vmatprep.subr.bf16.mxu0 0
      %851 = vmatpush1.bf16.msra.mxu0 0
      %852 = vmatprep.subr.bf16.mxu0 0
      %853 = vmatpush1.bf16.msra.mxu0 0
      %854 = vmatprep.subr.bf16.mxu0 0
      %855 = vmatpush1.bf16.msra.mxu0 0
      %856 = vmatprep.subr.bf16.mxu0 0
      %857 = vmatpush1.bf16.msra.mxu0 0
      %858 = vmatprep.subr.bf16.mxu0 0
      %859 = vmatpush1.bf16.msra.mxu0 0
      %860 = vmatprep.subr.bf16.mxu0 0
      %861 = vmatpush1.bf16.msra.mxu0 0
      %862 = vmatprep.subr.bf16.mxu0 0
      %863 = vmatpush1.bf16.msra.mxu0 0
      %864 = vmatprep.subr.bf16.mxu0 0
      %865 = vmatpush1.bf16.msra.mxu0 0
      %866 = vmatprep.subr.bf16.mxu0 0
      %867 = vmatpush1.bf16.msra.mxu0 0
      %868 = vmatprep.subr.bf16.mxu0 0
      %869 = vmatpush1.bf16.msra.mxu0 0
      %870 = vmatprep.subr.bf16.mxu0 0
      %871 = vmatpush1.bf16.msra.mxu0 0
      %872 = vmatprep.subr.bf16.mxu0 0
      %873 = vmatpush1.bf16.msra.mxu0 0
      %874 = vmatprep.subr.bf16.mxu0 0
      %875 = vmatpush1.bf16.msra.mxu0 0
      %876 = vmatprep.subr.bf16.mxu0 0
      %877 = vmatpush1.bf16.msra.mxu0 0
      %878 = vmatprep.subr.bf16.mxu0 0
      %879 = vmatpush1.bf16.msra.mxu0 0
      %880 = vmatprep.mubr.bf16.mxu0 0
      %881 = vmatmul.mubr.bf16.gmra.mrb[0].mxu0 %v831
      %v882 = vpop.f32.mrb[0].mxu0
      %v883 = vadd.f32 0.0, %v882
      %v884 = vpop.f32.mrb[0].mxu0
      %v885 = vpop.f32.mrb[0].mxu0
      %v886 = vadd.f32 0.0, %v885
      %v887 = vpop.f32.mrb[0].mxu0
      %888 = vmatprep.mubr.bf16.mxu0 0
      %889 = vmatmul.mubr.bf16.gmra.mrb[0].mxu0 %v834
      %v890 = vpop.f32.mrb[0].mxu0
      %v891 = vadd.f32 0.0, %v890
      %v892 = vpop.f32.mrb[0].mxu0
      %v893 = vpop.f32.mrb[0].mxu0
      %v894 = vadd.f32 0.0, %v893
      %v895 = vpop.f32.mrb[0].mxu0
      %896 = vmatprep.mubr.bf16.mxu0 0
      %897 = vmatmul.mubr.bf16.gmra.mrb[0].mxu0 %v837
      %v898 = vpop.f32.mrb[0].mxu0
      %v899 = vadd.f32 0.0, %v898
      %v900 = vpop.f32.mrb[0].mxu0
      %v901 = vpop.f32.mrb[0].mxu0
      %v902 = vadd.f32 0.0, %v901
      %v903 = vpop.f32.mrb[0].mxu0
      %904 = vmatprep.mubr.bf16.mxu0 0
      %905 = vmatmul.mubr.bf16.gmra.mrb[0].mxu0 %v840
      %v906 = vpop.f32.mrb[0].mxu0
      %v907 = vadd.f32 0.0, %v906
      %v908 = vpop.f32.mrb[0].mxu0
      %v909 = vpop.f32.mrb[0].mxu0
      %v910 = vadd.f32 0.0, %v909
      %v911 = vpop.f32.mrb[0].mxu0
      %912 = vmatprep.mubr.bf16.mxu0 0
      %913 = vmatmul.mubr.bf16.gmra.mrb[0].mxu0 %v843
      %v914 = vpop.f32.mrb[0].mxu0
      %v915 = vadd.f32 0.0, %v914
      %v916 = vpop.f32.mrb[0].mxu0
      %v917 = vpop.f32.mrb[0].mxu0
      %v918 = vadd.f32 0.0, %v917
      %v919 = vpop.f32.mrb[0].mxu0
      %920 = vdwg.mxu0
      %v921 = vadd.f32 %v803, %v883
      %v922 = vadd.f32 %v804, %v886
      %v923 = vadd.f32 %v805, %v891
      %v924 = vadd.f32 %v806, %v894
      %v925 = vadd.f32 %v807, %v899
      %v926 = vadd.f32 %v808, %v902
      %v927 = vadd.f32 %v809, %v907
      %v928 = vadd.f32 %v810, %v910
      %v929 = vadd.f32 %v811, %v915
      %v930 = vadd.f32 %v812, %v918
      %v931 = vld [vmem:[#allocation2 + $0x14] sm:$0xff]
      %v932 = vld [vmem:[#allocation2 + $0x1c] sm:$0xff]
      %v933 = vld [vmem:[#allocation2 + $0x24] sm:$0xff]
      %v934 = vld [vmem:[#allocation2 + $0x2c] sm:$0xff]
      %v935 = vld [vmem:[#allocation2 + $0x34] sm:$0xff]
      %v936 = vld [vmem:[#allocation2 + $0x3c] sm:$0xff]
      %v937 = vld [vmem:[#allocation2 + $0x44] sm:$0xff]
      %v938 = vld [vmem:[#allocation2 + $0x4c] sm:$0xff]
      %v939 = vld [vmem:[#allocation2 + $0x54] sm:$0xff]
      %v940 = vld [vmem:[#allocation2 + $0x5c] sm:$0xff]
      %v941 = vpack.c.bf16 %v932, %v931
      %v942 = vpack.c.bf16 %v934, %v933
      %v943 = vpack.c.bf16 %v936, %v935
      %v944 = vpack.c.bf16 %v938, %v937
      %v945 = vpack.c.bf16 %v940, %v939
      %s946 = scalar_lea.vmem %s1, 24
      %v947 = vld [vmem:[%s946] sm:$0xf]
      %v949 = vsel %vm228, %v941, 0
      %v952 = vsel %vm228, %v942, 0
      %v955 = vsel %vm228, %v943, 0
      %v958 = vsel %vm228, %v944, 0
      %v961 = vsel %vm228, %v945, 0
      %v964 = vsel %vm291, %v947, 0
      %966 = vmatprep.subr.bf16.mxu0 0
      %967 = vmatpush1.bf16.msra.mxu0 %v964
      %968 = vmatprep.subr.bf16.mxu0 0
      %969 = vmatpush1.bf16.msra.mxu0 0
      %970 = vmatprep.subr.bf16.mxu0 0
      %971 = vmatpush1.bf16.msra.mxu0 0
      %972 = vmatprep.subr.bf16.mxu0 0
      %973 = vmatpush1.bf16.msra.mxu0 0
      %974 = vmatprep.subr.bf16.mxu0 0
      %975 = vmatpush1.bf16.msra.mxu0 0
      %976 = vmatprep.subr.bf16.mxu0 0
      %977 = vmatpush1.bf16.msra.mxu0 0
      %978 = vmatprep.subr.bf16.mxu0 0
      %979 = vmatpush1.bf16.msra.mxu0 0
      %980 = vmatprep.subr.bf16.mxu0 0
      %981 = vmatpush1.bf16.msra.mxu0 0
      %982 = vmatprep.subr.bf16.mxu0 0
      %983 = vmatpush1.bf16.msra.mxu0 0
      %984 = vmatprep.subr.bf16.mxu0 0
      %985 = vmatpush1.bf16.msra.mxu0 0
      %986 = vmatprep.subr.bf16.mxu0 0
      %987 = vmatpush1.bf16.msra.mxu0 0
      %988 = vmatprep.subr.bf16.mxu0 0
      %989 = vmatpush1.bf16.msra.mxu0 0
      %990 = vmatprep.subr.bf16.mxu0 0
      %991 = vmatpush1.bf16.msra.mxu0 0
      %992 = vmatprep.subr.bf16.mxu0 0
      %993 = vmatpush1.bf16.msra.mxu0 0
      %994 = vmatprep.subr.bf16.mxu0 0
      %995 = vmatpush1.bf16.msra.mxu0 0
      %996 = vmatprep.subr.bf16.mxu0 0
      %997 = vmatpush1.bf16.msra.mxu0 0
      %998 = vmatprep.mubr.bf16.mxu0 0
      %999 = vmatmul.mubr.bf16.gmra.mrb[0].mxu0 %v949
      %v1000 = vpop.f32.mrb[0].mxu0
      %v1001 = vadd.f32 0.0, %v1000
      %v1002 = vpop.f32.mrb[0].mxu0
      %v1003 = vpop.f32.mrb[0].mxu0
      %v1004 = vadd.f32 0.0, %v1003
      %v1005 = vpop.f32.mrb[0].mxu0
      %1006 = vmatprep.mubr.bf16.mxu0 0
      %1007 = vmatmul.mubr.bf16.gmra.mrb[0].mxu0 %v952
      %v1008 = vpop.f32.mrb[0].mxu0
      %v1009 = vadd.f32 0.0, %v1008
      %v1010 = vpop.f32.mrb[0].mxu0
      %v1011 = vpop.f32.mrb[0].mxu0
      %v1012 = vadd.f32 0.0, %v1011
      %v1013 = vpop.f32.mrb[0].mxu0
      %1014 = vmatprep.mubr.bf16.mxu0 0
      %1015 = vmatmul.mubr.bf16.gmra.mrb[0].mxu0 %v955
      %v1016 = vpop.f32.mrb[0].mxu0
      %v1017 = vadd.f32 0.0, %v1016
      %v1018 = vpop.f32.mrb[0].mxu0
      %v1019 = vpop.f32.mrb[0].mxu0
      %v1020 = vadd.f32 0.0, %v1019
      %v1021 = vpop.f32.mrb[0].mxu0
      %1022 = vmatprep.mubr.bf16.mxu0 0
      %1023 = vmatmul.mubr.bf16.gmra.mrb[0].mxu0 %v958
      %v1024 = vpop.f32.mrb[0].mxu0
      %v1025 = vadd.f32 0.0, %v1024
      %v1026 = vpop.f32.mrb[0].mxu0
      %v1027 = vpop.f32.mrb[0].mxu0
      %v1028 = vadd.f32 0.0, %v1027
      %v1029 = vpop.f32.mrb[0].mxu0
      %1030 = vmatprep.mubr.bf16.mxu0 0
      %1031 = vmatmul.mubr.bf16.gmra.mrb[0].mxu0 %v961
      %v1032 = vpop.f32.mrb[0].mxu0
      %v1033 = vadd.f32 0.0, %v1032
      %v1034 = vpop.f32.mrb[0].mxu0
      %v1035 = vpop.f32.mrb[0].mxu0
      %v1036 = vadd.f32 0.0, %v1035
      %v1037 = vpop.f32.mrb[0].mxu0
      %1038 = vdwg.mxu0
      %v1039 = vadd.f32 %v921, %v1001
      %v1040 = vadd.f32 %v922, %v1004
      %v1041 = vadd.f32 %v923, %v1009
      %v1042 = vadd.f32 %v924, %v1012
      %v1043 = vadd.f32 %v925, %v1017
      %v1044 = vadd.f32 %v926, %v1020
      %v1045 = vadd.f32 %v927, %v1025
      %v1046 = vadd.f32 %v928, %v1028
      %v1047 = vadd.f32 %v929, %v1033
      %v1048 = vadd.f32 %v930, %v1036
      %v1049 = vld [vmem:[#allocation2 + $0x15] sm:$0xff]
      %v1050 = vld [vmem:[#allocation2 + $0x1d] sm:$0xff]
      %v1051 = vld [vmem:[#allocation2 + $0x25] sm:$0xff]
      %v1052 = vld [vmem:[#allocation2 + $0x2d] sm:$0xff]
      %v1053 = vld [vmem:[#allocation2 + $0x35] sm:$0xff]
      %v1054 = vld [vmem:[#allocation2 + $0x3d] sm:$0xff]
      %v1055 = vld [vmem:[#allocation2 + $0x45] sm:$0xff]
      %v1056 = vld [vmem:[#allocation2 + $0x4d] sm:$0xff]
      %v1057 = vld [vmem:[#allocation2 + $0x55] sm:$0xff]
      %v1058 = vld [vmem:[#allocation2 + $0x5d] sm:$0xff]
      %v1059 = vpack.c.bf16 %v1050, %v1049
      %v1060 = vpack.c.bf16 %v1052, %v1051
      %v1061 = vpack.c.bf16 %v1054, %v1053
      %v1062 = vpack.c.bf16 %v1056, %v1055
      %v1063 = vpack.c.bf16 %v1058, %v1057
      %s1064 = scalar_lea.vmem %s1, 28
      %v1065 = vld [vmem:[%s1064] sm:$0xf]
      %v1067 = vsel %vm228, %v1059, 0
      %v1070 = vsel %vm228, %v1060, 0
      %v1073 = vsel %vm228, %v1061, 0
      %v1076 = vsel %vm228, %v1062, 0
      %v1079 = vsel %vm228, %v1063, 0
      %v1082 = vsel %vm291, %v1065, 0
      %1084 = vmatprep.subr.bf16.mxu0 0
      %1085 = vmatpush1.bf16.msra.mxu0 %v1082
      %1086 = vmatprep.subr.bf16.mxu0 0
      %1087 = vmatpush1.bf16.msra.mxu0 0
      %1088 = vmatprep.subr.bf16.mxu0 0
      %1089 = vmatpush1.bf16.msra.mxu0 0
      %1090 = vmatprep.subr.bf16.mxu0 0
      %1091 = vmatpush1.bf16.msra.mxu0 0
      %1092 = vmatprep.subr.bf16.mxu0 0
      %1093 = vmatpush1.bf16.msra.mxu0 0
      %1094 = vmatprep.subr.bf16.mxu0 0
      %1095 = vmatpush1.bf16.msra.mxu0 0
      %1096 = vmatprep.subr.bf16.mxu0 0
      %1097 = vmatpush1.bf16.msra.mxu0 0
      %1098 = vmatprep.subr.bf16.mxu0 0
      %1099 = vmatpush1.bf16.msra.mxu0 0
      %1100 = vmatprep.subr.bf16.mxu0 0
      %1101 = vmatpush1.bf16.msra.mxu0 0
      %1102 = vmatprep.subr.bf16.mxu0 0
      %1103 = vmatpush1.bf16.msra.mxu0 0
      %1104 = vmatprep.subr.bf16.mxu0 0
      %1105 = vmatpush1.bf16.msra.mxu0 0
      %1106 = vmatprep.subr.bf16.mxu0 0
      %1107 = vmatpush1.bf16.msra.mxu0 0
      %1108 = vmatprep.subr.bf16.mxu0 0
      %1109 = vmatpush1.bf16.msra.mxu0 0
      %1110 = vmatprep.subr.bf16.mxu0 0
      %1111 = vmatpush1.bf16.msra.mxu0 0
      %1112 = vmatprep.subr.bf16.mxu0 0
      %1113 = vmatpush1.bf16.msra.mxu0 0
      %1114 = vmatprep.subr.bf16.mxu0 0
      %1115 = vmatpush1.bf16.msra.mxu0 0
      %1116 = vmatprep.mubr.bf16.mxu0 0
      %1117 = vmatmul.mubr.bf16.gmra.mrb[0].mxu0 %v1067
      %v1118 = vpop.f32.mrb[0].mxu0
      %v1119 = vadd.f32 0.0, %v1118
      %v1120 = vpop.f32.mrb[0].mxu0
      %v1121 = vpop.f32.mrb[0].mxu0
      %v1122 = vadd.f32 0.0, %v1121
      %v1123 = vpop.f32.mrb[0].mxu0
      %1124 = vmatprep.mubr.bf16.mxu0 0
      %1125 = vmatmul.mubr.bf16.gmra.mrb[0].mxu0 %v1070
      %v1126 = vpop.f32.mrb[0].mxu0
      %v1127 = vadd.f32 0.0, %v1126
      %v1128 = vpop.f32.mrb[0].mxu0
      %v1129 = vpop.f32.mrb[0].mxu0
      %v1130 = vadd.f32 0.0, %v1129
      %v1131 = vpop.f32.mrb[0].mxu0
      %1132 = vmatprep.mubr.bf16.mxu0 0
      %1133 = vmatmul.mubr.bf16.gmra.mrb[0].mxu0 %v1073
      %v1134 = vpop.f32.mrb[0].mxu0
      %v1135 = vadd.f32 0.0, %v1134
      %v1136 = vpop.f32.mrb[0].mxu0
      %v1137 = vpop.f32.mrb[0].mxu0
      %v1138 = vadd.f32 0.0, %v1137
      %v1139 = vpop.f32.mrb[0].mxu0
      %1140 = vmatprep.mubr.bf16.mxu0 0
      %1141 = vmatmul.mubr.bf16.gmra.mrb[0].mxu0 %v1076
      %v1142 = vpop.f32.mrb[0].mxu0
      %v1143 = vadd.f32 0.0, %v1142
      %v1144 = vpop.f32.mrb[0].mxu0
      %v1145 = vpop.f32.mrb[0].mxu0
      %v1146 = vadd.f32 0.0, %v1145
      %v1147 = vpop.f32.mrb[0].mxu0
      %1148 = vmatprep.mubr.bf16.mxu0 0
      %1149 = vmatmul.mubr.bf16.gmra.mrb[0].mxu0 %v1079
      %v1150 = vpop.f32.mrb[0].mxu0
      %v1151 = vadd.f32 0.0, %v1150
      %v1152 = vpop.f32.mrb[0].mxu0
      %v1153 = vpop.f32.mrb[0].mxu0
      %v1154 = vadd.f32 0.0, %v1153
      %v1155 = vpop.f32.mrb[0].mxu0
      %1156 = vdwg.mxu0
      %v1157 = vadd.f32 %v1039, %v1119
      %v1158 = vadd.f32 %v1040, %v1122
      %v1159 = vadd.f32 %v1041, %v1127
      %v1160 = vadd.f32 %v1042, %v1130
      %v1161 = vadd.f32 %v1043, %v1135
      %v1162 = vadd.f32 %v1044, %v1138
      %v1163 = vadd.f32 %v1045, %v1143
      %v1164 = vadd.f32 %v1046, %v1146
      %v1165 = vadd.f32 %v1047, %v1151
      %v1166 = vadd.f32 %v1048, %v1154
      %v1167 = vld [vmem:[#allocation2 + $0x16] sm:$0xff]
      %v1168 = vld [vmem:[#allocation2 + $0x1e] sm:$0xff]
      %v1169 = vld [vmem:[#allocation2 + $0x26] sm:$0xff]
      %v1170 = vld [vmem:[#allocation2 + $0x2e] sm:$0xff]
      %v1171 = vld [vmem:[#allocation2 + $0x36] sm:$0xff]
      %v1172 = vld [vmem:[#allocation2 + $0x3e] sm:$0xff]
      %v1173 = vld [vmem:[#allocation2 + $0x46] sm:$0xff]
      %v1174 = vld [vmem:[#allocation2 + $0x4e] sm:$0xff]
      %v1175 = vld [vmem:[#allocation2 + $0x56] sm:$0xff]
      %v1176 = vld [vmem:[#allocation2 + $0x5e] sm:$0xff]
      %v1177 = vpack.c.bf16 %v1168, %v1167
      %v1178 = vpack.c.bf16 %v1170, %v1169
      %v1179 = vpack.c.bf16 %v1172, %v1171
      %v1180 = vpack.c.bf16 %v1174, %v1173
      %v1181 = vpack.c.bf16 %v1176, %v1175
      %s1182 = scalar_lea.vmem %s1, 32
      %v1183 = vld [vmem:[%s1182] sm:$0xf]
      %v1185 = vsel %vm228, %v1177, 0
      %v1188 = vsel %vm228, %v1178, 0
      %v1191 = vsel %vm228, %v1179, 0
      %v1194 = vsel %vm228, %v1180, 0
      %v1197 = vsel %vm228, %v1181, 0
      %v1200 = vsel %vm291, %v1183, 0
      %1202 = vmatprep.subr.bf16.mxu0 0
      %1203 = vmatpush1.bf16.msra.mxu0 %v1200
      %1204 = vmatprep.subr.bf16.mxu0 0
      %1205 = vmatpush1.bf16.msra.mxu0 0
      %1206 = vmatprep.subr.bf16.mxu0 0
      %1207 = vmatpush1.bf16.msra.mxu0 0
      %1208 = vmatprep.subr.bf16.mxu0 0
      %1209 = vmatpush1.bf16.msra.mxu0 0
      %1210 = vmatprep.subr.bf16.mxu0 0
      %1211 = vmatpush1.bf16.msra.mxu0 0
      %1212 = vmatprep.subr.bf16.mxu0 0
      %1213 = vmatpush1.bf16.msra.mxu0 0
      %1214 = vmatprep.subr.bf16.mxu0 0
      %1215 = vmatpush1.bf16.msra.mxu0 0
      %1216 = vmatprep.subr.bf16.mxu0 0
      %1217 = vmatpush1.bf16.msra.mxu0 0
      %1218 = vmatprep.subr.bf16.mxu0 0
      %1219 = vmatpush1.bf16.msra.mxu0 0
      %1220 = vmatprep.subr.bf16.mxu0 0
      %1221 = vmatpush1.bf16.msra.mxu0 0
      %1222 = vmatprep.subr.bf16.mxu0 0
      %1223 = vmatpush1.bf16.msra.mxu0 0
      %1224 = vmatprep.subr.bf16.mxu0 0
      %1225 = vmatpush1.bf16.msra.mxu0 0
      %1226 = vmatprep.subr.bf16.mxu0 0
      %1227 = vmatpush1.bf16.msra.mxu0 0
      %1228 = vmatprep.subr.bf16.mxu0 0
      %1229 = vmatpush1.bf16.msra.mxu0 0
      %1230 = vmatprep.subr.bf16.mxu0 0
      %1231 = vmatpush1.bf16.msra.mxu0 0
      %1232 = vmatprep.subr.bf16.mxu0 0
      %1233 = vmatpush1.bf16.msra.mxu0 0
      %1234 = vmatprep.mubr.bf16.mxu0 0
      %1235 = vmatmul.mubr.bf16.gmra.mrb[0].mxu0 %v1185
      %v1236 = vpop.f32.mrb[0].mxu0
      %v1237 = vadd.f32 0.0, %v1236
      %v1238 = vpop.f32.mrb[0].mxu0
      %v1239 = vpop.f32.mrb[0].mxu0
      %v1240 = vadd.f32 0.0, %v1239
      %v1241 = vpop.f32.mrb[0].mxu0
      %1242 = vmatprep.mubr.bf16.mxu0 0
      %1243 = vmatmul.mubr.bf16.gmra.mrb[0].mxu0 %v1188
      %v1244 = vpop.f32.mrb[0].mxu0
      %v1245 = vadd.f32 0.0, %v1244
      %v1246 = vpop.f32.mrb[0].mxu0
      %v1247 = vpop.f32.mrb[0].mxu0
      %v1248 = vadd.f32 0.0, %v1247
      %v1249 = vpop.f32.mrb[0].mxu0
      %1250 = vmatprep.mubr.bf16.mxu0 0
      %1251 = vmatmul.mubr.bf16.gmra.mrb[0].mxu0 %v1191
      %v1252 = vpop.f32.mrb[0].mxu0
      %v1253 = vadd.f32 0.0, %v1252
      %v1254 = vpop.f32.mrb[0].mxu0
      %v1255 = vpop.f32.mrb[0].mxu0
      %v1256 = vadd.f32 0.0, %v1255
      %v1257 = vpop.f32.mrb[0].mxu0
      %1258 = vmatprep.mubr.bf16.mxu0 0
      %1259 = vmatmul.mubr.bf16.gmra.mrb[0].mxu0 %v1194
      %v1260 = vpop.f32.mrb[0].mxu0
      %v1261 = vadd.f32 0.0, %v1260
      %v1262 = vpop.f32.mrb[0].mxu0
      %v1263 = vpop.f32.mrb[0].mxu0
      %v1264 = vadd.f32 0.0, %v1263
      %v1265 = vpop.f32.mrb[0].mxu0
      %1266 = vmatprep.mubr.bf16.mxu0 0
      %1267 = vmatmul.mubr.bf16.gmra.mrb[0].mxu0 %v1197
      %v1268 = vpop.f32.mrb[0].mxu0
      %v1269 = vadd.f32 0.0, %v1268
      %v1270 = vpop.f32.mrb[0].mxu0
      %v1271 = vpop.f32.mrb[0].mxu0
      %v1272 = vadd.f32 0.0, %v1271
      %v1273 = vpop.f32.mrb[0].mxu0
      %1274 = vdwg.mxu0
      %v1275 = vadd.f32 %v1157, %v1237
      %v1276 = vadd.f32 %v1158, %v1240
      %v1277 = vadd.f32 %v1159, %v1245
      %v1278 = vadd.f32 %v1160, %v1248
      %v1279 = vadd.f32 %v1161, %v1253
      %v1280 = vadd.f32 %v1162, %v1256
      %v1281 = vadd.f32 %v1163, %v1261
      %v1282 = vadd.f32 %v1164, %v1264
      %v1283 = vadd.f32 %v1165, %v1269
      %v1284 = vadd.f32 %v1166, %v1272
      %v1285 = vld [vmem:[%s2] sm:$0x1]
      %v1287 = vlaneseq
      %v1288 = vshrl.u32 %v1287, 7
      %v1289 = vsub.s32 0, %v1288
      %v1290 = vrot.slane %v1285, %v1289
      %v1292 = vadd.f32 %v1275, %v1290
      %v1293 = vadd.f32 %v1276, %v1290
      %v1294 = vadd.f32 %v1277, %v1290
      %v1295 = vadd.f32 %v1278, %v1290
      %v1296 = vadd.f32 %v1279, %v1290
      %v1297 = vadd.f32 %v1280, %v1290
      %v1298 = vadd.f32 %v1281, %v1290
      %v1299 = vadd.f32 %v1282, %v1290
      %v1300 = vadd.f32 %v1283, %v1290
      %v1301 = vadd.f32 %v1284, %v1290
      %v1302 = vmax.f32 %v1292, 0.0
      %v1303 = vmax.f32 %v1293, 0.0
      %v1304 = vmax.f32 %v1294, 0.0
      %v1305 = vmax.f32 %v1295, 0.0
      %v1306 = vmax.f32 %v1296, 0.0
      %v1307 = vmax.f32 %v1297, 0.0
      %v1308 = vmax.f32 %v1298, 0.0
      %v1309 = vmax.f32 %v1299, 0.0
      %v1310 = vmax.f32 %v1300, 0.0
      %v1311 = vmax.f32 %v1301, 0.0
      %v1312 = vpack.c.bf16 %v1303, %v1302
      %v1313 = vpack.c.bf16 %v1305, %v1304
      %v1314 = vpack.c.bf16 %v1307, %v1306
      %v1315 = vpack.c.bf16 %v1309, %v1308
      %v1316 = vpack.c.bf16 %v1311, %v1310
      %v1322 = vunpack.c.l.b16 %v1312
      %v1323 = vunpack.c.h.b16 %v1312
      %v1324 = vunpack.c.l.b16 %v1313
      %v1325 = vunpack.c.h.b16 %v1313
      %v1326 = vunpack.c.l.b16 %v1314
      %v1327 = vunpack.c.h.b16 %v1314
      %v1328 = vunpack.c.l.b16 %v1315
      %v1329 = vunpack.c.h.b16 %v1315
      %v1330 = vunpack.c.l.b16 %v1316
      %v1331 = vunpack.c.h.b16 %v1316
      %v1332 = vpack.c.b16 %v1322, %v1322
      %v1333 = vpack.c.b16 %v1323, %v1323
      %v1334 = vpack.c.b16 %v1324, %v1324
      %v1335 = vpack.c.b16 %v1325, %v1325
      %v1336 = vpack.c.b16 %v1326, %v1326
      %v1337 = vpack.c.b16 %v1327, %v1327
      %v1338 = vpack.c.b16 %v1328, %v1328
      %v1339 = vpack.c.b16 %v1329, %v1329
      %v1340 = vpack.c.b16 %v1330, %v1330
      %v1341 = vpack.c.b16 %v1331, %v1331
      %1352 = vst [vmem:[%s192] sm:$0xf] %v1332
      %1353 = vst [vmem:[%s192 + $0x4] sm:$0xf] %v1333
      %1354 = vst [vmem:[%s192 + $0x8] sm:$0xf] %v1334
      %1355 = vst [vmem:[%s192 + $0xc] sm:$0xf] %v1335
      %1356 = vst [vmem:[%s192 + $0x10] sm:$0xf] %v1336
      %1357 = vst [vmem:[%s192 + $0x14] sm:$0xf] %v1337
      %1358 = vst [vmem:[%s192 + $0x18] sm:$0xf] %v1338
      %1359 = vst [vmem:[%s192 + $0x1c] sm:$0xf] %v1339
      %1360 = vst [vmem:[%s192 + $0x20] sm:$0xf] %v1340
      %1361 = vst [vmem:[%s192 + $0x24] sm:$0xf] %v1341
      %s1362 = smul.u32 10, %s19
      %p1363 = scmp.lt.s32.totalorder %s18, 1
      %s1364 = scalar_select %p1363, %s18, 1
      %p1365 = scmp.lt.s32.totalorder %s1362, 9
      %s1366 = scalar_select %p1365, %s1362, 9
      %s1367 = smul.addr %s1364, 10
      %s1368 = sadd.s32 %s1366, %s1367
      %s1369 = smul.addr %s1368, 4
      %s1370 = scalar_lea.vmem %s3, %s1369
      // Predicated region
      $region33: #{_lambda_.8} parent=31 // pred_check
        %p1371 = pneg %p114
      $region34: #{_lambda_.8} parent=31 // pred_check_branch
        %1373 = sbr.rel (%p1371) target = $region36
      $region35: #{_lambda_.8} parent=31 // pred_region
        %s1374 = smul.u32 10, %s19
      $region36: #{_lambda_.8} parent=31 // pred_fallthru
        _
    $region32: #{_lambda_.8} parent=5 // pred_fallthru
      _
    %p1375 = scmp.le.s32.totalorder 2, %s9
    // Predicated region
    $region37: #{_lambda_.8} parent=5 // pred_check
      %p1376 = pneg %p1375
    $region38: #{_lambda_.8} parent=5 // pred_check_branch
      %1378 = sbr.rel (%p1376) target = $region40
    $region39: #{_lambda_.8} parent=5 // pred_region
      %s1379 = ssub.s32 %s9, 2
      // Predicated region
      $region41: #{_lambda_.8} parent=39 // pred_check
        %p1380 = pneg %p120
      $region42: #{_lambda_.8} parent=39 // pred_check_branch
        %1382 = sbr.rel (%p1380) target = $region44
      $region43: #{_lambda_.8} parent=39 // pred_region
        %s1383 = smul.u32 10, %s21
        %p1384 = scmp.lt.s32.totalorder %s20, 1
        %s1385 = scalar_select %p1384, %s20, 1
        %p1386 = scmp.lt.s32.totalorder %s1383, 9
        %s1387 = scalar_select %p1386, %s1383, 9
        %s1388 = smul.addr %s1385, 10
        %s1389 = sadd.s32 %s1387, %s1388
        %s1390 = smul.addr %s1389, 4
        %s1391 = scalar_lea.vmem %s3, %s1390
      $region44: #{_lambda_.8} parent=39 // pred_fallthru
        _
    $region40: #{_lambda_.8} parent=5 // pred_fallthru
      _
  $region6: #{_lambda_.8} parent=0 // loop_footer
    %s13 = sadd.s32 1, %s9
  $region7: #{_lambda_.8} parent=0 // loop_footer_branch
    %8 = sbr.rel target = $region3
  $region8: #{_lambda_.8} parent=0 // loop_exit
    _

</llo_original>
